<compile_context>
chip_gen: v7x
topology: tpu7x:2x2x1
jax: 0.10.0
libtpu: 0.0.40
codegen_flags: <defaults>
</compile_context>

<pallas_src>
import functools

import jax
import jax.numpy as jnp
from jax.experimental import pallas as pl
from jax.experimental.pallas import tpu as pltpu


def _layer_norm(x, gamma, beta, eps=1e-6):
    mu = jnp.mean(x, axis=-1, keepdims=True)
    var = jnp.mean((x - mu) ** 2, axis=-1, keepdims=True)
    return (x - mu) * jax.lax.rsqrt(var + eps) * gamma + beta


def encoder_layer_kernel(
    x_ref,        # (TB, S, D)
    w_qkv_ref,    # (D, 2*H*dk + H*dv)   (Wq pre-scaled by sqrt(dk))
    b_qkv_ref,    # (1, 2*H*dk + H*dv)   (bq pre-scaled by sqrt(dk))
    vecs_ref,     # (5, D): ln0_g, ln0_b, ln1_g, ln1_b, b2
    w1_ref,       # (D, d_ffn)
    b1_ref,       # (1, d_ffn)
    w2_ref,       # (d_ffn, D)
    out_ref,      # (TB, S, D)
    ctx_ref,      # VMEM scratch (TB, S, H*dv)
    *, n_heads, d_k, d_v,
):
    TB, S, D = x_ref.shape
    M = TB * S
    H, dk, dv = n_heads, d_k, d_v
    Hdk, Hdv = H * dk, H * dv

    # Packed small parameter vectors (static row slices, all (1, D)).
    ln0_g = vecs_ref[0:1, :]
    ln0_b = vecs_ref[1:2, :]
    ln1_g = vecs_ref[2:3, :]
    ln1_b = vecs_ref[3:4, :]
    b2 = vecs_ref[4:5, :]

    # --- EncoderLayer.layer_norm on the flattened (TB*S, D) slab ---
    x = x_ref[...].reshape(M, D)
    x0 = _layer_norm(x, ln0_g, ln0_b)

    # --- fused Q/K/V projection: one wide matmul on the MXU ---
    qkv = jnp.dot(x0, w_qkv_ref[...], preferred_element_type=jnp.float32) + b_qkv_ref[...]
    q = qkv[:, :Hdk]                       # already scaled by sqrt(dk) via weight fold
    k = qkv[:, Hdk:2 * Hdk]
    v = qkv[:, 2 * Hdk:2 * Hdk + Hdv]

    q3 = q.reshape(TB, S, Hdk)
    k3 = k.reshape(TB, S, Hdk)
    v3 = v.reshape(TB, S, Hdv)

    # --- attention: static head loop, batched over TB inside each dot_general ---
    for h in range(H):
        qh = q3[:, :, h * dk:(h + 1) * dk]           # (TB, S, dk)
        kh = k3[:, :, h * dk:(h + 1) * dk]           # (TB, S, dk)
        vh = v3[:, :, h * dv:(h + 1) * dv]           # (TB, S, dv)
        # scores: contract last dims directly (no .T / XLU transpose)
        s = jax.lax.dot_general(
            qh, kh,
            dimension_numbers=(((2,), (2,)), ((0,), (0,))),
            preferred_element_type=jnp.float32)       # (TB, S, S)
        s = s - jnp.max(s, axis=-1, keepdims=True)
        p = jnp.exp(s)
        denom = jnp.sum(p, axis=-1, keepdims=True)
        p = p * pl.reciprocal(denom, approx=False)    # EUP reciprocal + VPU mul (exact)
        ctx_h = jax.lax.dot_general(
            p, vh,
            dimension_numbers=(((2,), (1,)), ((0,), (0,))),
            preferred_element_type=jnp.float32)       # (TB, S, dv)
        ctx_ref[:, :, h * dv:(h + 1) * dv] = ctx_h    # static-slice store, no concat

    # --- MHA residual (dropout = identity in eval; fc / layer_norm unused in torch forward) ---
    ctx = ctx_ref[...].reshape(M, Hdv)                # Hdv == D (required by the residual)
    mha_out = ctx + x0

    # --- FeedForward: LN, w2(relu(w1(x))), residual to the LN'd input ---
    x1 = _layer_norm(mha_out, ln1_g, ln1_b)
    h1 = jnp.maximum(
        jnp.dot(x1, w1_ref[...], preferred_element_type=jnp.float32) + b1_ref[...], 0.0)
    y = jnp.dot(h1, w2_ref[...], preferred_element_type=jnp.float32) + b2
    out = y + x1

    out_ref[...] = out.reshape(TB, S, D)


def prepare_params(raw, *, d_k):
    """One-time parameter packing / folding (offline weight transform)."""
    scale = float(d_k) ** 0.5   # torch divides logits by dk**-0.5 => multiply by sqrt(dk)
    w_qkv = jnp.concatenate([raw["wq"] * scale, raw["wk"], raw["wv"]], axis=1)
    b_qkv = jnp.concatenate([raw["bq"] * scale, raw["bk"], raw["bv"]], axis=1)
    vecs = jnp.concatenate(
        [raw["ln0_g"], raw["ln0_b"], raw["ln1_g"], raw["ln1_b"], raw["b2"]], axis=0)
    return {
        "w_qkv": w_qkv.astype(jnp.float32),
        "b_qkv": b_qkv.astype(jnp.float32),
        "vecs": vecs.astype(jnp.float32),
        "w1": raw["w1"].astype(jnp.float32),
        "b1": raw["b1"].astype(jnp.float32),
        "w2": raw["w2"].astype(jnp.float32),
    }


def encoder_layer_forward(enc_input, params, *, n_heads, d_k, d_v, tb=4):
    B, S, D = enc_input.shape
    assert n_heads * d_v == D, "MHA residual requires n_heads * d_v == d_model"
    # largest divisor of B that is <= requested tile (keeps grid well-formed)
    tb = max(1, min(tb, B))
    while B % tb:
        tb -= 1

    n_qkv = params["w_qkv"].shape[1]
    d_ffn = params["w1"].shape[1]

    kernel = functools.partial(encoder_layer_kernel,
                               n_heads=n_heads, d_k=d_k, d_v=d_v)

    grid_spec = pltpu.PrefetchScalarGridSpec(
        num_scalar_prefetch=0,
        grid=(B // tb,),
        in_specs=[
            pl.BlockSpec((tb, S, D), lambda b: (b, 0, 0)),      # enc_input tile
            pl.BlockSpec((D, n_qkv), lambda b: (0, 0)),         # fused Wqkv (resident)
            pl.BlockSpec((1, n_qkv), lambda b: (0, 0)),         # fused bqkv
            pl.BlockSpec((5, D), lambda b: (0, 0)),             # packed LN/bias vectors
            pl.BlockSpec((D, d_ffn), lambda b: (0, 0)),         # W1
            pl.BlockSpec((1, d_ffn), lambda b: (0, 0)),         # b1
            pl.BlockSpec((d_ffn, D), lambda b: (0, 0)),         # W2
        ],
        out_specs=pl.BlockSpec((tb, S, D), lambda b: (b, 0, 0)),
        scratch_shapes=[pltpu.VMEM((tb, S, n_heads * d_v), jnp.float32)],
    )

    return pl.pallas_call(
        kernel,
        out_shape=jax.ShapeDtypeStruct((B, S, D), jnp.float32),
        grid_spec=grid_spec,
        compiler_params=pltpu.CompilerParams(dimension_semantics=("parallel",)),
    )(
        enc_input,
        params["w_qkv"], params["b_qkv"], params["vecs"],
        params["w1"], params["b1"], params["w2"],
    )


def reference_forward(x, p, *, n_heads, d_k, d_v):
    """Pure-JAX reference mirroring the PyTorch EncoderLayer forward (eval mode)."""
    def ln(t, g, b, eps=1e-6):
        mu = t.mean(-1, keepdims=True)
        var = ((t - mu) ** 2).mean(-1, keepdims=True)
        return (t - mu) / jnp.sqrt(var + eps) * g + b

    B, S, D = x.shape
    x0 = ln(x, p["ln0_g"], p["ln0_b"])
    q = (x0 @ p["wq"] + p["bq"]).reshape(B, S, n_heads, d_k).transpose(0, 2, 1, 3)
    k = (x0 @ p["wk"] + p["bk"]).reshape(B, S, n_heads, d_k).transpose(0, 2, 1, 3)
    v = (x0 @ p["wv"] + p["bv"]).reshape(B, S, n_heads, d_v).transpose(0, 2, 1, 3)
    s = jnp.einsum("bhqd,bhkd->bhqk", q, k) / (float(d_k) ** -0.5)   # torch scale "bug" kept
    a = jax.nn.softmax(s, axis=-1)
    ctx = jnp.einsum("bhqk,bhkd->bhqd", a, v).transpose(0, 2, 1, 3).reshape(B, S, -1)
    mha = ctx + x0
    x1 = ln(mha, p["ln1_g"], p["ln1_b"])
    h = jax.nn.relu(x1 @ p["w1"] + p["b1"])
    return (h @ p["w2"] + p["b2"]) + x1


def init_raw_params(key, d_model, d_ffn, n_heads, d_k, d_v):
    keys = jax.random.split(key, 12)
    n = lambda k, shape, s=0.05: (s * jax.random.normal(k, shape)).astype(jnp.float32)
    return {
        "ln0_g": jnp.ones((1, d_model), jnp.float32),
        "ln0_b": jnp.zeros((1, d_model), jnp.float32),
        "wq": n(keys[0], (d_model, n_heads * d_k)),
        "bq": n(keys[1], (1, n_heads * d_k), 0.01),
        "wk": n(keys[2], (d_model, n_heads * d_k)),
        "bk": n(keys[3], (1, n_heads * d_k), 0.01),
        "wv": n(keys[4], (d_model, n_heads * d_v)),
        "bv": n(keys[5], (1, n_heads * d_v), 0.01),
        "ln1_g": jnp.ones((1, d_model), jnp.float32),
        "ln1_b": jnp.zeros((1, d_model), jnp.float32),
        "w1": n(keys[6], (d_model, d_ffn)),
        "b1": n(keys[7], (1, d_ffn), 0.01),
        "w2": n(keys[8], (d_ffn, d_model)),
        "b2": n(keys[9], (1, d_model), 0.01),
        # MHA.fc / MHA.layer_norm exist in the torch module but are unused in forward.
    }


if __name__ == "__main__":
    # Small, shape-consistent config: n_heads * d_v == d_model (required by the
    # MHA residual add in the torch forward).
    B, S = 8, 8
    d_model, d_ffn = 32, 64
    n_heads, d_k, d_v = 4, 8, 8
    TB = 4   # 4 sequences per grid step -> 2 parallel grid steps (uses both v7x cores)

    key = jax.random.PRNGKey(0)
    k_x, k_p = jax.random.split(key, 2)
    enc_input = jax.random.normal(k_x, (B, S, d_model), dtype=jnp.float32)
    raw = init_raw_params(k_p, d_model, d_ffn, n_heads, d_k, d_v)
    packed = prepare_params(raw, d_k=d_k)

    out = encoder_layer_forward(enc_input, packed,
                                n_heads=n_heads, d_k=d_k, d_v=d_v, tb=TB)
    out = jax.block_until_ready(out)

    ref = reference_forward(enc_input, raw, n_heads=n_heads, d_k=d_k, d_v=d_v)
    assert out.shape == (B, S, d_model)
    assert jnp.allclose(out, ref, atol=1e-4, rtol=1e-4), (
        f"max err {jnp.max(jnp.abs(out - ref))}")
    print("KERNEL_OK")
</pallas_src>

<mosaic_0001>
module attributes {stable_mosaic.version = 11 : i64} {
  func.func @encoder_layer_kernel(%arg0: i32, %arg1: memref<4x8x32xf32, #tpu.memory_space<vmem>>, %arg2: memref<32x96xf32, #tpu.memory_space<vmem>>, %arg3: memref<1x96xf32, #tpu.memory_space<vmem>>, %arg4: memref<5x32xf32, #tpu.memory_space<vmem>>, %arg5: memref<32x64xf32, #tpu.memory_space<vmem>>, %arg6: memref<1x64xf32, #tpu.memory_space<vmem>>, %arg7: memref<64x32xf32, #tpu.memory_space<vmem>>, %arg8: memref<4x8x32xf32, #tpu.memory_space<vmem>>, %arg9: memref<4x8x32xf32, #tpu.memory_space<vmem>>) attributes {dimension_semantics = [#tpu.dimension_semantics<parallel>], iteration_bounds = array<i64: 2>, scalar_prefetch = 0 : i64, scratch_operands = 1 : i64, tpu.core_type = #tpu.core_type<tc>, window_params = [{transform_indices = @transform_0, window_bounds = array<i64: 4, 8, 32>}, {pipeline_mode = #tpu.pipeline_mode<synchronous>, transform_indices = @transform_1, window_bounds = array<i64: 32, 96>}, {pipeline_mode = #tpu.pipeline_mode<synchronous>, transform_indices = @transform_2, window_bounds = array<i64: 1, 96>}, {pipeline_mode = #tpu.pipeline_mode<synchronous>, transform_indices = @transform_3, window_bounds = array<i64: 5, 32>}, {pipeline_mode = #tpu.pipeline_mode<synchronous>, transform_indices = @transform_4, window_bounds = array<i64: 32, 64>}, {pipeline_mode = #tpu.pipeline_mode<synchronous>, transform_indices = @transform_5, window_bounds = array<i64: 1, 64>}, {pipeline_mode = #tpu.pipeline_mode<synchronous>, transform_indices = @transform_6, window_bounds = array<i64: 64, 32>}, {transform_indices = @transform_7, window_bounds = array<i64: 4, 8, 32>}]} {
    %c0 = arith.constant 0 : index
    %c0_0 = arith.constant 0 : index
    %0 = vector.load %arg4[%c0, %c0_0] : memref<5x32xf32, #tpu.memory_space<vmem>>, vector<1x32xf32>
    %c1 = arith.constant 1 : index
    %c0_1 = arith.constant 0 : index
    %1 = vector.load %arg4[%c1, %c0_1] : memref<5x32xf32, #tpu.memory_space<vmem>>, vector<1x32xf32>
    %c2 = arith.constant 2 : index
    %c0_2 = arith.constant 0 : index
    %2 = vector.load %arg4[%c2, %c0_2] : memref<5x32xf32, #tpu.memory_space<vmem>>, vector<1x32xf32>
    %c3 = arith.constant 3 : index
    %c0_3 = arith.constant 0 : index
    %3 = vector.load %arg4[%c3, %c0_3] : memref<5x32xf32, #tpu.memory_space<vmem>>, vector<1x32xf32>
    %c4 = arith.constant 4 : index
    %c0_4 = arith.constant 0 : index
    %4 = vector.load %arg4[%c4, %c0_4] : memref<5x32xf32, #tpu.memory_space<vmem>>, vector<1x32xf32>
    %c0_5 = arith.constant 0 : index
    %c0_6 = arith.constant 0 : index
    %c0_7 = arith.constant 0 : index
    %5 = vector.load %arg1[%c0_5, %c0_6, %c0_7] : memref<4x8x32xf32, #tpu.memory_space<vmem>>, vector<4x8x32xf32>
    %6 = vector.shape_cast %5 : vector<4x8x32xf32> to vector<32x32xf32>
    %cst = arith.constant dense<0.000000e+00> : vector<32xf32>
    %7 = vector.multi_reduction <add>, %6, %cst [1] : vector<32x32xf32> to vector<32xf32>
    %8 = vector.shape_cast %7 : vector<32xf32> to vector<32x1xf32>
    %cst_8 = arith.constant 3.200000e+01 : f32
    %9 = vector.broadcast %cst_8 : f32 to vector<32x1xf32>
    %10 = arith.divf %8, %9 : vector<32x1xf32>
    %11 = vector.broadcast %10 : vector<32x1xf32> to vector<32x32xf32>
    %12 = arith.subf %6, %11 : vector<32x32xf32>
    %13 = arith.mulf %12, %12 : vector<32x32xf32>
    %cst_9 = arith.constant dense<0.000000e+00> : vector<32xf32>
    %14 = vector.multi_reduction <add>, %13, %cst_9 [1] : vector<32x32xf32> to vector<32xf32>
    %15 = vector.shape_cast %14 : vector<32xf32> to vector<32x1xf32>
    %cst_10 = arith.constant 3.200000e+01 : f32
    %16 = vector.broadcast %cst_10 : f32 to vector<32x1xf32>
    %17 = arith.divf %15, %16 : vector<32x1xf32>
    %18 = vector.broadcast %10 : vector<32x1xf32> to vector<32x32xf32>
    %19 = arith.subf %6, %18 : vector<32x32xf32>
    %cst_11 = arith.constant 9.99999997E-7 : f32
    %20 = vector.broadcast %cst_11 : f32 to vector<32x1xf32>
    %21 = arith.addf %17, %20 : vector<32x1xf32>
    %22 = math.rsqrt %21 : vector<32x1xf32>
    %23 = vector.broadcast %22 : vector<32x1xf32> to vector<32x32xf32>
    %24 = arith.mulf %19, %23 : vector<32x32xf32>
    %25 = vector.broadcast %0 : vector<1x32xf32> to vector<32x32xf32>
    %26 = arith.mulf %24, %25 : vector<32x32xf32>
    %27 = vector.broadcast %1 : vector<1x32xf32> to vector<32x32xf32>
    %28 = arith.addf %26, %27 : vector<32x32xf32>
    %c0_12 = arith.constant 0 : index
    %c0_13 = arith.constant 0 : index
    %29 = vector.load %arg2[%c0_12, %c0_13] : memref<32x96xf32, #tpu.memory_space<vmem>>, vector<32x96xf32>
    %cst_14 = arith.constant dense<0.000000e+00> : vector<32x96xf32>
    %30 = tpu.matmul %28, %29, %cst_14 {dimension_numbers = #tpu.dot_dimension_numbers<[1], [0], [0], [1], [0, 0, 1, 1], [], []>} : vector<32x32xf32>, vector<32x96xf32>, vector<32x96xf32> -> vector<32x96xf32>
    %c0_15 = arith.constant 0 : index
    %c0_16 = arith.constant 0 : index
    %31 = vector.load %arg3[%c0_15, %c0_16] : memref<1x96xf32, #tpu.memory_space<vmem>>, vector<1x96xf32>
    %32 = vector.broadcast %31 : vector<1x96xf32> to vector<32x96xf32>
    %33 = arith.addf %30, %32 : vector<32x96xf32>
    %34 = vector.extract_strided_slice %33 {offsets = [0, 0], sizes = [32, 32], strides = [1, 1]} : vector<32x96xf32> to vector<32x32xf32>
    %35 = vector.extract_strided_slice %33 {offsets = [0, 32], sizes = [32, 32], strides = [1, 1]} : vector<32x96xf32> to vector<32x32xf32>
    %36 = vector.extract_strided_slice %33 {offsets = [0, 64], sizes = [32, 32], strides = [1, 1]} : vector<32x96xf32> to vector<32x32xf32>
    %37 = vector.shape_cast %34 : vector<32x32xf32> to vector<4x8x32xf32>
    %38 = vector.shape_cast %35 : vector<32x32xf32> to vector<4x8x32xf32>
    %39 = vector.shape_cast %36 : vector<32x32xf32> to vector<4x8x32xf32>
    %40 = vector.extract_strided_slice %37 {offsets = [0, 0, 0], sizes = [4, 8, 8], strides = [1, 1, 1]} : vector<4x8x32xf32> to vector<4x8x8xf32>
    %41 = vector.extract_strided_slice %38 {offsets = [0, 0, 0], sizes = [4, 8, 8], strides = [1, 1, 1]} : vector<4x8x32xf32> to vector<4x8x8xf32>
    %42 = vector.extract_strided_slice %39 {offsets = [0, 0, 0], sizes = [4, 8, 8], strides = [1, 1, 1]} : vector<4x8x32xf32> to vector<4x8x8xf32>
    %cst_17 = arith.constant dense<0.000000e+00> : vector<4x8x8xf32>
    %43 = tpu.matmul %40, %41, %cst_17 {dimension_numbers = #tpu.dot_dimension_numbers<[2], [2], [1], [1], [0, 0, 0, 1, 1, 1], [0], [0]>} : vector<4x8x8xf32>, vector<4x8x8xf32>, vector<4x8x8xf32> -> vector<4x8x8xf32>
    %cst_18 = arith.constant dense<0xFF800000> : vector<4x8xf32>
    %44 = vector.multi_reduction <maximumf>, %43, %cst_18 [2] : vector<4x8x8xf32> to vector<4x8xf32>
    %45 = vector.shape_cast %44 : vector<4x8xf32> to vector<4x8x1xf32>
    %46 = vector.broadcast %45 : vector<4x8x1xf32> to vector<4x8x8xf32>
    %47 = arith.subf %43, %46 : vector<4x8x8xf32>
    %48 = math.exp %47 : vector<4x8x8xf32>
    %cst_19 = arith.constant dense<0.000000e+00> : vector<4x8xf32>
    %49 = vector.multi_reduction <add>, %48, %cst_19 [2] : vector<4x8x8xf32> to vector<4x8xf32>
    %50 = vector.shape_cast %49 : vector<4x8xf32> to vector<4x8x1xf32>
    %51 = tpu.reciprocal %50 : vector<4x8x1xf32> -> vector<4x8x1xf32>
    %52 = vector.broadcast %51 : vector<4x8x1xf32> to vector<4x8x8xf32>
    %53 = arith.mulf %48, %52 : vector<4x8x8xf32>
    %cst_20 = arith.constant dense<0.000000e+00> : vector<4x8x8xf32>
    %54 = tpu.matmul %53, %42, %cst_20 {dimension_numbers = #tpu.dot_dimension_numbers<[2], [1], [1], [2], [0, 0, 0, 1, 1, 2], [0], [0]>} : vector<4x8x8xf32>, vector<4x8x8xf32>, vector<4x8x8xf32> -> vector<4x8x8xf32>
    %c0_21 = arith.constant 0 : index
    %c0_22 = arith.constant 0 : index
    %c0_23 = arith.constant 0 : index
    %55 = vector.load %arg9[%c0_21, %c0_22, %c0_23] : memref<4x8x32xf32, #tpu.memory_space<vmem>>, vector<4x8x8xf32>
    tpu.vector_store %arg9[%c0_21, %c0_22, %c0_23], %54 {strides = array<i32>} : memref<4x8x32xf32, #tpu.memory_space<vmem>>, vector<4x8x8xf32>,
    %56 = vector.extract_strided_slice %37 {offsets = [0, 0, 8], sizes = [4, 8, 8], strides = [1, 1, 1]} : vector<4x8x32xf32> to vector<4x8x8xf32>
    %57 = vector.extract_strided_slice %38 {offsets = [0, 0, 8], sizes = [4, 8, 8], strides = [1, 1, 1]} : vector<4x8x32xf32> to vector<4x8x8xf32>
    %58 = vector.extract_strided_slice %39 {offsets = [0, 0, 8], sizes = [4, 8, 8], strides = [1, 1, 1]} : vector<4x8x32xf32> to vector<4x8x8xf32>
    %cst_24 = arith.constant dense<0.000000e+00> : vector<4x8x8xf32>
    %59 = tpu.matmul %56, %57, %cst_24 {dimension_numbers = #tpu.dot_dimension_numbers<[2], [2], [1], [1], [0, 0, 0, 1, 1, 1], [0], [0]>} : vector<4x8x8xf32>, vector<4x8x8xf32>, vector<4x8x8xf32> -> vector<4x8x8xf32>
    %cst_25 = arith.constant dense<0xFF800000> : vector<4x8xf32>
    %60 = vector.multi_reduction <maximumf>, %59, %cst_25 [2] : vector<4x8x8xf32> to vector<4x8xf32>
    %61 = vector.shape_cast %60 : vector<4x8xf32> to vector<4x8x1xf32>
    %62 = vector.broadcast %61 : vector<4x8x1xf32> to vector<4x8x8xf32>
    %63 = arith.subf %59, %62 : vector<4x8x8xf32>
    %64 = math.exp %63 : vector<4x8x8xf32>
    %cst_26 = arith.constant dense<0.000000e+00> : vector<4x8xf32>
    %65 = vector.multi_reduction <add>, %64, %cst_26 [2] : vector<4x8x8xf32> to vector<4x8xf32>
    %66 = vector.shape_cast %65 : vector<4x8xf32> to vector<4x8x1xf32>
    %67 = tpu.reciprocal %66 : vector<4x8x1xf32> -> vector<4x8x1xf32>
    %68 = vector.broadcast %67 : vector<4x8x1xf32> to vector<4x8x8xf32>
    %69 = arith.mulf %64, %68 : vector<4x8x8xf32>
    %cst_27 = arith.constant dense<0.000000e+00> : vector<4x8x8xf32>
    %70 = tpu.matmul %69, %58, %cst_27 {dimension_numbers = #tpu.dot_dimension_numbers<[2], [1], [1], [2], [0, 0, 0, 1, 1, 2], [0], [0]>} : vector<4x8x8xf32>, vector<4x8x8xf32>, vector<4x8x8xf32> -> vector<4x8x8xf32>
    %c0_28 = arith.constant 0 : index
    %c0_29 = arith.constant 0 : index
    %c8 = arith.constant 8 : index
    %71 = vector.load %arg9[%c0_28, %c0_29, %c8] : memref<4x8x32xf32, #tpu.memory_space<vmem>>, vector<4x8x8xf32>
    tpu.vector_store %arg9[%c0_28, %c0_29, %c8], %70 {strides = array<i32>} : memref<4x8x32xf32, #tpu.memory_space<vmem>>, vector<4x8x8xf32>,
    %72 = vector.extract_strided_slice %37 {offsets = [0, 0, 16], sizes = [4, 8, 8], strides = [1, 1, 1]} : vector<4x8x32xf32> to vector<4x8x8xf32>
    %73 = vector.extract_strided_slice %38 {offsets = [0, 0, 16], sizes = [4, 8, 8], strides = [1, 1, 1]} : vector<4x8x32xf32> to vector<4x8x8xf32>
    %74 = vector.extract_strided_slice %39 {offsets = [0, 0, 16], sizes = [4, 8, 8], strides = [1, 1, 1]} : vector<4x8x32xf32> to vector<4x8x8xf32>
    %cst_30 = arith.constant dense<0.000000e+00> : vector<4x8x8xf32>
    %75 = tpu.matmul %72, %73, %cst_30 {dimension_numbers = #tpu.dot_dimension_numbers<[2], [2], [1], [1], [0, 0, 0, 1, 1, 1], [0], [0]>} : vector<4x8x8xf32>, vector<4x8x8xf32>, vector<4x8x8xf32> -> vector<4x8x8xf32>
    %cst_31 = arith.constant dense<0xFF800000> : vector<4x8xf32>
    %76 = vector.multi_reduction <maximumf>, %75, %cst_31 [2] : vector<4x8x8xf32> to vector<4x8xf32>
    %77 = vector.shape_cast %76 : vector<4x8xf32> to vector<4x8x1xf32>
    %78 = vector.broadcast %77 : vector<4x8x1xf32> to vector<4x8x8xf32>
    %79 = arith.subf %75, %78 : vector<4x8x8xf32>
    %80 = math.exp %79 : vector<4x8x8xf32>
    %cst_32 = arith.constant dense<0.000000e+00> : vector<4x8xf32>
    %81 = vector.multi_reduction <add>, %80, %cst_32 [2] : vector<4x8x8xf32> to vector<4x8xf32>
    %82 = vector.shape_cast %81 : vector<4x8xf32> to vector<4x8x1xf32>
    %83 = tpu.reciprocal %82 : vector<4x8x1xf32> -> vector<4x8x1xf32>
    %84 = vector.broadcast %83 : vector<4x8x1xf32> to vector<4x8x8xf32>
    %85 = arith.mulf %80, %84 : vector<4x8x8xf32>
    %cst_33 = arith.constant dense<0.000000e+00> : vector<4x8x8xf32>
    %86 = tpu.matmul %85, %74, %cst_33 {dimension_numbers = #tpu.dot_dimension_numbers<[2], [1], [1], [2], [0, 0, 0, 1, 1, 2], [0], [0]>} : vector<4x8x8xf32>, vector<4x8x8xf32>, vector<4x8x8xf32> -> vector<4x8x8xf32>
    %c0_34 = arith.constant 0 : index
    %c0_35 = arith.constant 0 : index
    %c16 = arith.constant 16 : index
    %87 = vector.load %arg9[%c0_34, %c0_35, %c16] : memref<4x8x32xf32, #tpu.memory_space<vmem>>, vector<4x8x8xf32>
    tpu.vector_store %arg9[%c0_34, %c0_35, %c16], %86 {strides = array<i32>} : memref<4x8x32xf32, #tpu.memory_space<vmem>>, vector<4x8x8xf32>,
    %88 = vector.extract_strided_slice %37 {offsets = [0, 0, 24], sizes = [4, 8, 8], strides = [1, 1, 1]} : vector<4x8x32xf32> to vector<4x8x8xf32>
    %89 = vector.extract_strided_slice %38 {offsets = [0, 0, 24], sizes = [4, 8, 8], strides = [1, 1, 1]} : vector<4x8x32xf32> to vector<4x8x8xf32>
    %90 = vector.extract_strided_slice %39 {offsets = [0, 0, 24], sizes = [4, 8, 8], strides = [1, 1, 1]} : vector<4x8x32xf32> to vector<4x8x8xf32>
    %cst_36 = arith.constant dense<0.000000e+00> : vector<4x8x8xf32>
    %91 = tpu.matmul %88, %89, %cst_36 {dimension_numbers = #tpu.dot_dimension_numbers<[2], [2], [1], [1], [0, 0, 0, 1, 1, 1], [0], [0]>} : vector<4x8x8xf32>, vector<4x8x8xf32>, vector<4x8x8xf32> -> vector<4x8x8xf32>
    %cst_37 = arith.constant dense<0xFF800000> : vector<4x8xf32>
    %92 = vector.multi_reduction <maximumf>, %91, %cst_37 [2] : vector<4x8x8xf32> to vector<4x8xf32>
    %93 = vector.shape_cast %92 : vector<4x8xf32> to vector<4x8x1xf32>
    %94 = vector.broadcast %93 : vector<4x8x1xf32> to vector<4x8x8xf32>
    %95 = arith.subf %91, %94 : vector<4x8x8xf32>
    %96 = math.exp %95 : vector<4x8x8xf32>
    %cst_38 = arith.constant dense<0.000000e+00> : vector<4x8xf32>
    %97 = vector.multi_reduction <add>, %96, %cst_38 [2] : vector<4x8x8xf32> to vector<4x8xf32>
    %98 = vector.shape_cast %97 : vector<4x8xf32> to vector<4x8x1xf32>
    %99 = tpu.reciprocal %98 : vector<4x8x1xf32> -> vector<4x8x1xf32>
    %100 = vector.broadcast %99 : vector<4x8x1xf32> to vector<4x8x8xf32>
    %101 = arith.mulf %96, %100 : vector<4x8x8xf32>
    %cst_39 = arith.constant dense<0.000000e+00> : vector<4x8x8xf32>
    %102 = tpu.matmul %101, %90, %cst_39 {dimension_numbers = #tpu.dot_dimension_numbers<[2], [1], [1], [2], [0, 0, 0, 1, 1, 2], [0], [0]>} : vector<4x8x8xf32>, vector<4x8x8xf32>, vector<4x8x8xf32> -> vector<4x8x8xf32>
    %c0_40 = arith.constant 0 : index
    %c0_41 = arith.constant 0 : index
    %c24 = arith.constant 24 : index
    %103 = vector.load %arg9[%c0_40, %c0_41, %c24] : memref<4x8x32xf32, #tpu.memory_space<vmem>>, vector<4x8x8xf32>
    tpu.vector_store %arg9[%c0_40, %c0_41, %c24], %102 {strides = array<i32>} : memref<4x8x32xf32, #tpu.memory_space<vmem>>, vector<4x8x8xf32>,
    %c0_42 = arith.constant 0 : index
    %c0_43 = arith.constant 0 : index
    %c0_44 = arith.constant 0 : index
    %104 = vector.load %arg9[%c0_42, %c0_43, %c0_44] : memref<4x8x32xf32, #tpu.memory_space<vmem>>, vector<4x8x32xf32>
    %105 = vector.shape_cast %104 : vector<4x8x32xf32> to vector<32x32xf32>
    %106 = arith.addf %105, %28 : vector<32x32xf32>
    %cst_45 = arith.constant dense<0.000000e+00> : vector<32xf32>
    %107 = vector.multi_reduction <add>, %106, %cst_45 [1] : vector<32x32xf32> to vector<32xf32>
    %108 = vector.shape_cast %107 : vector<32xf32> to vector<32x1xf32>
    %cst_46 = arith.constant 3.200000e+01 : f32
    %109 = vector.broadcast %cst_46 : f32 to vector<32x1xf32>
    %110 = arith.divf %108, %109 : vector<32x1xf32>
    %111 = vector.broadcast %110 : vector<32x1xf32> to vector<32x32xf32>
    %112 = arith.subf %106, %111 : vector<32x32xf32>
    %113 = arith.mulf %112, %112 : vector<32x32xf32>
    %cst_47 = arith.constant dense<0.000000e+00> : vector<32xf32>
    %114 = vector.multi_reduction <add>, %113, %cst_47 [1] : vector<32x32xf32> to vector<32xf32>
    %115 = vector.shape_cast %114 : vector<32xf32> to vector<32x1xf32>
    %cst_48 = arith.constant 3.200000e+01 : f32
    %116 = vector.broadcast %cst_48 : f32 to vector<32x1xf32>
    %117 = arith.divf %115, %116 : vector<32x1xf32>
    %118 = vector.broadcast %110 : vector<32x1xf32> to vector<32x32xf32>
    %119 = arith.subf %106, %118 : vector<32x32xf32>
    %cst_49 = arith.constant 9.99999997E-7 : f32
    %120 = vector.broadcast %cst_49 : f32 to vector<32x1xf32>
    %121 = arith.addf %117, %120 : vector<32x1xf32>
    %122 = math.rsqrt %121 : vector<32x1xf32>
    %123 = vector.broadcast %122 : vector<32x1xf32> to vector<32x32xf32>
    %124 = arith.mulf %119, %123 : vector<32x32xf32>
    %125 = vector.broadcast %2 : vector<1x32xf32> to vector<32x32xf32>
    %126 = arith.mulf %124, %125 : vector<32x32xf32>
    %127 = vector.broadcast %3 : vector<1x32xf32> to vector<32x32xf32>
    %128 = arith.addf %126, %127 : vector<32x32xf32>
    %c0_50 = arith.constant 0 : index
    %c0_51 = arith.constant 0 : index
    %129 = vector.load %arg5[%c0_50, %c0_51] : memref<32x64xf32, #tpu.memory_space<vmem>>, vector<32x64xf32>
    %cst_52 = arith.constant dense<0.000000e+00> : vector<32x64xf32>
    %130 = tpu.matmul %128, %129, %cst_52 {dimension_numbers = #tpu.dot_dimension_numbers<[1], [0], [0], [1], [0, 0, 1, 1], [], []>} : vector<32x32xf32>, vector<32x64xf32>, vector<32x64xf32> -> vector<32x64xf32>
    %c0_53 = arith.constant 0 : index
    %c0_54 = arith.constant 0 : index
    %131 = vector.load %arg6[%c0_53, %c0_54] : memref<1x64xf32, #tpu.memory_space<vmem>>, vector<1x64xf32>
    %132 = vector.broadcast %131 : vector<1x64xf32> to vector<32x64xf32>
    %133 = arith.addf %130, %132 : vector<32x64xf32>
    %cst_55 = arith.constant 0.000000e+00 : f32
    %134 = vector.broadcast %cst_55 : f32 to vector<32x64xf32>
    %135 = arith.maximumf %133, %134 : vector<32x64xf32>
    %c0_56 = arith.constant 0 : index
    %c0_57 = arith.constant 0 : index
    %136 = vector.load %arg7[%c0_56, %c0_57] : memref<64x32xf32, #tpu.memory_space<vmem>>, vector<64x32xf32>
    %cst_58 = arith.constant dense<0.000000e+00> : vector<32x32xf32>
    %137 = tpu.matmul %135, %136, %cst_58 {dimension_numbers = #tpu.dot_dimension_numbers<[1], [0], [0], [1], [0, 0, 1, 1], [], []>} : vector<32x64xf32>, vector<64x32xf32>, vector<32x32xf32> -> vector<32x32xf32>
    %138 = vector.broadcast %4 : vector<1x32xf32> to vector<32x32xf32>
    %139 = arith.addf %137, %138 : vector<32x32xf32>
    %140 = arith.addf %139, %128 : vector<32x32xf32>
    %141 = vector.shape_cast %140 : vector<32x32xf32> to vector<4x8x32xf32>
    %c0_59 = arith.constant 0 : index
    %c0_60 = arith.constant 0 : index
    %c0_61 = arith.constant 0 : index
    %142 = vector.load %arg8[%c0_59, %c0_60, %c0_61] : memref<4x8x32xf32, #tpu.memory_space<vmem>>, vector<4x8x32xf32>
    tpu.vector_store %arg8[%c0_59, %c0_60, %c0_61], %141 {strides = array<i32>} : memref<4x8x32xf32, #tpu.memory_space<vmem>>, vector<4x8x32xf32>,
    return
  }
  func.func @transform_0(%arg0: i32) -> (i32, i32, i32) {
    %c0_i32 = arith.constant 0 : i32
    %c0_i32_0 = arith.constant 0 : i32
    %c0_i32_1 = arith.constant 0 : i32
    return %arg0, %c0_i32, %c0_i32_0 : i32, i32, i32
  }
  func.func @transform_1(%arg0: i32) -> (i32, i32) {
    %c0_i32 = arith.constant 0 : i32
    %c0_i32_0 = arith.constant 0 : i32
    %c0_i32_1 = arith.constant 0 : i32
    return %c0_i32, %c0_i32_0 : i32, i32
  }
  func.func @transform_2(%arg0: i32) -> (i32, i32) {
    %c0_i32 = arith.constant 0 : i32
    %c0_i32_0 = arith.constant 0 : i32
    %c0_i32_1 = arith.constant 0 : i32
    return %c0_i32, %c0_i32_0 : i32, i32
  }
  func.func @transform_3(%arg0: i32) -> (i32, i32) {
    %c0_i32 = arith.constant 0 : i32
    %c0_i32_0 = arith.constant 0 : i32
    %c0_i32_1 = arith.constant 0 : i32
    return %c0_i32, %c0_i32_0 : i32, i32
  }
  func.func @transform_4(%arg0: i32) -> (i32, i32) {
    %c0_i32 = arith.constant 0 : i32
    %c0_i32_0 = arith.constant 0 : i32
    %c0_i32_1 = arith.constant 0 : i32
    return %c0_i32, %c0_i32_0 : i32, i32
  }
  func.func @transform_5(%arg0: i32) -> (i32, i32) {
    %c0_i32 = arith.constant 0 : i32
    %c0_i32_0 = arith.constant 0 : i32
    %c0_i32_1 = arith.constant 0 : i32
    return %c0_i32, %c0_i32_0 : i32, i32
  }
  func.func @transform_6(%arg0: i32) -> (i32, i32) {
    %c0_i32 = arith.constant 0 : i32
    %c0_i32_0 = arith.constant 0 : i32
    %c0_i32_1 = arith.constant 0 : i32
    return %c0_i32, %c0_i32_0 : i32, i32
  }
  func.func @transform_7(%arg0: i32) -> (i32, i32, i32) {
    %c0_i32 = arith.constant 0 : i32
    %c0_i32_0 = arith.constant 0 : i32
    %c0_i32_1 = arith.constant 0 : i32
    return %arg0, %c0_i32, %c0_i32_0 : i32, i32, i32
  }
}

</mosaic_0001>

<llo_original>
// kernel: tpu_custom_call.1
$region0: #{tpu_custom_call.1}
  #allocation0 [shape = 'u32[]', space=smem, size = 0x4, offset = 0x4, fixed_abs, tag = 'smem constant byte address 0x4 - core index']
  #allocation1 [shape = 'u32[144,128]{1,0:T(1,128)}', space=vmem, size = 0x12000, scoped, tag = 'internal scratch']
  #allocation2 [shape = 'f32[4,8,32]{2,1,0:T(8,128)}', space=vmem, size = 0x4000, scoped, tag = 'scratch operand']
  %s0 = inlined_call_operand.vmem [shape: f32[8,8,32], index: 0, kind: input, shape index: {}]
  %s1 = inlined_call_operand.vmem [shape: f32[32,96], index: 1, kind: input, shape index: {}]
  %s2 = inlined_call_operand.vmem [shape: f32[1,96], index: 2, kind: input, shape index: {}]
  %s3 = inlined_call_operand.vmem [shape: f32[5,32], index: 3, kind: input, shape index: {}]
  %s4 = inlined_call_operand.hbm [shape: f32[32,64], index: 4, kind: input, shape index: {}]
  %s5 = inlined_call_operand.vmem [shape: f32[1,64], index: 5, kind: input, shape index: {}]
  %s6 = inlined_call_operand.vmem [shape: f32[64,32], index: 6, kind: input, shape index: {}]
  %s7 = inlined_call_operand.hbm [shape: f32[8,8,32], index: 7, kind: output, shape index: {}]
  %s8 = sld [smem:[#allocation0]]
  $region65: #{tpu_custom_call.1} parent=0
    _
  %s10 = ssub.s32 1, %s8
  %s11 = scalar_select 0, %s10, %s8
  $region1: #{tpu_custom_call.1} parent=0
    #allocation3 [shape = 'u8[16384]{0}', space=vmem, size = 0x4000, scoped, tag = 'input window, operand 4, single buffered']
    #allocation4 [shape = 's32[2]{0}', space=sflag, size = 0x8, scoped, tag = 'scoped memory for tpu_custom_call.1']
    #allocation5 [shape = 's32[2]{0}', space=sflag, size = 0x8, scoped, tag = 'scoped memory for tpu_custom_call.1']
    #allocation6 [shape = 'u8[32768]{0}', space=vmem, size = 0x8000, scoped, tag = 'output window, operand 0']
    %12 = vsyncpa [#allocation4], 0
    %13 = vsyncpa [#allocation5], 0
    %s14 = scalar_lea.sflag [#allocation5], 1
    %15 = vsyncpa %s14, 0
    loop: start=0, step=1, limit=4
    $region2: #{tpu_custom_call.1} parent=1 // loop_pre_header
      _
    $region3: #{tpu_custom_call.1} parent=1 // loop_header
      %s17 = sphi 0, %s21
      %p18 = scmp.ge.s32.totalorder %s17, 4
      %s27 = sphi 0, %s29
      %s30 = sphi 0, %s27
      %s31 = sphi 0, %s30
      %s47 = sphi 0, %s31
      %s51 = sphi 0, %s51
      %s53 = sphi 0, %s51
      %s54 = sphi 0, %s53
      %s68 = sphi 0, %s54
      %s72 = sphi 0, %s72
      %s74 = sphi 0, %s72
      %s75 = sphi 0, %s74
      %s89 = sphi 0, %s75
      %s93 = sphi 0, %s93
      %s95 = sphi 0, %s93
      %s96 = sphi 0, %s95
      %s110 = sphi 0, %s96
      %s114 = sphi 0, %s114
      %s116 = sphi 0, %s114
      %s117 = sphi 0, %s116
      %s131 = sphi 0, %s117
      %s135 = sphi 0, %s135
      %s137 = sphi 0, %s135
      %s138 = sphi 0, %s137
      %s152 = sphi 0, %s138
      %s156 = sphi 0, %s156
      %s158 = sphi 0, %s156
      %s159 = sphi 0, %s158
      %s173 = sphi 0, %s159
      %s179 = sphi 0, %s181
      %s182 = sphi 0, %s179
      %s183 = sphi 0, %s182
      %s199 = sphi 0, %s183
    $region4: #{tpu_custom_call.1} parent=1 // loop_header_branch
      %20 = sbr.rel (%p18) target = $region8
    $region5: #{tpu_custom_call.1} parent=1 // loop_body
      %s22 = ssub.s32 %s17, 1
      %s23 = ssub.s32 %s17, 2
      %s24 = sadd.s32 %s17, 1
      %s25 = ssub.s32 %s17, %s24
      %p26 = scmp.eq.s32.totalorder %s25, 0
      %s28 = sadd.s32 %s27, 1
      %s29 = scalar_select %p26, %s27, %s28
      %p32 = pneg %p26
      %p33 = scmp.eq.s32.totalorder %s17, 1
      %p34 = por %p32, %p33
      %p35 = scmp.ne.s32.totalorder %s27, %s30
      %p36 = scmp.eq.s32.totalorder %s17, 0
      %p37 = por %p35, %p36
      %p38 = scmp.ne.s32.totalorder %s27, %s30
      %p39 = scmp.eq.s32.totalorder %s22, 1
      %p40 = por %p38, %p39
      %p41 = scmp.ne.s32.totalorder %s30, %s31
      %p42 = scmp.eq.s32.totalorder %s22, 0
      %p43 = por %p41, %p42
      %p44 = scmp.ne.s32.totalorder %s30, %s31
      %p45 = scmp.eq.s32.totalorder %s23, 1
      %p46 = por %p44, %p45
      %p48 = scmp.ne.s32.totalorder %s31, %s47
      %p49 = scmp.eq.s32.totalorder %s23, 0
      %p50 = por %p48, %p49
      %s52 = sadd.s32 %s51, 1
      %p55 = scmp.eq.s32.totalorder %s17, 1
      %p56 = scmp.ne.s32.totalorder %s51, %s53
      %p57 = scmp.eq.s32.totalorder %s17, 0
      %p58 = por %p56, %p57
      %p59 = scmp.ne.s32.totalorder %s51, %s53
      %p60 = scmp.eq.s32.totalorder %s22, 1
      %p61 = por %p59, %p60
      %p62 = scmp.ne.s32.totalorder %s53, %s54
      %p63 = scmp.eq.s32.totalorder %s22, 0
      %p64 = por %p62, %p63
      %p65 = scmp.ne.s32.totalorder %s53, %s54
      %p66 = scmp.eq.s32.totalorder %s23, 1
      %p67 = por %p65, %p66
      %p69 = scmp.ne.s32.totalorder %s54, %s68
      %p70 = scmp.eq.s32.totalorder %s23, 0
      %p71 = por %p69, %p70
      %s73 = sadd.s32 %s72, 1
      %p76 = scmp.eq.s32.totalorder %s17, 1
      %p77 = scmp.ne.s32.totalorder %s72, %s74
      %p78 = scmp.eq.s32.totalorder %s17, 0
      %p79 = por %p77, %p78
      %p80 = scmp.ne.s32.totalorder %s72, %s74
      %p81 = scmp.eq.s32.totalorder %s22, 1
      %p82 = por %p80, %p81
      %p83 = scmp.ne.s32.totalorder %s74, %s75
      %p84 = scmp.eq.s32.totalorder %s22, 0
      %p85 = por %p83, %p84
      %p86 = scmp.ne.s32.totalorder %s74, %s75
      %p87 = scmp.eq.s32.totalorder %s23, 1
      %p88 = por %p86, %p87
      %p90 = scmp.ne.s32.totalorder %s75, %s89
      %p91 = scmp.eq.s32.totalorder %s23, 0
      %p92 = por %p90, %p91
      %s94 = sadd.s32 %s93, 1
      %p97 = scmp.eq.s32.totalorder %s17, 1
      %p98 = scmp.ne.s32.totalorder %s93, %s95
      %p99 = scmp.eq.s32.totalorder %s17, 0
      %p100 = por %p98, %p99
      %p101 = scmp.ne.s32.totalorder %s93, %s95
      %p102 = scmp.eq.s32.totalorder %s22, 1
      %p103 = por %p101, %p102
      %p104 = scmp.ne.s32.totalorder %s95, %s96
      %p105 = scmp.eq.s32.totalorder %s22, 0
      %p106 = por %p104, %p105
      %p107 = scmp.ne.s32.totalorder %s95, %s96
      %p108 = scmp.eq.s32.totalorder %s23, 1
      %p109 = por %p107, %p108
      %p111 = scmp.ne.s32.totalorder %s96, %s110
      %p112 = scmp.eq.s32.totalorder %s23, 0
      %p113 = por %p111, %p112
      %s115 = sadd.s32 %s114, 1
      %p118 = scmp.eq.s32.totalorder %s17, 1
      %p119 = scmp.ne.s32.totalorder %s114, %s116
      %p120 = scmp.eq.s32.totalorder %s17, 0
      %p121 = por %p119, %p120
      %p122 = scmp.ne.s32.totalorder %s114, %s116
      %p123 = scmp.eq.s32.totalorder %s22, 1
      %p124 = por %p122, %p123
      %p125 = scmp.ne.s32.totalorder %s116, %s117
      %p126 = scmp.eq.s32.totalorder %s22, 0
      %p127 = por %p125, %p126
      %p128 = scmp.ne.s32.totalorder %s116, %s117
      %p129 = scmp.eq.s32.totalorder %s23, 1
      %p130 = por %p128, %p129
      %p132 = scmp.ne.s32.totalorder %s117, %s131
      %p133 = scmp.eq.s32.totalorder %s23, 0
      %p134 = por %p132, %p133
      %s136 = sadd.s32 %s135, 1
      %p139 = scmp.eq.s32.totalorder %s17, 1
      %p140 = scmp.ne.s32.totalorder %s135, %s137
      %p141 = scmp.eq.s32.totalorder %s17, 0
      %p142 = por %p140, %p141
      %p143 = scmp.ne.s32.totalorder %s135, %s137
      %p144 = scmp.eq.s32.totalorder %s22, 1
      %p145 = por %p143, %p144
      %p146 = scmp.ne.s32.totalorder %s137, %s138
      %p147 = scmp.eq.s32.totalorder %s22, 0
      %p148 = por %p146, %p147
      %p149 = scmp.ne.s32.totalorder %s137, %s138
      %p150 = scmp.eq.s32.totalorder %s23, 1
      %p151 = por %p149, %p150
      %p153 = scmp.ne.s32.totalorder %s138, %s152
      %p154 = scmp.eq.s32.totalorder %s23, 0
      %p155 = por %p153, %p154
      %s157 = sadd.s32 %s156, 1
      %p160 = scmp.eq.s32.totalorder %s17, 1
      %p161 = scmp.ne.s32.totalorder %s156, %s158
      %p162 = scmp.eq.s32.totalorder %s17, 0
      %p163 = por %p161, %p162
      %p164 = scmp.ne.s32.totalorder %s156, %s158
      %p165 = scmp.eq.s32.totalorder %s22, 1
      %p166 = por %p164, %p165
      %p167 = scmp.ne.s32.totalorder %s158, %s159
      %p168 = scmp.eq.s32.totalorder %s22, 0
      %p169 = por %p167, %p168
      %p170 = scmp.ne.s32.totalorder %s158, %s159
      %p171 = scmp.eq.s32.totalorder %s23, 1
      %p172 = por %p170, %p171
      %p174 = scmp.ne.s32.totalorder %s159, %s173
      %p175 = scmp.eq.s32.totalorder %s23, 0
      %p176 = por %p174, %p175
      %s177 = ssub.s32 %s17, %s24
      %p178 = scmp.eq.s32.totalorder %s177, 0
      %s180 = sadd.s32 %s179, 1
      %s181 = scalar_select %p178, %s179, %s180
      %p184 = pneg %p178
      %p185 = scmp.eq.s32.totalorder %s17, 1
      %p186 = por %p184, %p185
      %p187 = scmp.ne.s32.totalorder %s179, %s182
      %p188 = scmp.eq.s32.totalorder %s17, 0
      %p189 = por %p187, %p188
      %p190 = scmp.ne.s32.totalorder %s179, %s182
      %p191 = scmp.eq.s32.totalorder %s22, 1
      %p192 = por %p190, %p191
      %p193 = scmp.ne.s32.totalorder %s182, %s183
      %p194 = scmp.eq.s32.totalorder %s22, 0
      %p195 = por %p193, %p194
      %p196 = scmp.ne.s32.totalorder %s182, %s183
      %p197 = scmp.eq.s32.totalorder %s23, 1
      %p198 = por %p196, %p197
      %p200 = scmp.ne.s32.totalorder %s183, %s199
      %p201 = scmp.eq.s32.totalorder %s23, 0
      %p202 = por %p200, %p201
      %p203 = scmp.le.s32.totalorder 1, %s17
      %p204 = scmp.lt.s32.totalorder %s17, 3
      %p205 = pnand %p203, %p204
      %p206 = pneg %p205
      // Predicated region
      $region9: #{tpu_custom_call.1} parent=5 // pred_check
        _
      $region10: #{tpu_custom_call.1} parent=5 // pred_check_branch
        %208 = sbr.rel (%p205) target = $region12
      $region11: #{tpu_custom_call.1} parent=5 // pred_region
        %s209 = ssub.s32 %s17, 1
        // Predicated region
        $region13: #{tpu_custom_call.1} parent=11 // pred_check
          %p210 = pneg %p64
        $region14: #{tpu_custom_call.1} parent=11 // pred_check_branch
          %212 = sbr.rel (%p210) target = $region16
        $region15: #{tpu_custom_call.1} parent=11 // pred_region
          _
        $region16: #{tpu_custom_call.1} parent=11 // pred_fallthru
          _
        // Predicated region
        $region17: #{tpu_custom_call.1} parent=11 // pred_check
          %p213 = pneg %p85
        $region18: #{tpu_custom_call.1} parent=11 // pred_check_branch
          %215 = sbr.rel (%p213) target = $region20
        $region19: #{tpu_custom_call.1} parent=11 // pred_region
          _
        $region20: #{tpu_custom_call.1} parent=11 // pred_fallthru
          _
        // Predicated region
        $region21: #{tpu_custom_call.1} parent=11 // pred_check
          %p216 = pneg %p106
        $region22: #{tpu_custom_call.1} parent=11 // pred_check_branch
          %218 = sbr.rel (%p216) target = $region24
        $region23: #{tpu_custom_call.1} parent=11 // pred_region
          _
        $region24: #{tpu_custom_call.1} parent=11 // pred_fallthru
          _
        // Predicated region
        $region25: #{tpu_custom_call.1} parent=11 // pred_check
          %p219 = pneg %p127
        $region26: #{tpu_custom_call.1} parent=11 // pred_check_branch
          %221 = sbr.rel (%p219) target = $region28
        $region27: #{tpu_custom_call.1} parent=11 // pred_region
          %s223 = ssub.s32 512, 512
          %224 = vsyncadd [#allocation4], %s223
          %s225 = sshll.u32 [#allocation3], 4
          %s226 = int_to_ptr.vmem [resolvable:$true] %s225
          %231 = dma.hbm_to_vmem [thread:$0]  %s4, 512, %s226, [#allocation4], 128, 128, 8
        $region28: #{tpu_custom_call.1} parent=11 // pred_fallthru
          _
        // Predicated region
        $region29: #{tpu_custom_call.1} parent=11 // pred_check
          %p232 = pneg %p148
        $region30: #{tpu_custom_call.1} parent=11 // pred_check_branch
          %234 = sbr.rel (%p232) target = $region32
        $region31: #{tpu_custom_call.1} parent=11 // pred_region
          _
        $region32: #{tpu_custom_call.1} parent=11 // pred_fallthru
          _
        // Predicated region
        $region33: #{tpu_custom_call.1} parent=11 // pred_check
          %p235 = pneg %p169
        $region34: #{tpu_custom_call.1} parent=11 // pred_check_branch
          %237 = sbr.rel (%p235) target = $region36
        $region35: #{tpu_custom_call.1} parent=11 // pred_region
          _
        $region36: #{tpu_custom_call.1} parent=11 // pred_fallthru
          _
      $region12: #{tpu_custom_call.1} parent=5 // pred_fallthru
        _
      %p238 = scmp.lt.s32.totalorder %s17, 2
      // Predicated region
      $region37: #{tpu_custom_call.1} parent=5 // pred_check
        %p239 = pneg %p238
      $region38: #{tpu_custom_call.1} parent=5 // pred_check_branch
        %241 = sbr.rel (%p239) target = $region40
      $region39: #{tpu_custom_call.1} parent=5 // pred_region
        // Predicated region
        $region41: #{tpu_custom_call.1} parent=39 // pred_check
          %p242 = pneg %p37
        $region42: #{tpu_custom_call.1} parent=39 // pred_check_branch
          %244 = sbr.rel (%p242) target = $region44
        $region43: #{tpu_custom_call.1} parent=39 // pred_region
          %s245 = smul.u32 4, %s17
          %p246 = scmp.lt.s32.totalorder %s245, 7
          %s247 = scalar_select %p246, %s245, 7
          %s248 = smul.addr %s247, 8
          %s249 = scalar_lea.vmem %s0, %s248
          %s250 = smul.u32 4, %s17
        $region44: #{tpu_custom_call.1} parent=39 // pred_fallthru
          _
      $region40: #{tpu_custom_call.1} parent=5 // pred_fallthru
        _
      %p251 = scmp.le.s32.totalorder 1, %s17
      %p252 = scmp.lt.s32.totalorder %s17, 3
      %p253 = pnand %p251, %p252
      %p254 = pneg %p253
      // Predicated region
      $region45: #{tpu_custom_call.1} parent=5 // pred_check
        _
      $region46: #{tpu_custom_call.1} parent=5 // pred_check_branch
        %256 = sbr.rel (%p253) target = $region48
      $region47: #{tpu_custom_call.1} parent=5 // pred_region
        %s257 = ssub.s32 %s17, 1
        // Predicated region
        $region49: #{tpu_custom_call.1} parent=47 // pred_check
          %p258 = pneg %p127
        $region50: #{tpu_custom_call.1} parent=47 // pred_check_branch
          %260 = sbr.rel (%p258) target = $region52
        $region51: #{tpu_custom_call.1} parent=47 // pred_region
          %261 = dma.done [#allocation4], 512
        $region52: #{tpu_custom_call.1} parent=47 // pred_fallthru
          _
        %s262 = smul.u32 4, %s22
        %p263 = scmp.lt.s32.totalorder %s262, 7
        %s264 = scalar_select %p263, %s262, 7
        %s265 = smul.addr %s264, 8
        %s266 = scalar_lea.vmem %s0, %s265
        %p267 = pneg %p43
        %p268 = pneg %p40
        %p269 = pneg %p64
        %p270 = pneg %p61
        %p271 = pneg %p85
        %p272 = pneg %p82
        %p273 = pneg %p106
        %p274 = pneg %p103
        %p275 = pneg %p127
        %p276 = pneg %p124
        %p277 = pneg %p148
        %p278 = pneg %p145
        %p279 = pneg %p169
        %p280 = pneg %p166
        %p281 = pneg %p195
        %p282 = pneg %p192
        %s283 = sand.u32 %s182, 1
        %s284 = scalar_lea.sflag [#allocation5], %s283
        %s285 = sand.u32 %s182, 1
        %s286 = smul.addr %s285, 32
        %s287 = scalar_lea.vmem [#allocation6], %s286
        %s288 = smul.u32 4, %s22
        %p289 = scmp.lt.s32.totalorder %s288, 7
        %s290 = scalar_select %p289, %s288, 7
        %s291 = smul.addr %s290, 8
        %s292 = scalar_lea.vmem %s0, %s291
        %s293 = smul.u32 4, %s22
        %s294 = smul.u32 4, %s22
        %v295 = vld [vmem:[%s3] sm:$0x1]
        %v296 = vld [vmem:[%s3 + $0x1] sm:$0x1]
        %v297 = vld [vmem:[%s3 + $0x2] sm:$0x1]
        %v298 = vld [vmem:[%s3 + $0x3] sm:$0x1]
        %v299 = vld [vmem:[%s3 + $0x4] sm:$0x1]
        %v300 = vld [vmem:[%s292] sm:$0xff]
        %v301 = vld [vmem:[%s292 + $0x8] sm:$0xff]
        %v302 = vld [vmem:[%s292 + $0x10] sm:$0xff]
        %v303 = vld [vmem:[%s292 + $0x18] sm:$0xff]
        %vm304 = vcmask 261120
        %v305 = vsel %vm304, %v300, 0.0
        %306 = vadd.xlane.f32.xlu0 %v305
        %v307 = vpop.xlane.xlu0 %306
        %v308 = vsel %vm304, %v301, 0.0
        %309 = vadd.xlane.f32.xlu0 %v308
        %v310 = vpop.xlane.xlu0 %309
        %v311 = vsel %vm304, %v302, 0.0
        %312 = vadd.xlane.f32.xlu0 %v311
        %v313 = vpop.xlane.xlu0 %312
        %v314 = vsel %vm304, %v303, 0.0
        %315 = vadd.xlane.f32.xlu0 %v314
        %v316 = vpop.xlane.xlu0 %315
        %v317 = vrcp.pop 32.0
        %v318 = vmul.f32 %v307, %v317
        %v319 = vmul.f32 %v310, %v317
        %v320 = vmul.f32 %v313, %v317
        %v321 = vmul.f32 %v316, %v317
        %v322 = vsub.f32 %v300, %v318
        %v323 = vsub.f32 %v301, %v319
        %v324 = vsub.f32 %v302, %v320
        %v325 = vsub.f32 %v303, %v321
        %v326 = vmul.f32 %v322, %v322
        %v327 = vmul.f32 %v323, %v323
        %v328 = vmul.f32 %v324, %v324
        %v329 = vmul.f32 %v325, %v325
        %v330 = vsel %vm304, %v326, 0.0
        %331 = vadd.xlane.f32.xlu0 %v330
        %v332 = vpop.xlane.xlu0 %331
        %v333 = vsel %vm304, %v327, 0.0
        %334 = vadd.xlane.f32.xlu0 %v333
        %v335 = vpop.xlane.xlu0 %334
        %v336 = vsel %vm304, %v328, 0.0
        %337 = vadd.xlane.f32.xlu0 %v336
        %v338 = vpop.xlane.xlu0 %337
        %v339 = vsel %vm304, %v329, 0.0
        %340 = vadd.xlane.f32.xlu0 %v339
        %v341 = vpop.xlane.xlu0 %340
        %v342 = vmul.f32 %v332, %v317
        %v343 = vmul.f32 %v335, %v317
        %v344 = vmul.f32 %v338, %v317
        %v345 = vmul.f32 %v341, %v317
        %v346 = vadd.f32 %v342, 1e-06
        %v347 = vadd.f32 %v343, 1e-06
        %v348 = vadd.f32 %v344, 1e-06
        %v349 = vadd.f32 %v345, 1e-06
        %v350 = vrsqrt.pop %v346
        %v351 = vrsqrt.pop %v347
        %v352 = vrsqrt.pop %v348
        %v353 = vrsqrt.pop %v349
        %v354 = vmul.f32 %v322, %v350
        %v355 = vmul.f32 %v323, %v351
        %v356 = vmul.f32 %v324, %v352
        %v357 = vmul.f32 %v325, %v353
        %v358 = vlaneseq
        %v359 = vshrl.u32 %v358, 7
        %v360 = vsub.s32 0, %v359
        %v361 = vrot.slane %v295, %v360
        %v362 = vmul.f32 %v354, %v361
        %v363 = vmul.f32 %v355, %v361
        %v364 = vmul.f32 %v356, %v361
        %v365 = vmul.f32 %v357, %v361
        %v366 = vlaneseq
        %v367 = vshrl.u32 %v366, 7
        %v368 = vsub.s32 0, %v367
        %v369 = vrot.slane %v296, %v368
        %v370 = vadd.f32 %v362, %v369
        %v371 = vadd.f32 %v363, %v369
        %v372 = vadd.f32 %v364, %v369
        %v373 = vadd.f32 %v365, %v369
        %v374 = vld [vmem:[%s1] sm:$0xff]
        %v375 = vld [vmem:[%s1 + $0x8] sm:$0xff]
        %v376 = vld [vmem:[%s1 + $0x10] sm:$0xff]
        %v377 = vld [vmem:[%s1 + $0x18] sm:$0xff]
        %v378 = vld [vmem:[%s2] sm:$0x1]
        %v380 = vlaneseq
        %v381 = vshrl.u32 %v380, 7
        %v382 = vsub.s32 0, %v381
        %v383 = vrot.slane %v378, %v382
        %v386 = vsel %vm304, %v370, 0
        %v389 = vsel %vm304, %v371, 0
        %v392 = vsel %vm304, %v372, 0
        %v395 = vsel %vm304, %v373, 0
        %397 = vmatprep.subr.mxu0 0.0
        %398 = vmatpush1.msra.mxu0 %v374
        %399 = vmatprep.subr.mxu0 0.0
        %400 = vmatpush1.msra.mxu0 %v375
        %401 = vmatprep.subr.mxu0 0.0
        %402 = vmatpush1.msra.mxu0 %v376
        %403 = vmatprep.subr.mxu0 0.0
        %404 = vmatpush1.msra.mxu0 %v377
        %405 = vmatprep.subr.mxu0 0.0
        %406 = vmatpush1.msra.mxu0 0.0
        %407 = vmatprep.subr.mxu0 0.0
        %408 = vmatpush1.msra.mxu0 0.0
        %409 = vmatprep.subr.mxu0 0.0
        %410 = vmatpush1.msra.mxu0 0.0
        %411 = vmatprep.subr.mxu0 0.0
        %412 = vmatpush1.msra.mxu0 0.0
        %413 = vmatprep.subr.mxu0 0.0
        %414 = vmatpush1.msra.mxu0 0.0
        %415 = vmatprep.subr.mxu0 0.0
        %416 = vmatpush1.msra.mxu0 0.0
        %417 = vmatprep.subr.mxu0 0.0
        %418 = vmatpush1.msra.mxu0 0.0
        %419 = vmatprep.subr.mxu0 0.0
        %420 = vmatpush1.msra.mxu0 0.0
        %421 = vmatprep.subr.mxu0 0.0
        %422 = vmatpush1.msra.mxu0 0.0
        %423 = vmatprep.subr.mxu0 0.0
        %424 = vmatpush1.msra.mxu0 0.0
        %425 = vmatprep.subr.mxu0 0.0
        %426 = vmatpush1.msra.mxu0 0.0
        %427 = vmatprep.subr.mxu0 0.0
        %428 = vmatpush1.msra.mxu0 0.0
        %429 = vmatprep.subr.mxu0 0.0
        %430 = vmatpush1.msra.mxu0 0.0
        %431 = vmatprep.subr.mxu0 0.0
        %432 = vmatpush1.msra.mxu0 0.0
        %433 = vmatprep.subr.mxu0 0.0
        %434 = vmatpush1.msra.mxu0 0.0
        %435 = vmatprep.subr.mxu0 0.0
        %436 = vmatpush1.msra.mxu0 0.0
        %437 = vmatprep.subr.mxu0 0.0
        %438 = vmatpush1.msra.mxu0 0.0
        %439 = vmatprep.subr.mxu0 0.0
        %440 = vmatpush1.msra.mxu0 0.0
        %441 = vmatprep.subr.mxu0 0.0
        %442 = vmatpush1.msra.mxu0 0.0
        %443 = vmatprep.subr.mxu0 0.0
        %444 = vmatpush1.msra.mxu0 0.0
        %445 = vmatprep.subr.mxu0 0.0
        %446 = vmatpush1.msra.mxu0 0.0
        %447 = vmatprep.subr.mxu0 0.0
        %448 = vmatpush1.msra.mxu0 0.0
        %449 = vmatprep.subr.mxu0 0.0
        %450 = vmatpush1.msra.mxu0 0.0
        %451 = vmatprep.subr.mxu0 0.0
        %452 = vmatpush1.msra.mxu0 0.0
        %453 = vmatprep.subr.mxu0 0.0
        %454 = vmatpush1.msra.mxu0 0.0
        %455 = vmatprep.subr.mxu0 0.0
        %456 = vmatpush1.msra.mxu0 0.0
        %457 = vmatprep.subr.mxu0 0.0
        %458 = vmatpush1.msra.mxu0 0.0
        %459 = vmatprep.subr.mxu0 0.0
        %460 = vmatpush1.msra.mxu0 0.0
        %461 = vmatprep.mubr.f32.mxu0 0.0
        %462 = vmatmul.mubr.f32.gmra.mrb[0].mxu0 %v386
        %v463 = vpop.f32.mrb[0].mxu0
        %v464 = vadd.f32 %v383, %v463
        %v465 = vpop.f32.mrb[0].mxu0
        %466 = vmatprep.mubr.f32.mxu0 0.0
        %467 = vmatmul.mubr.f32.gmra.mrb[0].mxu0 %v389
        %v468 = vpop.f32.mrb[0].mxu0
        %v469 = vadd.f32 %v383, %v468
        %v470 = vpop.f32.mrb[0].mxu0
        %471 = vmatprep.mubr.f32.mxu0 0.0
        %472 = vmatmul.mubr.f32.gmra.mrb[0].mxu0 %v392
        %v473 = vpop.f32.mrb[0].mxu0
        %v474 = vadd.f32 %v383, %v473
        %v475 = vpop.f32.mrb[0].mxu0
        %476 = vmatprep.mubr.f32.mxu0 0.0
        %477 = vmatmul.mubr.f32.gmra.mrb[0].mxu0 %v395
        %v478 = vpop.f32.mrb[0].mxu0
        %v479 = vadd.f32 %v383, %v478
        %v480 = vpop.f32.mrb[0].mxu0
        %481 = vdwg.mxu0
        %483 = vrot.lane.b32.xlu0 %v464, 96
        %v484 = vpop.permute.xlu0 %483
        %vm485 = vcmask 64512
        %v486 = vsel %vm485, %v464, 0
        %v488 = vsel %vm485, %v484, 0
        %490 = vmatprep.subr.mxu0 0.0
        %491 = vmatpush1.xpose.msra.mxu0 %v488
        %492 = vmatprep.subr.mxu0 0.0
        %493 = vmatpush1.xpose.msra.mxu0 0.0
        %494 = vmatprep.subr.mxu0 0.0
        %495 = vmatpush1.xpose.msra.mxu0 0.0
        %496 = vmatprep.subr.mxu0 0.0
        %497 = vmatpush1.xpose.msra.mxu0 0.0
        %498 = vmatprep.subr.mxu0 0.0
        %499 = vmatpush1.xpose.msra.mxu0 0.0
        %500 = vmatprep.subr.mxu0 0.0
        %501 = vmatpush1.xpose.msra.mxu0 0.0
        %502 = vmatprep.subr.mxu0 0.0
        %503 = vmatpush1.xpose.msra.mxu0 0.0
        %504 = vmatprep.subr.mxu0 0.0
        %505 = vmatpush1.xpose.msra.mxu0 0.0
        %506 = vmatprep.subr.mxu0 0.0
        %507 = vmatpush1.xpose.msra.mxu0 0.0
        %508 = vmatprep.subr.mxu0 0.0
        %509 = vmatpush1.xpose.msra.mxu0 0.0
        %510 = vmatprep.subr.mxu0 0.0
        %511 = vmatpush1.xpose.msra.mxu0 0.0
        %512 = vmatprep.subr.mxu0 0.0
        %513 = vmatpush1.xpose.msra.mxu0 0.0
        %514 = vmatprep.subr.mxu0 0.0
        %515 = vmatpush1.xpose.msra.mxu0 0.0
        %516 = vmatprep.subr.mxu0 0.0
        %517 = vmatpush1.xpose.msra.mxu0 0.0
        %518 = vmatprep.subr.mxu0 0.0
        %519 = vmatpush1.xpose.msra.mxu0 0.0
        %520 = vmatprep.subr.mxu0 0.0
        %521 = vmatpush1.xpose.msra.mxu0 0.0
        %522 = vmatprep.subr.mxu0 0.0
        %523 = vmatpush1.xpose.msra.mxu0 0.0
        %524 = vmatprep.subr.mxu0 0.0
        %525 = vmatpush1.xpose.msra.mxu0 0.0
        %526 = vmatprep.subr.mxu0 0.0
        %527 = vmatpush1.xpose.msra.mxu0 0.0
        %528 = vmatprep.subr.mxu0 0.0
        %529 = vmatpush1.xpose.msra.mxu0 0.0
        %530 = vmatprep.subr.mxu0 0.0
        %531 = vmatpush1.xpose.msra.mxu0 0.0
        %532 = vmatprep.subr.mxu0 0.0
        %533 = vmatpush1.xpose.msra.mxu0 0.0
        %534 = vmatprep.subr.mxu0 0.0
        %535 = vmatpush1.xpose.msra.mxu0 0.0
        %536 = vmatprep.subr.mxu0 0.0
        %537 = vmatpush1.xpose.msra.mxu0 0.0
        %538 = vmatprep.subr.mxu0 0.0
        %539 = vmatpush1.xpose.msra.mxu0 0.0
        %540 = vmatprep.subr.mxu0 0.0
        %541 = vmatpush1.xpose.msra.mxu0 0.0
        %542 = vmatprep.subr.mxu0 0.0
        %543 = vmatpush1.xpose.msra.mxu0 0.0
        %544 = vmatprep.subr.mxu0 0.0
        %545 = vmatpush1.xpose.msra.mxu0 0.0
        %546 = vmatprep.subr.mxu0 0.0
        %547 = vmatpush1.xpose.msra.mxu0 0.0
        %548 = vmatprep.subr.mxu0 0.0
        %549 = vmatpush1.xpose.msra.mxu0 0.0
        %550 = vmatprep.subr.mxu0 0.0
        %551 = vmatpush1.xpose.msra.mxu0 0.0
        %552 = vmatprep.subr.mxu0 0.0
        %553 = vmatpush1.xpose.msra.mxu0 0.0
        %554 = vmatprep.mubr.f32.mxu0 0.0
        %555 = vmatmul.mubr.f32.gmra.mrb[0].mxu0 %v486
        %v556 = vpop.f32.mrb[0].mxu0
        %v557 = vadd.f32 0.0, %v556
        %v558 = vpop.f32.mrb[0].mxu0
        %559 = vdwg.mxu0
        %561 = vrot.lane.b32.xlu0 %v469, 96
        %v562 = vpop.permute.xlu0 %561
        %v563 = vsel %vm485, %v469, 0
        %v565 = vsel %vm485, %v562, 0
        %567 = vmatprep.subr.mxu0 0.0
        %568 = vmatpush1.xpose.msra.mxu0 %v565
        %569 = vmatprep.subr.mxu0 0.0
        %570 = vmatpush1.xpose.msra.mxu0 0.0
        %571 = vmatprep.subr.mxu0 0.0
        %572 = vmatpush1.xpose.msra.mxu0 0.0
        %573 = vmatprep.subr.mxu0 0.0
        %574 = vmatpush1.xpose.msra.mxu0 0.0
        %575 = vmatprep.subr.mxu0 0.0
        %576 = vmatpush1.xpose.msra.mxu0 0.0
        %577 = vmatprep.subr.mxu0 0.0
        %578 = vmatpush1.xpose.msra.mxu0 0.0
        %579 = vmatprep.subr.mxu0 0.0
        %580 = vmatpush1.xpose.msra.mxu0 0.0
        %581 = vmatprep.subr.mxu0 0.0
        %582 = vmatpush1.xpose.msra.mxu0 0.0
        %583 = vmatprep.subr.mxu0 0.0
        %584 = vmatpush1.xpose.msra.mxu0 0.0
        %585 = vmatprep.subr.mxu0 0.0
        %586 = vmatpush1.xpose.msra.mxu0 0.0
        %587 = vmatprep.subr.mxu0 0.0
        %588 = vmatpush1.xpose.msra.mxu0 0.0
        %589 = vmatprep.subr.mxu0 0.0
        %590 = vmatpush1.xpose.msra.mxu0 0.0
        %591 = vmatprep.subr.mxu0 0.0
        %592 = vmatpush1.xpose.msra.mxu0 0.0
        %593 = vmatprep.subr.mxu0 0.0
        %594 = vmatpush1.xpose.msra.mxu0 0.0
        %595 = vmatprep.subr.mxu0 0.0
        %596 = vmatpush1.xpose.msra.mxu0 0.0
        %597 = vmatprep.subr.mxu0 0.0
        %598 = vmatpush1.xpose.msra.mxu0 0.0
        %599 = vmatprep.subr.mxu0 0.0
        %600 = vmatpush1.xpose.msra.mxu0 0.0
        %601 = vmatprep.subr.mxu0 0.0
        %602 = vmatpush1.xpose.msra.mxu0 0.0
        %603 = vmatprep.subr.mxu0 0.0
        %604 = vmatpush1.xpose.msra.mxu0 0.0
        %605 = vmatprep.subr.mxu0 0.0
        %606 = vmatpush1.xpose.msra.mxu0 0.0
        %607 = vmatprep.subr.mxu0 0.0
        %608 = vmatpush1.xpose.msra.mxu0 0.0
        %609 = vmatprep.subr.mxu0 0.0
        %610 = vmatpush1.xpose.msra.mxu0 0.0
        %611 = vmatprep.subr.mxu0 0.0
        %612 = vmatpush1.xpose.msra.mxu0 0.0
        %613 = vmatprep.subr.mxu0 0.0
        %614 = vmatpush1.xpose.msra.mxu0 0.0
        %615 = vmatprep.subr.mxu0 0.0
        %616 = vmatpush1.xpose.msra.mxu0 0.0
        %617 = vmatprep.subr.mxu0 0.0
        %618 = vmatpush1.xpose.msra.mxu0 0.0
        %619 = vmatprep.subr.mxu0 0.0
        %620 = vmatpush1.xpose.msra.mxu0 0.0
        %621 = vmatprep.subr.mxu0 0.0
        %622 = vmatpush1.xpose.msra.mxu0 0.0
        %623 = vmatprep.subr.mxu0 0.0
        %624 = vmatpush1.xpose.msra.mxu0 0.0
        %625 = vmatprep.subr.mxu0 0.0
        %626 = vmatpush1.xpose.msra.mxu0 0.0
        %627 = vmatprep.subr.mxu0 0.0
        %628 = vmatpush1.xpose.msra.mxu0 0.0
        %629 = vmatprep.subr.mxu0 0.0
        %630 = vmatpush1.xpose.msra.mxu0 0.0
        %631 = vmatprep.mubr.f32.mxu0 0.0
        %632 = vmatmul.mubr.f32.gmra.mrb[0].mxu0 %v563
        %v633 = vpop.f32.mrb[0].mxu0
        %v634 = vadd.f32 0.0, %v633
        %v635 = vpop.f32.mrb[0].mxu0
        %636 = vdwg.mxu0
        %638 = vrot.lane.b32.xlu0 %v474, 96
        %v639 = vpop.permute.xlu0 %638
        %v640 = vsel %vm485, %v474, 0
        %v642 = vsel %vm485, %v639, 0
        %644 = vmatprep.subr.mxu0 0.0
        %645 = vmatpush1.xpose.msra.mxu0 %v642
        %646 = vmatprep.subr.mxu0 0.0
        %647 = vmatpush1.xpose.msra.mxu0 0.0
        %648 = vmatprep.subr.mxu0 0.0
        %649 = vmatpush1.xpose.msra.mxu0 0.0
        %650 = vmatprep.subr.mxu0 0.0
        %651 = vmatpush1.xpose.msra.mxu0 0.0
        %652 = vmatprep.subr.mxu0 0.0
        %653 = vmatpush1.xpose.msra.mxu0 0.0
        %654 = vmatprep.subr.mxu0 0.0
        %655 = vmatpush1.xpose.msra.mxu0 0.0
        %656 = vmatprep.subr.mxu0 0.0
        %657 = vmatpush1.xpose.msra.mxu0 0.0
        %658 = vmatprep.subr.mxu0 0.0
        %659 = vmatpush1.xpose.msra.mxu0 0.0
        %660 = vmatprep.subr.mxu0 0.0
        %661 = vmatpush1.xpose.msra.mxu0 0.0
        %662 = vmatprep.subr.mxu0 0.0
        %663 = vmatpush1.xpose.msra.mxu0 0.0
        %664 = vmatprep.subr.mxu0 0.0
        %665 = vmatpush1.xpose.msra.mxu0 0.0
        %666 = vmatprep.subr.mxu0 0.0
        %667 = vmatpush1.xpose.msra.mxu0 0.0
        %668 = vmatprep.subr.mxu0 0.0
        %669 = vmatpush1.xpose.msra.mxu0 0.0
        %670 = vmatprep.subr.mxu0 0.0
        %671 = vmatpush1.xpose.msra.mxu0 0.0
        %672 = vmatprep.subr.mxu0 0.0
        %673 = vmatpush1.xpose.msra.mxu0 0.0
        %674 = vmatprep.subr.mxu0 0.0
        %675 = vmatpush1.xpose.msra.mxu0 0.0
        %676 = vmatprep.subr.mxu0 0.0
        %677 = vmatpush1.xpose.msra.mxu0 0.0
        %678 = vmatprep.subr.mxu0 0.0
        %679 = vmatpush1.xpose.msra.mxu0 0.0
        %680 = vmatprep.subr.mxu0 0.0
        %681 = vmatpush1.xpose.msra.mxu0 0.0
        %682 = vmatprep.subr.mxu0 0.0
        %683 = vmatpush1.xpose.msra.mxu0 0.0
        %684 = vmatprep.subr.mxu0 0.0
        %685 = vmatpush1.xpose.msra.mxu0 0.0
        %686 = vmatprep.subr.mxu0 0.0
        %687 = vmatpush1.xpose.msra.mxu0 0.0
        %688 = vmatprep.subr.mxu0 0.0
        %689 = vmatpush1.xpose.msra.mxu0 0.0
        %690 = vmatprep.subr.mxu0 0.0
        %691 = vmatpush1.xpose.msra.mxu0 0.0
        %692 = vmatprep.subr.mxu0 0.0
        %693 = vmatpush1.xpose.msra.mxu0 0.0
        %694 = vmatprep.subr.mxu0 0.0
        %695 = vmatpush1.xpose.msra.mxu0 0.0
        %696 = vmatprep.subr.mxu0 0.0
        %697 = vmatpush1.xpose.msra.mxu0 0.0
        %698 = vmatprep.subr.mxu0 0.0
        %699 = vmatpush1.xpose.msra.mxu0 0.0
        %700 = vmatprep.subr.mxu0 0.0
        %701 = vmatpush1.xpose.msra.mxu0 0.0
        %702 = vmatprep.subr.mxu0 0.0
        %703 = vmatpush1.xpose.msra.mxu0 0.0
        %704 = vmatprep.subr.mxu0 0.0
        %705 = vmatpush1.xpose.msra.mxu0 0.0
        %706 = vmatprep.subr.mxu0 0.0
        %707 = vmatpush1.xpose.msra.mxu0 0.0
        %708 = vmatprep.mubr.f32.mxu0 0.0
        %709 = vmatmul.mubr.f32.gmra.mrb[0].mxu0 %v640
        %v710 = vpop.f32.mrb[0].mxu0
        %v711 = vadd.f32 0.0, %v710
        %v712 = vpop.f32.mrb[0].mxu0
        %713 = vdwg.mxu0
        %715 = vrot.lane.b32.xlu0 %v479, 96
        %v716 = vpop.permute.xlu0 %715
        %v717 = vsel %vm485, %v479, 0
        %v719 = vsel %vm485, %v716, 0
        %721 = vmatprep.subr.mxu0 0.0
        %722 = vmatpush1.xpose.msra.mxu0 %v719
        %723 = vmatprep.subr.mxu0 0.0
        %724 = vmatpush1.xpose.msra.mxu0 0.0
        %725 = vmatprep.subr.mxu0 0.0
        %726 = vmatpush1.xpose.msra.mxu0 0.0
        %727 = vmatprep.subr.mxu0 0.0
        %728 = vmatpush1.xpose.msra.mxu0 0.0
        %729 = vmatprep.subr.mxu0 0.0
        %730 = vmatpush1.xpose.msra.mxu0 0.0
        %731 = vmatprep.subr.mxu0 0.0
        %732 = vmatpush1.xpose.msra.mxu0 0.0
        %733 = vmatprep.subr.mxu0 0.0
        %734 = vmatpush1.xpose.msra.mxu0 0.0
        %735 = vmatprep.subr.mxu0 0.0
        %736 = vmatpush1.xpose.msra.mxu0 0.0
        %737 = vmatprep.subr.mxu0 0.0
        %738 = vmatpush1.xpose.msra.mxu0 0.0
        %739 = vmatprep.subr.mxu0 0.0
        %740 = vmatpush1.xpose.msra.mxu0 0.0
        %741 = vmatprep.subr.mxu0 0.0
        %742 = vmatpush1.xpose.msra.mxu0 0.0
        %743 = vmatprep.subr.mxu0 0.0
        %744 = vmatpush1.xpose.msra.mxu0 0.0
        %745 = vmatprep.subr.mxu0 0.0
        %746 = vmatpush1.xpose.msra.mxu0 0.0
        %747 = vmatprep.subr.mxu0 0.0
        %748 = vmatpush1.xpose.msra.mxu0 0.0
        %749 = vmatprep.subr.mxu0 0.0
        %750 = vmatpush1.xpose.msra.mxu0 0.0
        %751 = vmatprep.subr.mxu0 0.0
        %752 = vmatpush1.xpose.msra.mxu0 0.0
        %753 = vmatprep.subr.mxu0 0.0
        %754 = vmatpush1.xpose.msra.mxu0 0.0
        %755 = vmatprep.subr.mxu0 0.0
        %756 = vmatpush1.xpose.msra.mxu0 0.0
        %757 = vmatprep.subr.mxu0 0.0
        %758 = vmatpush1.xpose.msra.mxu0 0.0
        %759 = vmatprep.subr.mxu0 0.0
        %760 = vmatpush1.xpose.msra.mxu0 0.0
        %761 = vmatprep.subr.mxu0 0.0
        %762 = vmatpush1.xpose.msra.mxu0 0.0
        %763 = vmatprep.subr.mxu0 0.0
        %764 = vmatpush1.xpose.msra.mxu0 0.0
        %765 = vmatprep.subr.mxu0 0.0
        %766 = vmatpush1.xpose.msra.mxu0 0.0
        %767 = vmatprep.subr.mxu0 0.0
        %768 = vmatpush1.xpose.msra.mxu0 0.0
        %769 = vmatprep.subr.mxu0 0.0
        %770 = vmatpush1.xpose.msra.mxu0 0.0
        %771 = vmatprep.subr.mxu0 0.0
        %772 = vmatpush1.xpose.msra.mxu0 0.0
        %773 = vmatprep.subr.mxu0 0.0
        %774 = vmatpush1.xpose.msra.mxu0 0.0
        %775 = vmatprep.subr.mxu0 0.0
        %776 = vmatpush1.xpose.msra.mxu0 0.0
        %777 = vmatprep.subr.mxu0 0.0
        %778 = vmatpush1.xpose.msra.mxu0 0.0
        %779 = vmatprep.subr.mxu0 0.0
        %780 = vmatpush1.xpose.msra.mxu0 0.0
        %781 = vmatprep.subr.mxu0 0.0
        %782 = vmatpush1.xpose.msra.mxu0 0.0
        %783 = vmatprep.subr.mxu0 0.0
        %784 = vmatpush1.xpose.msra.mxu0 0.0
        %785 = vmatprep.mubr.f32.mxu0 0.0
        %786 = vmatmul.mubr.f32.gmra.mrb[0].mxu0 %v717
        %v787 = vpop.f32.mrb[0].mxu0
        %v788 = vadd.f32 0.0, %v787
        %v789 = vpop.f32.mrb[0].mxu0
        %790 = vdwg.mxu0
        %v791 = vsel %vm485, %v557, -inf
        %792 = vmax.xlane.f32.xlu0 %v791
        %v793 = vpop.xlane.xlu0 %792
        %v794 = vsel %vm485, %v634, -inf
        %795 = vmax.xlane.f32.xlu0 %v794
        %v796 = vpop.xlane.xlu0 %795
        %v797 = vsel %vm485, %v711, -inf
        %798 = vmax.xlane.f32.xlu0 %v797
        %v799 = vpop.xlane.xlu0 %798
        %v800 = vsel %vm485, %v788, -inf
        %801 = vmax.xlane.f32.xlu0 %v800
        %v802 = vpop.xlane.xlu0 %801
        %v803 = vsub.f32 %v557, %v793
        %v804 = vsub.f32 %v634, %v796
        %v805 = vsub.f32 %v711, %v799
        %v806 = vsub.f32 %v788, %v802
        %v807 = vmul.f32 %v803, 1.442695
        %v808 = vpow.pop %v807
        %v809 = vmul.f32 %v804, 1.442695
        %v810 = vpow.pop %v809
        %v811 = vmul.f32 %v805, 1.442695
        %v812 = vpow.pop %v811
        %v813 = vmul.f32 %v806, 1.442695
        %v814 = vpow.pop %v813
        %v815 = vsel %vm485, %v808, 0.0
        %816 = vadd.xlane.f32.xlu0 %v815
        %v817 = vpop.xlane.xlu0 %816
        %v818 = vsel %vm485, %v810, 0.0
        %819 = vadd.xlane.f32.xlu0 %v818
        %v820 = vpop.xlane.xlu0 %819
        %v821 = vsel %vm485, %v812, 0.0
        %822 = vadd.xlane.f32.xlu0 %v821
        %v823 = vpop.xlane.xlu0 %822
        %v824 = vsel %vm485, %v814, 0.0
        %825 = vadd.xlane.f32.xlu0 %v824
        %v826 = vpop.xlane.xlu0 %825
        %v827 = vrcp.pop %v817
        %v828 = vrcp.pop %v820
        %v829 = vrcp.pop %v823
        %v830 = vrcp.pop %v826
        %v831 = vmul.f32 %v808, %v827
        %v832 = vmul.f32 %v810, %v828
        %v833 = vmul.f32 %v812, %v829
        %v834 = vmul.f32 %v814, %v830
        %835 = vrot.lane.b32.xlu0 %v464, 64
        %v836 = vpop.permute.xlu0 %835
        %v839 = vsel %vm485, %v831, 0
        %841 = vmatprep.subr.mxu0 0.0
        %842 = vmatpush1.msra.mxu0 %v836
        %843 = vmatprep.subr.mxu0 0.0
        %844 = vmatpush1.msra.mxu0 0.0
        %845 = vmatprep.subr.mxu0 0.0
        %846 = vmatpush1.msra.mxu0 0.0
        %847 = vmatprep.subr.mxu0 0.0
        %848 = vmatpush1.msra.mxu0 0.0
        %849 = vmatprep.subr.mxu0 0.0
        %850 = vmatpush1.msra.mxu0 0.0
        %851 = vmatprep.subr.mxu0 0.0
        %852 = vmatpush1.msra.mxu0 0.0
        %853 = vmatprep.subr.mxu0 0.0
        %854 = vmatpush1.msra.mxu0 0.0
        %855 = vmatprep.subr.mxu0 0.0
        %856 = vmatpush1.msra.mxu0 0.0
        %857 = vmatprep.subr.mxu0 0.0
        %858 = vmatpush1.msra.mxu0 0.0
        %859 = vmatprep.subr.mxu0 0.0
        %860 = vmatpush1.msra.mxu0 0.0
        %861 = vmatprep.subr.mxu0 0.0
        %862 = vmatpush1.msra.mxu0 0.0
        %863 = vmatprep.subr.mxu0 0.0
        %864 = vmatpush1.msra.mxu0 0.0
        %865 = vmatprep.subr.mxu0 0.0
        %866 = vmatpush1.msra.mxu0 0.0
        %867 = vmatprep.subr.mxu0 0.0
        %868 = vmatpush1.msra.mxu0 0.0
        %869 = vmatprep.subr.mxu0 0.0
        %870 = vmatpush1.msra.mxu0 0.0
        %871 = vmatprep.subr.mxu0 0.0
        %872 = vmatpush1.msra.mxu0 0.0
        %873 = vmatprep.subr.mxu0 0.0
        %874 = vmatpush1.msra.mxu0 0.0
        %875 = vmatprep.subr.mxu0 0.0
        %876 = vmatpush1.msra.mxu0 0.0
        %877 = vmatprep.subr.mxu0 0.0
        %878 = vmatpush1.msra.mxu0 0.0
        %879 = vmatprep.subr.mxu0 0.0
        %880 = vmatpush1.msra.mxu0 0.0
        %881 = vmatprep.subr.mxu0 0.0
        %882 = vmatpush1.msra.mxu0 0.0
        %883 = vmatprep.subr.mxu0 0.0
        %884 = vmatpush1.msra.mxu0 0.0
        %885 = vmatprep.subr.mxu0 0.0
        %886 = vmatpush1.msra.mxu0 0.0
        %887 = vmatprep.subr.mxu0 0.0
        %888 = vmatpush1.msra.mxu0 0.0
        %889 = vmatprep.subr.mxu0 0.0
        %890 = vmatpush1.msra.mxu0 0.0
        %891 = vmatprep.subr.mxu0 0.0
        %892 = vmatpush1.msra.mxu0 0.0
        %893 = vmatprep.subr.mxu0 0.0
        %894 = vmatpush1.msra.mxu0 0.0
        %895 = vmatprep.subr.mxu0 0.0
        %896 = vmatpush1.msra.mxu0 0.0
        %897 = vmatprep.subr.mxu0 0.0
        %898 = vmatpush1.msra.mxu0 0.0
        %899 = vmatprep.subr.mxu0 0.0
        %900 = vmatpush1.msra.mxu0 0.0
        %901 = vmatprep.subr.mxu0 0.0
        %902 = vmatpush1.msra.mxu0 0.0
        %903 = vmatprep.subr.mxu0 0.0
        %904 = vmatpush1.msra.mxu0 0.0
        %905 = vmatprep.mubr.f32.mxu0 0.0
        %906 = vmatmul.mubr.f32.gmra.mrb[0].mxu0 %v839
        %v907 = vpop.f32.mrb[0].mxu0
        %v908 = vadd.f32 0.0, %v907
        %v909 = vpop.f32.mrb[0].mxu0
        %910 = vdwg.mxu0
        %911 = vrot.lane.b32.xlu0 %v469, 64
        %v912 = vpop.permute.xlu0 %911
        %v915 = vsel %vm485, %v832, 0
        %917 = vmatprep.subr.mxu0 0.0
        %918 = vmatpush1.msra.mxu0 %v912
        %919 = vmatprep.subr.mxu0 0.0
        %920 = vmatpush1.msra.mxu0 0.0
        %921 = vmatprep.subr.mxu0 0.0
        %922 = vmatpush1.msra.mxu0 0.0
        %923 = vmatprep.subr.mxu0 0.0
        %924 = vmatpush1.msra.mxu0 0.0
        %925 = vmatprep.subr.mxu0 0.0
        %926 = vmatpush1.msra.mxu0 0.0
        %927 = vmatprep.subr.mxu0 0.0
        %928 = vmatpush1.msra.mxu0 0.0
        %929 = vmatprep.subr.mxu0 0.0
        %930 = vmatpush1.msra.mxu0 0.0
        %931 = vmatprep.subr.mxu0 0.0
        %932 = vmatpush1.msra.mxu0 0.0
        %933 = vmatprep.subr.mxu0 0.0
        %934 = vmatpush1.msra.mxu0 0.0
        %935 = vmatprep.subr.mxu0 0.0
        %936 = vmatpush1.msra.mxu0 0.0
        %937 = vmatprep.subr.mxu0 0.0
        %938 = vmatpush1.msra.mxu0 0.0
        %939 = vmatprep.subr.mxu0 0.0
        %940 = vmatpush1.msra.mxu0 0.0
        %941 = vmatprep.subr.mxu0 0.0
        %942 = vmatpush1.msra.mxu0 0.0
        %943 = vmatprep.subr.mxu0 0.0
        %944 = vmatpush1.msra.mxu0 0.0
        %945 = vmatprep.subr.mxu0 0.0
        %946 = vmatpush1.msra.mxu0 0.0
        %947 = vmatprep.subr.mxu0 0.0
        %948 = vmatpush1.msra.mxu0 0.0
        %949 = vmatprep.subr.mxu0 0.0
        %950 = vmatpush1.msra.mxu0 0.0
        %951 = vmatprep.subr.mxu0 0.0
        %952 = vmatpush1.msra.mxu0 0.0
        %953 = vmatprep.subr.mxu0 0.0
        %954 = vmatpush1.msra.mxu0 0.0
        %955 = vmatprep.subr.mxu0 0.0
        %956 = vmatpush1.msra.mxu0 0.0
        %957 = vmatprep.subr.mxu0 0.0
        %958 = vmatpush1.msra.mxu0 0.0
        %959 = vmatprep.subr.mxu0 0.0
        %960 = vmatpush1.msra.mxu0 0.0
        %961 = vmatprep.subr.mxu0 0.0
        %962 = vmatpush1.msra.mxu0 0.0
        %963 = vmatprep.subr.mxu0 0.0
        %964 = vmatpush1.msra.mxu0 0.0
        %965 = vmatprep.subr.mxu0 0.0
        %966 = vmatpush1.msra.mxu0 0.0
        %967 = vmatprep.subr.mxu0 0.0
        %968 = vmatpush1.msra.mxu0 0.0
        %969 = vmatprep.subr.mxu0 0.0
        %970 = vmatpush1.msra.mxu0 0.0
        %971 = vmatprep.subr.mxu0 0.0
        %972 = vmatpush1.msra.mxu0 0.0
        %973 = vmatprep.subr.mxu0 0.0
        %974 = vmatpush1.msra.mxu0 0.0
        %975 = vmatprep.subr.mxu0 0.0
        %976 = vmatpush1.msra.mxu0 0.0
        %977 = vmatprep.subr.mxu0 0.0
        %978 = vmatpush1.msra.mxu0 0.0
        %979 = vmatprep.subr.mxu0 0.0
        %980 = vmatpush1.msra.mxu0 0.0
        %981 = vmatprep.mubr.f32.mxu0 0.0
        %982 = vmatmul.mubr.f32.gmra.mrb[0].mxu0 %v915
        %v983 = vpop.f32.mrb[0].mxu0
        %v984 = vadd.f32 0.0, %v983
        %v985 = vpop.f32.mrb[0].mxu0
        %986 = vdwg.mxu0
        %987 = vrot.lane.b32.xlu0 %v474, 64
        %v988 = vpop.permute.xlu0 %987
        %v991 = vsel %vm485, %v833, 0
        %993 = vmatprep.subr.mxu0 0.0
        %994 = vmatpush1.msra.mxu0 %v988
        %995 = vmatprep.subr.mxu0 0.0
        %996 = vmatpush1.msra.mxu0 0.0
        %997 = vmatprep.subr.mxu0 0.0
        %998 = vmatpush1.msra.mxu0 0.0
        %999 = vmatprep.subr.mxu0 0.0
        %1000 = vmatpush1.msra.mxu0 0.0
        %1001 = vmatprep.subr.mxu0 0.0
        %1002 = vmatpush1.msra.mxu0 0.0
        %1003 = vmatprep.subr.mxu0 0.0
        %1004 = vmatpush1.msra.mxu0 0.0
        %1005 = vmatprep.subr.mxu0 0.0
        %1006 = vmatpush1.msra.mxu0 0.0
        %1007 = vmatprep.subr.mxu0 0.0
        %1008 = vmatpush1.msra.mxu0 0.0
        %1009 = vmatprep.subr.mxu0 0.0
        %1010 = vmatpush1.msra.mxu0 0.0
        %1011 = vmatprep.subr.mxu0 0.0
        %1012 = vmatpush1.msra.mxu0 0.0
        %1013 = vmatprep.subr.mxu0 0.0
        %1014 = vmatpush1.msra.mxu0 0.0
        %1015 = vmatprep.subr.mxu0 0.0
        %1016 = vmatpush1.msra.mxu0 0.0
        %1017 = vmatprep.subr.mxu0 0.0
        %1018 = vmatpush1.msra.mxu0 0.0
        %1019 = vmatprep.subr.mxu0 0.0
        %1020 = vmatpush1.msra.mxu0 0.0
        %1021 = vmatprep.subr.mxu0 0.0
        %1022 = vmatpush1.msra.mxu0 0.0
        %1023 = vmatprep.subr.mxu0 0.0
        %1024 = vmatpush1.msra.mxu0 0.0
        %1025 = vmatprep.subr.mxu0 0.0
        %1026 = vmatpush1.msra.mxu0 0.0
        %1027 = vmatprep.subr.mxu0 0.0
        %1028 = vmatpush1.msra.mxu0 0.0
        %1029 = vmatprep.subr.mxu0 0.0
        %1030 = vmatpush1.msra.mxu0 0.0
        %1031 = vmatprep.subr.mxu0 0.0
        %1032 = vmatpush1.msra.mxu0 0.0
        %1033 = vmatprep.subr.mxu0 0.0
        %1034 = vmatpush1.msra.mxu0 0.0
        %1035 = vmatprep.subr.mxu0 0.0
        %1036 = vmatpush1.msra.mxu0 0.0
        %1037 = vmatprep.subr.mxu0 0.0
        %1038 = vmatpush1.msra.mxu0 0.0
        %1039 = vmatprep.subr.mxu0 0.0
        %1040 = vmatpush1.msra.mxu0 0.0
        %1041 = vmatprep.subr.mxu0 0.0
        %1042 = vmatpush1.msra.mxu0 0.0
        %1043 = vmatprep.subr.mxu0 0.0
        %1044 = vmatpush1.msra.mxu0 0.0
        %1045 = vmatprep.subr.mxu0 0.0
        %1046 = vmatpush1.msra.mxu0 0.0
        %1047 = vmatprep.subr.mxu0 0.0
        %1048 = vmatpush1.msra.mxu0 0.0
        %1049 = vmatprep.subr.mxu0 0.0
        %1050 = vmatpush1.msra.mxu0 0.0
        %1051 = vmatprep.subr.mxu0 0.0
        %1052 = vmatpush1.msra.mxu0 0.0
        %1053 = vmatprep.subr.mxu0 0.0
        %1054 = vmatpush1.msra.mxu0 0.0
        %1055 = vmatprep.subr.mxu0 0.0
        %1056 = vmatpush1.msra.mxu0 0.0
        %1057 = vmatprep.mubr.f32.mxu0 0.0
        %1058 = vmatmul.mubr.f32.gmra.mrb[0].mxu0 %v991
        %v1059 = vpop.f32.mrb[0].mxu0
        %v1060 = vadd.f32 0.0, %v1059
        %v1061 = vpop.f32.mrb[0].mxu0
        %1062 = vdwg.mxu0
        %1063 = vrot.lane.b32.xlu0 %v479, 64
        %v1064 = vpop.permute.xlu0 %1063
        %v1067 = vsel %vm485, %v834, 0
        %1069 = vmatprep.subr.mxu0 0.0
        %1070 = vmatpush1.msra.mxu0 %v1064
        %1071 = vmatprep.subr.mxu0 0.0
        %1072 = vmatpush1.msra.mxu0 0.0
        %1073 = vmatprep.subr.mxu0 0.0
        %1074 = vmatpush1.msra.mxu0 0.0
        %1075 = vmatprep.subr.mxu0 0.0
        %1076 = vmatpush1.msra.mxu0 0.0
        %1077 = vmatprep.subr.mxu0 0.0
        %1078 = vmatpush1.msra.mxu0 0.0
        %1079 = vmatprep.subr.mxu0 0.0
        %1080 = vmatpush1.msra.mxu0 0.0
        %1081 = vmatprep.subr.mxu0 0.0
        %1082 = vmatpush1.msra.mxu0 0.0
        %1083 = vmatprep.subr.mxu0 0.0
        %1084 = vmatpush1.msra.mxu0 0.0
        %1085 = vmatprep.subr.mxu0 0.0
        %1086 = vmatpush1.msra.mxu0 0.0
        %1087 = vmatprep.subr.mxu0 0.0
        %1088 = vmatpush1.msra.mxu0 0.0
        %1089 = vmatprep.subr.mxu0 0.0
        %1090 = vmatpush1.msra.mxu0 0.0
        %1091 = vmatprep.subr.mxu0 0.0
        %1092 = vmatpush1.msra.mxu0 0.0
        %1093 = vmatprep.subr.mxu0 0.0
        %1094 = vmatpush1.msra.mxu0 0.0
        %1095 = vmatprep.subr.mxu0 0.0
        %1096 = vmatpush1.msra.mxu0 0.0
        %1097 = vmatprep.subr.mxu0 0.0
        %1098 = vmatpush1.msra.mxu0 0.0
        %1099 = vmatprep.subr.mxu0 0.0
        %1100 = vmatpush1.msra.mxu0 0.0
        %1101 = vmatprep.subr.mxu0 0.0
        %1102 = vmatpush1.msra.mxu0 0.0
        %1103 = vmatprep.subr.mxu0 0.0
        %1104 = vmatpush1.msra.mxu0 0.0
        %1105 = vmatprep.subr.mxu0 0.0
        %1106 = vmatpush1.msra.mxu0 0.0
        %1107 = vmatprep.subr.mxu0 0.0
        %1108 = vmatpush1.msra.mxu0 0.0
        %1109 = vmatprep.subr.mxu0 0.0
        %1110 = vmatpush1.msra.mxu0 0.0
        %1111 = vmatprep.subr.mxu0 0.0
        %1112 = vmatpush1.msra.mxu0 0.0
        %1113 = vmatprep.subr.mxu0 0.0
        %1114 = vmatpush1.msra.mxu0 0.0
        %1115 = vmatprep.subr.mxu0 0.0
        %1116 = vmatpush1.msra.mxu0 0.0
        %1117 = vmatprep.subr.mxu0 0.0
        %1118 = vmatpush1.msra.mxu0 0.0
        %1119 = vmatprep.subr.mxu0 0.0
        %1120 = vmatpush1.msra.mxu0 0.0
        %1121 = vmatprep.subr.mxu0 0.0
        %1122 = vmatpush1.msra.mxu0 0.0
        %1123 = vmatprep.subr.mxu0 0.0
        %1124 = vmatpush1.msra.mxu0 0.0
        %1125 = vmatprep.subr.mxu0 0.0
        %1126 = vmatpush1.msra.mxu0 0.0
        %1127 = vmatprep.subr.mxu0 0.0
        %1128 = vmatpush1.msra.mxu0 0.0
        %1129 = vmatprep.subr.mxu0 0.0
        %1130 = vmatpush1.msra.mxu0 0.0
        %1131 = vmatprep.subr.mxu0 0.0
        %1132 = vmatpush1.msra.mxu0 0.0
        %1133 = vmatprep.mubr.f32.mxu0 0.0
        %1134 = vmatmul.mubr.f32.gmra.mrb[0].mxu0 %v1067
        %v1135 = vpop.f32.mrb[0].mxu0
        %v1136 = vadd.f32 0.0, %v1135
        %v1137 = vpop.f32.mrb[0].mxu0
        %1138 = vdwg.mxu0
        %1139 = vst.msk [vmem:[#allocation2] sm:$0xff] %vm485, %v908
        %1140 = vst.msk [vmem:[#allocation2 + $0x8] sm:$0xff] %vm485, %v984
        %1141 = vst.msk [vmem:[#allocation2 + $0x10] sm:$0xff] %vm485, %v1060
        %1142 = vst.msk [vmem:[#allocation2 + $0x18] sm:$0xff] %vm485, %v1136
        %1143 = vrot.lane.b32.xlu0 %v464, 120
        %v1144 = vpop.permute.xlu0 %1143
        %1145 = vrot.lane.b32.xlu0 %v464, 88
        %v1146 = vpop.permute.xlu0 %1145
        %v1147 = vsel %vm485, %v1144, 0
        %v1149 = vsel %vm485, %v1146, 0
        %1151 = vmatprep.subr.mxu0 0.0
        %1152 = vmatpush1.xpose.msra.mxu0 %v1149
        %1153 = vmatprep.subr.mxu0 0.0
        %1154 = vmatpush1.xpose.msra.mxu0 0.0
        %1155 = vmatprep.subr.mxu0 0.0
        %1156 = vmatpush1.xpose.msra.mxu0 0.0
        %1157 = vmatprep.subr.mxu0 0.0
        %1158 = vmatpush1.xpose.msra.mxu0 0.0
        %1159 = vmatprep.subr.mxu0 0.0
        %1160 = vmatpush1.xpose.msra.mxu0 0.0
        %1161 = vmatprep.subr.mxu0 0.0
        %1162 = vmatpush1.xpose.msra.mxu0 0.0
        %1163 = vmatprep.subr.mxu0 0.0
        %1164 = vmatpush1.xpose.msra.mxu0 0.0
        %1165 = vmatprep.subr.mxu0 0.0
        %1166 = vmatpush1.xpose.msra.mxu0 0.0
        %1167 = vmatprep.subr.mxu0 0.0
        %1168 = vmatpush1.xpose.msra.mxu0 0.0
        %1169 = vmatprep.subr.mxu0 0.0
        %1170 = vmatpush1.xpose.msra.mxu0 0.0
        %1171 = vmatprep.subr.mxu0 0.0
        %1172 = vmatpush1.xpose.msra.mxu0 0.0
        %1173 = vmatprep.subr.mxu0 0.0
        %1174 = vmatpush1.xpose.msra.mxu0 0.0
        %1175 = vmatprep.subr.mxu0 0.0
        %1176 = vmatpush1.xpose.msra.mxu0 0.0
        %1177 = vmatprep.subr.mxu0 0.0
        %1178 = vmatpush1.xpose.msra.mxu0 0.0
        %1179 = vmatprep.subr.mxu0 0.0
        %1180 = vmatpush1.xpose.msra.mxu0 0.0
        %1181 = vmatprep.subr.mxu0 0.0
        %1182 = vmatpush1.xpose.msra.mxu0 0.0
        %1183 = vmatprep.subr.mxu0 0.0
        %1184 = vmatpush1.xpose.msra.mxu0 0.0
        %1185 = vmatprep.subr.mxu0 0.0
        %1186 = vmatpush1.xpose.msra.mxu0 0.0
        %1187 = vmatprep.subr.mxu0 0.0
        %1188 = vmatpush1.xpose.msra.mxu0 0.0
        %1189 = vmatprep.subr.mxu0 0.0
        %1190 = vmatpush1.xpose.msra.mxu0 0.0
        %1191 = vmatprep.subr.mxu0 0.0
        %1192 = vmatpush1.xpose.msra.mxu0 0.0
        %1193 = vmatprep.subr.mxu0 0.0
        %1194 = vmatpush1.xpose.msra.mxu0 0.0
        %1195 = vmatprep.subr.mxu0 0.0
        %1196 = vmatpush1.xpose.msra.mxu0 0.0
        %1197 = vmatprep.subr.mxu0 0.0
        %1198 = vmatpush1.xpose.msra.mxu0 0.0
        %1199 = vmatprep.subr.mxu0 0.0
        %1200 = vmatpush1.xpose.msra.mxu0 0.0
        %1201 = vmatprep.subr.mxu0 0.0
        %1202 = vmatpush1.xpose.msra.mxu0 0.0
        %1203 = vmatprep.subr.mxu0 0.0
        %1204 = vmatpush1.xpose.msra.mxu0 0.0
        %1205 = vmatprep.subr.mxu0 0.0
        %1206 = vmatpush1.xpose.msra.mxu0 0.0
        %1207 = vmatprep.subr.mxu0 0.0
        %1208 = vmatpush1.xpose.msra.mxu0 0.0
        %1209 = vmatprep.subr.mxu0 0.0
        %1210 = vmatpush1.xpose.msra.mxu0 0.0
        %1211 = vmatprep.subr.mxu0 0.0
        %1212 = vmatpush1.xpose.msra.mxu0 0.0
        %1213 = vmatprep.subr.mxu0 0.0
        %1214 = vmatpush1.xpose.msra.mxu0 0.0
        %1215 = vmatprep.mubr.f32.mxu0 0.0
        %1216 = vmatmul.mubr.f32.gmra.mrb[0].mxu0 %v1147
        %v1217 = vpop.f32.mrb[0].mxu0
        %v1218 = vadd.f32 0.0, %v1217
        %v1219 = vpop.f32.mrb[0].mxu0
        %1220 = vdwg.mxu0
        %1221 = vrot.lane.b32.xlu0 %v469, 120
        %v1222 = vpop.permute.xlu0 %1221
        %1223 = vrot.lane.b32.xlu0 %v469, 88
        %v1224 = vpop.permute.xlu0 %1223
        %v1225 = vsel %vm485, %v1222, 0
        %v1227 = vsel %vm485, %v1224, 0
        %1229 = vmatprep.subr.mxu0 0.0
        %1230 = vmatpush1.xpose.msra.mxu0 %v1227
        %1231 = vmatprep.subr.mxu0 0.0
        %1232 = vmatpush1.xpose.msra.mxu0 0.0
        %1233 = vmatprep.subr.mxu0 0.0
        %1234 = vmatpush1.xpose.msra.mxu0 0.0
        %1235 = vmatprep.subr.mxu0 0.0
        %1236 = vmatpush1.xpose.msra.mxu0 0.0
        %1237 = vmatprep.subr.mxu0 0.0
        %1238 = vmatpush1.xpose.msra.mxu0 0.0
        %1239 = vmatprep.subr.mxu0 0.0
        %1240 = vmatpush1.xpose.msra.mxu0 0.0
        %1241 = vmatprep.subr.mxu0 0.0
        %1242 = vmatpush1.xpose.msra.mxu0 0.0
        %1243 = vmatprep.subr.mxu0 0.0
        %1244 = vmatpush1.xpose.msra.mxu0 0.0
        %1245 = vmatprep.subr.mxu0 0.0
        %1246 = vmatpush1.xpose.msra.mxu0 0.0
        %1247 = vmatprep.subr.mxu0 0.0
        %1248 = vmatpush1.xpose.msra.mxu0 0.0
        %1249 = vmatprep.subr.mxu0 0.0
        %1250 = vmatpush1.xpose.msra.mxu0 0.0
        %1251 = vmatprep.subr.mxu0 0.0
        %1252 = vmatpush1.xpose.msra.mxu0 0.0
        %1253 = vmatprep.subr.mxu0 0.0
        %1254 = vmatpush1.xpose.msra.mxu0 0.0
        %1255 = vmatprep.subr.mxu0 0.0
        %1256 = vmatpush1.xpose.msra.mxu0 0.0
        %1257 = vmatprep.subr.mxu0 0.0
        %1258 = vmatpush1.xpose.msra.mxu0 0.0
        %1259 = vmatprep.subr.mxu0 0.0
        %1260 = vmatpush1.xpose.msra.mxu0 0.0
        %1261 = vmatprep.subr.mxu0 0.0
        %1262 = vmatpush1.xpose.msra.mxu0 0.0
        %1263 = vmatprep.subr.mxu0 0.0
        %1264 = vmatpush1.xpose.msra.mxu0 0.0
        %1265 = vmatprep.subr.mxu0 0.0
        %1266 = vmatpush1.xpose.msra.mxu0 0.0
        %1267 = vmatprep.subr.mxu0 0.0
        %1268 = vmatpush1.xpose.msra.mxu0 0.0
        %1269 = vmatprep.subr.mxu0 0.0
        %1270 = vmatpush1.xpose.msra.mxu0 0.0
        %1271 = vmatprep.subr.mxu0 0.0
        %1272 = vmatpush1.xpose.msra.mxu0 0.0
        %1273 = vmatprep.subr.mxu0 0.0
        %1274 = vmatpush1.xpose.msra.mxu0 0.0
        %1275 = vmatprep.subr.mxu0 0.0
        %1276 = vmatpush1.xpose.msra.mxu0 0.0
        %1277 = vmatprep.subr.mxu0 0.0
        %1278 = vmatpush1.xpose.msra.mxu0 0.0
        %1279 = vmatprep.subr.mxu0 0.0
        %1280 = vmatpush1.xpose.msra.mxu0 0.0
        %1281 = vmatprep.subr.mxu0 0.0
        %1282 = vmatpush1.xpose.msra.mxu0 0.0
        %1283 = vmatprep.subr.mxu0 0.0
        %1284 = vmatpush1.xpose.msra.mxu0 0.0
        %1285 = vmatprep.subr.mxu0 0.0
        %1286 = vmatpush1.xpose.msra.mxu0 0.0
        %1287 = vmatprep.subr.mxu0 0.0
        %1288 = vmatpush1.xpose.msra.mxu0 0.0
        %1289 = vmatprep.subr.mxu0 0.0
        %1290 = vmatpush1.xpose.msra.mxu0 0.0
        %1291 = vmatprep.subr.mxu0 0.0
        %1292 = vmatpush1.xpose.msra.mxu0 0.0
        %1293 = vmatprep.mubr.f32.mxu0 0.0
        %1294 = vmatmul.mubr.f32.gmra.mrb[0].mxu0 %v1225
        %v1295 = vpop.f32.mrb[0].mxu0
        %v1296 = vadd.f32 0.0, %v1295
        %v1297 = vpop.f32.mrb[0].mxu0
        %1298 = vdwg.mxu0
        %1299 = vrot.lane.b32.xlu0 %v474, 120
        %v1300 = vpop.permute.xlu0 %1299
        %1301 = vrot.lane.b32.xlu0 %v474, 88
        %v1302 = vpop.permute.xlu0 %1301
        %v1303 = vsel %vm485, %v1300, 0
        %v1305 = vsel %vm485, %v1302, 0
        %1307 = vmatprep.subr.mxu0 0.0
        %1308 = vmatpush1.xpose.msra.mxu0 %v1305
        %1309 = vmatprep.subr.mxu0 0.0
        %1310 = vmatpush1.xpose.msra.mxu0 0.0
        %1311 = vmatprep.subr.mxu0 0.0
        %1312 = vmatpush1.xpose.msra.mxu0 0.0
        %1313 = vmatprep.subr.mxu0 0.0
        %1314 = vmatpush1.xpose.msra.mxu0 0.0
        %1315 = vmatprep.subr.mxu0 0.0
        %1316 = vmatpush1.xpose.msra.mxu0 0.0
        %1317 = vmatprep.subr.mxu0 0.0
        %1318 = vmatpush1.xpose.msra.mxu0 0.0
        %1319 = vmatprep.subr.mxu0 0.0
        %1320 = vmatpush1.xpose.msra.mxu0 0.0
        %1321 = vmatprep.subr.mxu0 0.0
        %1322 = vmatpush1.xpose.msra.mxu0 0.0
        %1323 = vmatprep.subr.mxu0 0.0
        %1324 = vmatpush1.xpose.msra.mxu0 0.0
        %1325 = vmatprep.subr.mxu0 0.0
        %1326 = vmatpush1.xpose.msra.mxu0 0.0
        %1327 = vmatprep.subr.mxu0 0.0
        %1328 = vmatpush1.xpose.msra.mxu0 0.0
        %1329 = vmatprep.subr.mxu0 0.0
        %1330 = vmatpush1.xpose.msra.mxu0 0.0
        %1331 = vmatprep.subr.mxu0 0.0
        %1332 = vmatpush1.xpose.msra.mxu0 0.0
        %1333 = vmatprep.subr.mxu0 0.0
        %1334 = vmatpush1.xpose.msra.mxu0 0.0
        %1335 = vmatprep.subr.mxu0 0.0
        %1336 = vmatpush1.xpose.msra.mxu0 0.0
        %1337 = vmatprep.subr.mxu0 0.0
        %1338 = vmatpush1.xpose.msra.mxu0 0.0
        %1339 = vmatprep.subr.mxu0 0.0
        %1340 = vmatpush1.xpose.msra.mxu0 0.0
        %1341 = vmatprep.subr.mxu0 0.0
        %1342 = vmatpush1.xpose.msra.mxu0 0.0
        %1343 = vmatprep.subr.mxu0 0.0
        %1344 = vmatpush1.xpose.msra.mxu0 0.0
        %1345 = vmatprep.subr.mxu0 0.0
        %1346 = vmatpush1.xpose.msra.mxu0 0.0
        %1347 = vmatprep.subr.mxu0 0.0
        %1348 = vmatpush1.xpose.msra.mxu0 0.0
        %1349 = vmatprep.subr.mxu0 0.0
        %1350 = vmatpush1.xpose.msra.mxu0 0.0
        %1351 = vmatprep.subr.mxu0 0.0
        %1352 = vmatpush1.xpose.msra.mxu0 0.0
        %1353 = vmatprep.subr.mxu0 0.0
        %1354 = vmatpush1.xpose.msra.mxu0 0.0
        %1355 = vmatprep.subr.mxu0 0.0
        %1356 = vmatpush1.xpose.msra.mxu0 0.0
        %1357 = vmatprep.subr.mxu0 0.0
        %1358 = vmatpush1.xpose.msra.mxu0 0.0
        %1359 = vmatprep.subr.mxu0 0.0
        %1360 = vmatpush1.xpose.msra.mxu0 0.0
        %1361 = vmatprep.subr.mxu0 0.0
        %1362 = vmatpush1.xpose.msra.mxu0 0.0
        %1363 = vmatprep.subr.mxu0 0.0
        %1364 = vmatpush1.xpose.msra.mxu0 0.0
        %1365 = vmatprep.subr.mxu0 0.0
        %1366 = vmatpush1.xpose.msra.mxu0 0.0
        %1367 = vmatprep.subr.mxu0 0.0
        %1368 = vmatpush1.xpose.msra.mxu0 0.0
        %1369 = vmatprep.subr.mxu0 0.0
        %1370 = vmatpush1.xpose.msra.mxu0 0.0
        %1371 = vmatprep.mubr.f32.mxu0 0.0
        %1372 = vmatmul.mubr.f32.gmra.mrb[0].mxu0 %v1303
        %v1373 = vpop.f32.mrb[0].mxu0
        %v1374 = vadd.f32 0.0, %v1373
        %v1375 = vpop.f32.mrb[0].mxu0
        %1376 = vdwg.mxu0
        %1377 = vrot.lane.b32.xlu0 %v479, 120
        %v1378 = vpop.permute.xlu0 %1377
        %1379 = vrot.lane.b32.xlu0 %v479, 88
        %v1380 = vpop.permute.xlu0 %1379
        %v1381 = vsel %vm485, %v1378, 0
        %v1383 = vsel %vm485, %v1380, 0
        %1385 = vmatprep.subr.mxu0 0.0
        %1386 = vmatpush1.xpose.msra.mxu0 %v1383
        %1387 = vmatprep.subr.mxu0 0.0
        %1388 = vmatpush1.xpose.msra.mxu0 0.0
        %1389 = vmatprep.subr.mxu0 0.0
        %1390 = vmatpush1.xpose.msra.mxu0 0.0
        %1391 = vmatprep.subr.mxu0 0.0
        %1392 = vmatpush1.xpose.msra.mxu0 0.0
        %1393 = vmatprep.subr.mxu0 0.0
        %1394 = vmatpush1.xpose.msra.mxu0 0.0
        %1395 = vmatprep.subr.mxu0 0.0
        %1396 = vmatpush1.xpose.msra.mxu0 0.0
        %1397 = vmatprep.subr.mxu0 0.0
        %1398 = vmatpush1.xpose.msra.mxu0 0.0
        %1399 = vmatprep.subr.mxu0 0.0
        %1400 = vmatpush1.xpose.msra.mxu0 0.0
        %1401 = vmatprep.subr.mxu0 0.0
        %1402 = vmatpush1.xpose.msra.mxu0 0.0
        %1403 = vmatprep.subr.mxu0 0.0
        %1404 = vmatpush1.xpose.msra.mxu0 0.0
        %1405 = vmatprep.subr.mxu0 0.0
        %1406 = vmatpush1.xpose.msra.mxu0 0.0
        %1407 = vmatprep.subr.mxu0 0.0
        %1408 = vmatpush1.xpose.msra.mxu0 0.0
        %1409 = vmatprep.subr.mxu0 0.0
        %1410 = vmatpush1.xpose.msra.mxu0 0.0
        %1411 = vmatprep.subr.mxu0 0.0
        %1412 = vmatpush1.xpose.msra.mxu0 0.0
        %1413 = vmatprep.subr.mxu0 0.0
        %1414 = vmatpush1.xpose.msra.mxu0 0.0
        %1415 = vmatprep.subr.mxu0 0.0
        %1416 = vmatpush1.xpose.msra.mxu0 0.0
        %1417 = vmatprep.subr.mxu0 0.0
        %1418 = vmatpush1.xpose.msra.mxu0 0.0
        %1419 = vmatprep.subr.mxu0 0.0
        %1420 = vmatpush1.xpose.msra.mxu0 0.0
        %1421 = vmatprep.subr.mxu0 0.0
        %1422 = vmatpush1.xpose.msra.mxu0 0.0
        %1423 = vmatprep.subr.mxu0 0.0
        %1424 = vmatpush1.xpose.msra.mxu0 0.0
        %1425 = vmatprep.subr.mxu0 0.0
        %1426 = vmatpush1.xpose.msra.mxu0 0.0
        %1427 = vmatprep.subr.mxu0 0.0
        %1428 = vmatpush1.xpose.msra.mxu0 0.0
        %1429 = vmatprep.subr.mxu0 0.0
        %1430 = vmatpush1.xpose.msra.mxu0 0.0
        %1431 = vmatprep.subr.mxu0 0.0
        %1432 = vmatpush1.xpose.msra.mxu0 0.0
        %1433 = vmatprep.subr.mxu0 0.0
        %1434 = vmatpush1.xpose.msra.mxu0 0.0
        %1435 = vmatprep.subr.mxu0 0.0
        %1436 = vmatpush1.xpose.msra.mxu0 0.0
        %1437 = vmatprep.subr.mxu0 0.0
        %1438 = vmatpush1.xpose.msra.mxu0 0.0
        %1439 = vmatprep.subr.mxu0 0.0
        %1440 = vmatpush1.xpose.msra.mxu0 0.0
        %1441 = vmatprep.subr.mxu0 0.0
        %1442 = vmatpush1.xpose.msra.mxu0 0.0
        %1443 = vmatprep.subr.mxu0 0.0
        %1444 = vmatpush1.xpose.msra.mxu0 0.0
        %1445 = vmatprep.subr.mxu0 0.0
        %1446 = vmatpush1.xpose.msra.mxu0 0.0
        %1447 = vmatprep.subr.mxu0 0.0
        %1448 = vmatpush1.xpose.msra.mxu0 0.0
        %1449 = vmatprep.mubr.f32.mxu0 0.0
        %1450 = vmatmul.mubr.f32.gmra.mrb[0].mxu0 %v1381
        %v1451 = vpop.f32.mrb[0].mxu0
        %v1452 = vadd.f32 0.0, %v1451
        %v1453 = vpop.f32.mrb[0].mxu0
        %1454 = vdwg.mxu0
        %v1455 = vsel %vm485, %v1218, -inf
        %1456 = vmax.xlane.f32.xlu0 %v1455
        %v1457 = vpop.xlane.xlu0 %1456
        %v1458 = vsel %vm485, %v1296, -inf
        %1459 = vmax.xlane.f32.xlu0 %v1458
        %v1460 = vpop.xlane.xlu0 %1459
        %v1461 = vsel %vm485, %v1374, -inf
        %1462 = vmax.xlane.f32.xlu0 %v1461
        %v1463 = vpop.xlane.xlu0 %1462
        %v1464 = vsel %vm485, %v1452, -inf
        %1465 = vmax.xlane.f32.xlu0 %v1464
        %v1466 = vpop.xlane.xlu0 %1465
        %v1467 = vsub.f32 %v1218, %v1457
        %v1468 = vsub.f32 %v1296, %v1460
        %v1469 = vsub.f32 %v1374, %v1463
        %v1470 = vsub.f32 %v1452, %v1466
        %v1471 = vmul.f32 %v1467, 1.442695
        %v1472 = vpow.pop %v1471
        %v1473 = vmul.f32 %v1468, 1.442695
        %v1474 = vpow.pop %v1473
        %v1475 = vmul.f32 %v1469, 1.442695
        %v1476 = vpow.pop %v1475
        %v1477 = vmul.f32 %v1470, 1.442695
        %v1478 = vpow.pop %v1477
        %v1479 = vsel %vm485, %v1472, 0.0
        %1480 = vadd.xlane.f32.xlu0 %v1479
        %v1481 = vpop.xlane.xlu0 %1480
        %v1482 = vsel %vm485, %v1474, 0.0
        %1483 = vadd.xlane.f32.xlu0 %v1482
        %v1484 = vpop.xlane.xlu0 %1483
        %v1485 = vsel %vm485, %v1476, 0.0
        %1486 = vadd.xlane.f32.xlu0 %v1485
        %v1487 = vpop.xlane.xlu0 %1486
        %v1488 = vsel %vm485, %v1478, 0.0
        %1489 = vadd.xlane.f32.xlu0 %v1488
        %v1490 = vpop.xlane.xlu0 %1489
        %v1491 = vrcp.pop %v1481
        %v1492 = vrcp.pop %v1484
        %v1493 = vrcp.pop %v1487
        %v1494 = vrcp.pop %v1490
        %v1495 = vmul.f32 %v1472, %v1491
        %v1496 = vmul.f32 %v1474, %v1492
        %v1497 = vmul.f32 %v1476, %v1493
        %v1498 = vmul.f32 %v1478, %v1494
        %1499 = vrot.lane.b32.xlu0 %v464, 56
        %v1500 = vpop.permute.xlu0 %1499
        %v1503 = vsel %vm485, %v1495, 0
        %1505 = vmatprep.subr.mxu0 0.0
        %1506 = vmatpush1.msra.mxu0 %v1500
        %1507 = vmatprep.subr.mxu0 0.0
        %1508 = vmatpush1.msra.mxu0 0.0
        %1509 = vmatprep.subr.mxu0 0.0
        %1510 = vmatpush1.msra.mxu0 0.0
        %1511 = vmatprep.subr.mxu0 0.0
        %1512 = vmatpush1.msra.mxu0 0.0
        %1513 = vmatprep.subr.mxu0 0.0
        %1514 = vmatpush1.msra.mxu0 0.0
        %1515 = vmatprep.subr.mxu0 0.0
        %1516 = vmatpush1.msra.mxu0 0.0
        %1517 = vmatprep.subr.mxu0 0.0
        %1518 = vmatpush1.msra.mxu0 0.0
        %1519 = vmatprep.subr.mxu0 0.0
        %1520 = vmatpush1.msra.mxu0 0.0
        %1521 = vmatprep.subr.mxu0 0.0
        %1522 = vmatpush1.msra.mxu0 0.0
        %1523 = vmatprep.subr.mxu0 0.0
        %1524 = vmatpush1.msra.mxu0 0.0
        %1525 = vmatprep.subr.mxu0 0.0
        %1526 = vmatpush1.msra.mxu0 0.0
        %1527 = vmatprep.subr.mxu0 0.0
        %1528 = vmatpush1.msra.mxu0 0.0
        %1529 = vmatprep.subr.mxu0 0.0
        %1530 = vmatpush1.msra.mxu0 0.0
        %1531 = vmatprep.subr.mxu0 0.0
        %1532 = vmatpush1.msra.mxu0 0.0
        %1533 = vmatprep.subr.mxu0 0.0
        %1534 = vmatpush1.msra.mxu0 0.0
        %1535 = vmatprep.subr.mxu0 0.0
        %1536 = vmatpush1.msra.mxu0 0.0
        %1537 = vmatprep.subr.mxu0 0.0
        %1538 = vmatpush1.msra.mxu0 0.0
        %1539 = vmatprep.subr.mxu0 0.0
        %1540 = vmatpush1.msra.mxu0 0.0
        %1541 = vmatprep.subr.mxu0 0.0
        %1542 = vmatpush1.msra.mxu0 0.0
        %1543 = vmatprep.subr.mxu0 0.0
        %1544 = vmatpush1.msra.mxu0 0.0
        %1545 = vmatprep.subr.mxu0 0.0
        %1546 = vmatpush1.msra.mxu0 0.0
        %1547 = vmatprep.subr.mxu0 0.0
        %1548 = vmatpush1.msra.mxu0 0.0
        %1549 = vmatprep.subr.mxu0 0.0
        %1550 = vmatpush1.msra.mxu0 0.0
        %1551 = vmatprep.subr.mxu0 0.0
        %1552 = vmatpush1.msra.mxu0 0.0
        %1553 = vmatprep.subr.mxu0 0.0
        %1554 = vmatpush1.msra.mxu0 0.0
        %1555 = vmatprep.subr.mxu0 0.0
        %1556 = vmatpush1.msra.mxu0 0.0
        %1557 = vmatprep.subr.mxu0 0.0
        %1558 = vmatpush1.msra.mxu0 0.0
        %1559 = vmatprep.subr.mxu0 0.0
        %1560 = vmatpush1.msra.mxu0 0.0
        %1561 = vmatprep.subr.mxu0 0.0
        %1562 = vmatpush1.msra.mxu0 0.0
        %1563 = vmatprep.subr.mxu0 0.0
        %1564 = vmatpush1.msra.mxu0 0.0
        %1565 = vmatprep.subr.mxu0 0.0
        %1566 = vmatpush1.msra.mxu0 0.0
        %1567 = vmatprep.subr.mxu0 0.0
        %1568 = vmatpush1.msra.mxu0 0.0
        %1569 = vmatprep.mubr.f32.mxu0 0.0
        %1570 = vmatmul.mubr.f32.gmra.mrb[0].mxu0 %v1503
        %v1571 = vpop.f32.mrb[0].mxu0
        %v1572 = vadd.f32 0.0, %v1571
        %v1573 = vpop.f32.mrb[0].mxu0
        %1574 = vdwg.mxu0
        %1575 = vrot.lane.b32.xlu0 %v469, 56
        %v1576 = vpop.permute.xlu0 %1575
        %v1579 = vsel %vm485, %v1496, 0
        %1581 = vmatprep.subr.mxu0 0.0
        %1582 = vmatpush1.msra.mxu0 %v1576
        %1583 = vmatprep.subr.mxu0 0.0
        %1584 = vmatpush1.msra.mxu0 0.0
        %1585 = vmatprep.subr.mxu0 0.0
        %1586 = vmatpush1.msra.mxu0 0.0
        %1587 = vmatprep.subr.mxu0 0.0
        %1588 = vmatpush1.msra.mxu0 0.0
        %1589 = vmatprep.subr.mxu0 0.0
        %1590 = vmatpush1.msra.mxu0 0.0
        %1591 = vmatprep.subr.mxu0 0.0
        %1592 = vmatpush1.msra.mxu0 0.0
        %1593 = vmatprep.subr.mxu0 0.0
        %1594 = vmatpush1.msra.mxu0 0.0
        %1595 = vmatprep.subr.mxu0 0.0
        %1596 = vmatpush1.msra.mxu0 0.0
        %1597 = vmatprep.subr.mxu0 0.0
        %1598 = vmatpush1.msra.mxu0 0.0
        %1599 = vmatprep.subr.mxu0 0.0
        %1600 = vmatpush1.msra.mxu0 0.0
        %1601 = vmatprep.subr.mxu0 0.0
        %1602 = vmatpush1.msra.mxu0 0.0
        %1603 = vmatprep.subr.mxu0 0.0
        %1604 = vmatpush1.msra.mxu0 0.0
        %1605 = vmatprep.subr.mxu0 0.0
        %1606 = vmatpush1.msra.mxu0 0.0
        %1607 = vmatprep.subr.mxu0 0.0
        %1608 = vmatpush1.msra.mxu0 0.0
        %1609 = vmatprep.subr.mxu0 0.0
        %1610 = vmatpush1.msra.mxu0 0.0
        %1611 = vmatprep.subr.mxu0 0.0
        %1612 = vmatpush1.msra.mxu0 0.0
        %1613 = vmatprep.subr.mxu0 0.0
        %1614 = vmatpush1.msra.mxu0 0.0
        %1615 = vmatprep.subr.mxu0 0.0
        %1616 = vmatpush1.msra.mxu0 0.0
        %1617 = vmatprep.subr.mxu0 0.0
        %1618 = vmatpush1.msra.mxu0 0.0
        %1619 = vmatprep.subr.mxu0 0.0
        %1620 = vmatpush1.msra.mxu0 0.0
        %1621 = vmatprep.subr.mxu0 0.0
        %1622 = vmatpush1.msra.mxu0 0.0
        %1623 = vmatprep.subr.mxu0 0.0
        %1624 = vmatpush1.msra.mxu0 0.0
        %1625 = vmatprep.subr.mxu0 0.0
        %1626 = vmatpush1.msra.mxu0 0.0
        %1627 = vmatprep.subr.mxu0 0.0
        %1628 = vmatpush1.msra.mxu0 0.0
        %1629 = vmatprep.subr.mxu0 0.0
        %1630 = vmatpush1.msra.mxu0 0.0
        %1631 = vmatprep.subr.mxu0 0.0
        %1632 = vmatpush1.msra.mxu0 0.0
        %1633 = vmatprep.subr.mxu0 0.0
        %1634 = vmatpush1.msra.mxu0 0.0
        %1635 = vmatprep.subr.mxu0 0.0
        %1636 = vmatpush1.msra.mxu0 0.0
        %1637 = vmatprep.subr.mxu0 0.0
        %1638 = vmatpush1.msra.mxu0 0.0
        %1639 = vmatprep.subr.mxu0 0.0
        %1640 = vmatpush1.msra.mxu0 0.0
        %1641 = vmatprep.subr.mxu0 0.0
        %1642 = vmatpush1.msra.mxu0 0.0
        %1643 = vmatprep.subr.mxu0 0.0
        %1644 = vmatpush1.msra.mxu0 0.0
        %1645 = vmatprep.mubr.f32.mxu0 0.0
        %1646 = vmatmul.mubr.f32.gmra.mrb[0].mxu0 %v1579
        %v1647 = vpop.f32.mrb[0].mxu0
        %v1648 = vadd.f32 0.0, %v1647
        %v1649 = vpop.f32.mrb[0].mxu0
        %1650 = vdwg.mxu0
        %1651 = vrot.lane.b32.xlu0 %v474, 56
        %v1652 = vpop.permute.xlu0 %1651
        %v1655 = vsel %vm485, %v1497, 0
        %1657 = vmatprep.subr.mxu0 0.0
        %1658 = vmatpush1.msra.mxu0 %v1652
        %1659 = vmatprep.subr.mxu0 0.0
        %1660 = vmatpush1.msra.mxu0 0.0
        %1661 = vmatprep.subr.mxu0 0.0
        %1662 = vmatpush1.msra.mxu0 0.0
        %1663 = vmatprep.subr.mxu0 0.0
        %1664 = vmatpush1.msra.mxu0 0.0
        %1665 = vmatprep.subr.mxu0 0.0
        %1666 = vmatpush1.msra.mxu0 0.0
        %1667 = vmatprep.subr.mxu0 0.0
        %1668 = vmatpush1.msra.mxu0 0.0
        %1669 = vmatprep.subr.mxu0 0.0
        %1670 = vmatpush1.msra.mxu0 0.0
        %1671 = vmatprep.subr.mxu0 0.0
        %1672 = vmatpush1.msra.mxu0 0.0
        %1673 = vmatprep.subr.mxu0 0.0
        %1674 = vmatpush1.msra.mxu0 0.0
        %1675 = vmatprep.subr.mxu0 0.0
        %1676 = vmatpush1.msra.mxu0 0.0
        %1677 = vmatprep.subr.mxu0 0.0
        %1678 = vmatpush1.msra.mxu0 0.0
        %1679 = vmatprep.subr.mxu0 0.0
        %1680 = vmatpush1.msra.mxu0 0.0
        %1681 = vmatprep.subr.mxu0 0.0
        %1682 = vmatpush1.msra.mxu0 0.0
        %1683 = vmatprep.subr.mxu0 0.0
        %1684 = vmatpush1.msra.mxu0 0.0
        %1685 = vmatprep.subr.mxu0 0.0
        %1686 = vmatpush1.msra.mxu0 0.0
        %1687 = vmatprep.subr.mxu0 0.0
        %1688 = vmatpush1.msra.mxu0 0.0
        %1689 = vmatprep.subr.mxu0 0.0
        %1690 = vmatpush1.msra.mxu0 0.0
        %1691 = vmatprep.subr.mxu0 0.0
        %1692 = vmatpush1.msra.mxu0 0.0
        %1693 = vmatprep.subr.mxu0 0.0
        %1694 = vmatpush1.msra.mxu0 0.0
        %1695 = vmatprep.subr.mxu0 0.0
        %1696 = vmatpush1.msra.mxu0 0.0
        %1697 = vmatprep.subr.mxu0 0.0
        %1698 = vmatpush1.msra.mxu0 0.0
        %1699 = vmatprep.subr.mxu0 0.0
        %1700 = vmatpush1.msra.mxu0 0.0
        %1701 = vmatprep.subr.mxu0 0.0
        %1702 = vmatpush1.msra.mxu0 0.0
        %1703 = vmatprep.subr.mxu0 0.0
        %1704 = vmatpush1.msra.mxu0 0.0
        %1705 = vmatprep.subr.mxu0 0.0
        %1706 = vmatpush1.msra.mxu0 0.0
        %1707 = vmatprep.subr.mxu0 0.0
        %1708 = vmatpush1.msra.mxu0 0.0
        %1709 = vmatprep.subr.mxu0 0.0
        %1710 = vmatpush1.msra.mxu0 0.0
        %1711 = vmatprep.subr.mxu0 0.0
        %1712 = vmatpush1.msra.mxu0 0.0
        %1713 = vmatprep.subr.mxu0 0.0
        %1714 = vmatpush1.msra.mxu0 0.0
        %1715 = vmatprep.subr.mxu0 0.0
        %1716 = vmatpush1.msra.mxu0 0.0
        %1717 = vmatprep.subr.mxu0 0.0
        %1718 = vmatpush1.msra.mxu0 0.0
        %1719 = vmatprep.subr.mxu0 0.0
        %1720 = vmatpush1.msra.mxu0 0.0
        %1721 = vmatprep.mubr.f32.mxu0 0.0
        %1722 = vmatmul.mubr.f32.gmra.mrb[0].mxu0 %v1655
        %v1723 = vpop.f32.mrb[0].mxu0
        %v1724 = vadd.f32 0.0, %v1723
        %v1725 = vpop.f32.mrb[0].mxu0
        %1726 = vdwg.mxu0
        %1727 = vrot.lane.b32.xlu0 %v479, 56
        %v1728 = vpop.permute.xlu0 %1727
        %v1731 = vsel %vm485, %v1498, 0
        %1733 = vmatprep.subr.mxu0 0.0
        %1734 = vmatpush1.msra.mxu0 %v1728
        %1735 = vmatprep.subr.mxu0 0.0
        %1736 = vmatpush1.msra.mxu0 0.0
        %1737 = vmatprep.subr.mxu0 0.0
        %1738 = vmatpush1.msra.mxu0 0.0
        %1739 = vmatprep.subr.mxu0 0.0
        %1740 = vmatpush1.msra.mxu0 0.0
        %1741 = vmatprep.subr.mxu0 0.0
        %1742 = vmatpush1.msra.mxu0 0.0
        %1743 = vmatprep.subr.mxu0 0.0
        %1744 = vmatpush1.msra.mxu0 0.0
        %1745 = vmatprep.subr.mxu0 0.0
        %1746 = vmatpush1.msra.mxu0 0.0
        %1747 = vmatprep.subr.mxu0 0.0
        %1748 = vmatpush1.msra.mxu0 0.0
        %1749 = vmatprep.subr.mxu0 0.0
        %1750 = vmatpush1.msra.mxu0 0.0
        %1751 = vmatprep.subr.mxu0 0.0
        %1752 = vmatpush1.msra.mxu0 0.0
        %1753 = vmatprep.subr.mxu0 0.0
        %1754 = vmatpush1.msra.mxu0 0.0
        %1755 = vmatprep.subr.mxu0 0.0
        %1756 = vmatpush1.msra.mxu0 0.0
        %1757 = vmatprep.subr.mxu0 0.0
        %1758 = vmatpush1.msra.mxu0 0.0
        %1759 = vmatprep.subr.mxu0 0.0
        %1760 = vmatpush1.msra.mxu0 0.0
        %1761 = vmatprep.subr.mxu0 0.0
        %1762 = vmatpush1.msra.mxu0 0.0
        %1763 = vmatprep.subr.mxu0 0.0
        %1764 = vmatpush1.msra.mxu0 0.0
        %1765 = vmatprep.subr.mxu0 0.0
        %1766 = vmatpush1.msra.mxu0 0.0
        %1767 = vmatprep.subr.mxu0 0.0
        %1768 = vmatpush1.msra.mxu0 0.0
        %1769 = vmatprep.subr.mxu0 0.0
        %1770 = vmatpush1.msra.mxu0 0.0
        %1771 = vmatprep.subr.mxu0 0.0
        %1772 = vmatpush1.msra.mxu0 0.0
        %1773 = vmatprep.subr.mxu0 0.0
        %1774 = vmatpush1.msra.mxu0 0.0
        %1775 = vmatprep.subr.mxu0 0.0
        %1776 = vmatpush1.msra.mxu0 0.0
        %1777 = vmatprep.subr.mxu0 0.0
        %1778 = vmatpush1.msra.mxu0 0.0
        %1779 = vmatprep.subr.mxu0 0.0
        %1780 = vmatpush1.msra.mxu0 0.0
        %1781 = vmatprep.subr.mxu0 0.0
        %1782 = vmatpush1.msra.mxu0 0.0
        %1783 = vmatprep.subr.mxu0 0.0
        %1784 = vmatpush1.msra.mxu0 0.0
        %1785 = vmatprep.subr.mxu0 0.0
        %1786 = vmatpush1.msra.mxu0 0.0
        %1787 = vmatprep.subr.mxu0 0.0
        %1788 = vmatpush1.msra.mxu0 0.0
        %1789 = vmatprep.subr.mxu0 0.0
        %1790 = vmatpush1.msra.mxu0 0.0
        %1791 = vmatprep.subr.mxu0 0.0
        %1792 = vmatpush1.msra.mxu0 0.0
        %1793 = vmatprep.subr.mxu0 0.0
        %1794 = vmatpush1.msra.mxu0 0.0
        %1795 = vmatprep.subr.mxu0 0.0
        %1796 = vmatpush1.msra.mxu0 0.0
        %1797 = vmatprep.mubr.f32.mxu0 0.0
        %1798 = vmatmul.mubr.f32.gmra.mrb[0].mxu0 %v1731
        %v1799 = vpop.f32.mrb[0].mxu0
        %v1800 = vadd.f32 0.0, %v1799
        %v1801 = vpop.f32.mrb[0].mxu0
        %1802 = vdwg.mxu0
        %1807 = vrot.lane.b32.xlu0 %v1572, 8
        %v1808 = vpop.permute.xlu0 %1807
        %1809 = vrot.lane.b32.xlu0 %v1648, 8
        %v1810 = vpop.permute.xlu0 %1809
        %1811 = vrot.lane.b32.xlu0 %v1724, 8
        %v1812 = vpop.permute.xlu0 %1811
        %1813 = vrot.lane.b32.xlu0 %v1800, 8
        %v1814 = vpop.permute.xlu0 %1813
        %vm1819 = vcmask 130112
        %1820 = vst.msk [vmem:[#allocation2] sm:$0xff] %vm1819, %v1808
        %1821 = vst.msk [vmem:[#allocation2 + $0x8] sm:$0xff] %vm1819, %v1810
        %1822 = vst.msk [vmem:[#allocation2 + $0x10] sm:$0xff] %vm1819, %v1812
        %1823 = vst.msk [vmem:[#allocation2 + $0x18] sm:$0xff] %vm1819, %v1814
        %1824 = vrot.lane.b32.xlu0 %v464, 112
        %v1825 = vpop.permute.xlu0 %1824
        %1826 = vrot.lane.b32.xlu0 %v464, 80
        %v1827 = vpop.permute.xlu0 %1826
        %v1828 = vsel %vm485, %v1825, 0
        %v1830 = vsel %vm485, %v1827, 0
        %1832 = vmatprep.subr.mxu0 0.0
        %1833 = vmatpush1.xpose.msra.mxu0 %v1830
        %1834 = vmatprep.subr.mxu0 0.0
        %1835 = vmatpush1.xpose.msra.mxu0 0.0
        %1836 = vmatprep.subr.mxu0 0.0
        %1837 = vmatpush1.xpose.msra.mxu0 0.0
        %1838 = vmatprep.subr.mxu0 0.0
        %1839 = vmatpush1.xpose.msra.mxu0 0.0
        %1840 = vmatprep.subr.mxu0 0.0
        %1841 = vmatpush1.xpose.msra.mxu0 0.0
        %1842 = vmatprep.subr.mxu0 0.0
        %1843 = vmatpush1.xpose.msra.mxu0 0.0
        %1844 = vmatprep.subr.mxu0 0.0
        %1845 = vmatpush1.xpose.msra.mxu0 0.0
        %1846 = vmatprep.subr.mxu0 0.0
        %1847 = vmatpush1.xpose.msra.mxu0 0.0
        %1848 = vmatprep.subr.mxu0 0.0
        %1849 = vmatpush1.xpose.msra.mxu0 0.0
        %1850 = vmatprep.subr.mxu0 0.0
        %1851 = vmatpush1.xpose.msra.mxu0 0.0
        %1852 = vmatprep.subr.mxu0 0.0
        %1853 = vmatpush1.xpose.msra.mxu0 0.0
        %1854 = vmatprep.subr.mxu0 0.0
        %1855 = vmatpush1.xpose.msra.mxu0 0.0
        %1856 = vmatprep.subr.mxu0 0.0
        %1857 = vmatpush1.xpose.msra.mxu0 0.0
        %1858 = vmatprep.subr.mxu0 0.0
        %1859 = vmatpush1.xpose.msra.mxu0 0.0
        %1860 = vmatprep.subr.mxu0 0.0
        %1861 = vmatpush1.xpose.msra.mxu0 0.0
        %1862 = vmatprep.subr.mxu0 0.0
        %1863 = vmatpush1.xpose.msra.mxu0 0.0
        %1864 = vmatprep.subr.mxu0 0.0
        %1865 = vmatpush1.xpose.msra.mxu0 0.0
        %1866 = vmatprep.subr.mxu0 0.0
        %1867 = vmatpush1.xpose.msra.mxu0 0.0
        %1868 = vmatprep.subr.mxu0 0.0
        %1869 = vmatpush1.xpose.msra.mxu0 0.0
        %1870 = vmatprep.subr.mxu0 0.0
        %1871 = vmatpush1.xpose.msra.mxu0 0.0
        %1872 = vmatprep.subr.mxu0 0.0
        %1873 = vmatpush1.xpose.msra.mxu0 0.0
        %1874 = vmatprep.subr.mxu0 0.0
        %1875 = vmatpush1.xpose.msra.mxu0 0.0
        %1876 = vmatprep.subr.mxu0 0.0
        %1877 = vmatpush1.xpose.msra.mxu0 0.0
        %1878 = vmatprep.subr.mxu0 0.0
        %1879 = vmatpush1.xpose.msra.mxu0 0.0
        %1880 = vmatprep.subr.mxu0 0.0
        %1881 = vmatpush1.xpose.msra.mxu0 0.0
        %1882 = vmatprep.subr.mxu0 0.0
        %1883 = vmatpush1.xpose.msra.mxu0 0.0
        %1884 = vmatprep.subr.mxu0 0.0
        %1885 = vmatpush1.xpose.msra.mxu0 0.0
        %1886 = vmatprep.subr.mxu0 0.0
        %1887 = vmatpush1.xpose.msra.mxu0 0.0
        %1888 = vmatprep.subr.mxu0 0.0
        %1889 = vmatpush1.xpose.msra.mxu0 0.0
        %1890 = vmatprep.subr.mxu0 0.0
        %1891 = vmatpush1.xpose.msra.mxu0 0.0
        %1892 = vmatprep.subr.mxu0 0.0
        %1893 = vmatpush1.xpose.msra.mxu0 0.0
        %1894 = vmatprep.subr.mxu0 0.0
        %1895 = vmatpush1.xpose.msra.mxu0 0.0
        %1896 = vmatprep.mubr.f32.mxu0 0.0
        %1897 = vmatmul.mubr.f32.gmra.mrb[0].mxu0 %v1828
        %v1898 = vpop.f32.mrb[0].mxu0
        %v1899 = vadd.f32 0.0, %v1898
        %v1900 = vpop.f32.mrb[0].mxu0
        %1901 = vdwg.mxu0
        %1902 = vrot.lane.b32.xlu0 %v469, 112
        %v1903 = vpop.permute.xlu0 %1902
        %1904 = vrot.lane.b32.xlu0 %v469, 80
        %v1905 = vpop.permute.xlu0 %1904
        %v1906 = vsel %vm485, %v1903, 0
        %v1908 = vsel %vm485, %v1905, 0
        %1910 = vmatprep.subr.mxu0 0.0
        %1911 = vmatpush1.xpose.msra.mxu0 %v1908
        %1912 = vmatprep.subr.mxu0 0.0
        %1913 = vmatpush1.xpose.msra.mxu0 0.0
        %1914 = vmatprep.subr.mxu0 0.0
        %1915 = vmatpush1.xpose.msra.mxu0 0.0
        %1916 = vmatprep.subr.mxu0 0.0
        %1917 = vmatpush1.xpose.msra.mxu0 0.0
        %1918 = vmatprep.subr.mxu0 0.0
        %1919 = vmatpush1.xpose.msra.mxu0 0.0
        %1920 = vmatprep.subr.mxu0 0.0
        %1921 = vmatpush1.xpose.msra.mxu0 0.0
        %1922 = vmatprep.subr.mxu0 0.0
        %1923 = vmatpush1.xpose.msra.mxu0 0.0
        %1924 = vmatprep.subr.mxu0 0.0
        %1925 = vmatpush1.xpose.msra.mxu0 0.0
        %1926 = vmatprep.subr.mxu0 0.0
        %1927 = vmatpush1.xpose.msra.mxu0 0.0
        %1928 = vmatprep.subr.mxu0 0.0
        %1929 = vmatpush1.xpose.msra.mxu0 0.0
        %1930 = vmatprep.subr.mxu0 0.0
        %1931 = vmatpush1.xpose.msra.mxu0 0.0
        %1932 = vmatprep.subr.mxu0 0.0
        %1933 = vmatpush1.xpose.msra.mxu0 0.0
        %1934 = vmatprep.subr.mxu0 0.0
        %1935 = vmatpush1.xpose.msra.mxu0 0.0
        %1936 = vmatprep.subr.mxu0 0.0
        %1937 = vmatpush1.xpose.msra.mxu0 0.0
        %1938 = vmatprep.subr.mxu0 0.0
        %1939 = vmatpush1.xpose.msra.mxu0 0.0
        %1940 = vmatprep.subr.mxu0 0.0
        %1941 = vmatpush1.xpose.msra.mxu0 0.0
        %1942 = vmatprep.subr.mxu0 0.0
        %1943 = vmatpush1.xpose.msra.mxu0 0.0
        %1944 = vmatprep.subr.mxu0 0.0
        %1945 = vmatpush1.xpose.msra.mxu0 0.0
        %1946 = vmatprep.subr.mxu0 0.0
        %1947 = vmatpush1.xpose.msra.mxu0 0.0
        %1948 = vmatprep.subr.mxu0 0.0
        %1949 = vmatpush1.xpose.msra.mxu0 0.0
        %1950 = vmatprep.subr.mxu0 0.0
        %1951 = vmatpush1.xpose.msra.mxu0 0.0
        %1952 = vmatprep.subr.mxu0 0.0
        %1953 = vmatpush1.xpose.msra.mxu0 0.0
        %1954 = vmatprep.subr.mxu0 0.0
        %1955 = vmatpush1.xpose.msra.mxu0 0.0
        %1956 = vmatprep.subr.mxu0 0.0
        %1957 = vmatpush1.xpose.msra.mxu0 0.0
        %1958 = vmatprep.subr.mxu0 0.0
        %1959 = vmatpush1.xpose.msra.mxu0 0.0
        %1960 = vmatprep.subr.mxu0 0.0
        %1961 = vmatpush1.xpose.msra.mxu0 0.0
        %1962 = vmatprep.subr.mxu0 0.0
        %1963 = vmatpush1.xpose.msra.mxu0 0.0
        %1964 = vmatprep.subr.mxu0 0.0
        %1965 = vmatpush1.xpose.msra.mxu0 0.0
        %1966 = vmatprep.subr.mxu0 0.0
        %1967 = vmatpush1.xpose.msra.mxu0 0.0
        %1968 = vmatprep.subr.mxu0 0.0
        %1969 = vmatpush1.xpose.msra.mxu0 0.0
        %1970 = vmatprep.subr.mxu0 0.0
        %1971 = vmatpush1.xpose.msra.mxu0 0.0
        %1972 = vmatprep.subr.mxu0 0.0
        %1973 = vmatpush1.xpose.msra.mxu0 0.0
        %1974 = vmatprep.mubr.f32.mxu0 0.0
        %1975 = vmatmul.mubr.f32.gmra.mrb[0].mxu0 %v1906
        %v1976 = vpop.f32.mrb[0].mxu0
        %v1977 = vadd.f32 0.0, %v1976
        %v1978 = vpop.f32.mrb[0].mxu0
        %1979 = vdwg.mxu0
        %1980 = vrot.lane.b32.xlu0 %v474, 112
        %v1981 = vpop.permute.xlu0 %1980
        %1982 = vrot.lane.b32.xlu0 %v474, 80
        %v1983 = vpop.permute.xlu0 %1982
        %v1984 = vsel %vm485, %v1981, 0
        %v1986 = vsel %vm485, %v1983, 0
        %1988 = vmatprep.subr.mxu0 0.0
        %1989 = vmatpush1.xpose.msra.mxu0 %v1986
        %1990 = vmatprep.subr.mxu0 0.0
        %1991 = vmatpush1.xpose.msra.mxu0 0.0
        %1992 = vmatprep.subr.mxu0 0.0
        %1993 = vmatpush1.xpose.msra.mxu0 0.0
        %1994 = vmatprep.subr.mxu0 0.0
        %1995 = vmatpush1.xpose.msra.mxu0 0.0
        %1996 = vmatprep.subr.mxu0 0.0
        %1997 = vmatpush1.xpose.msra.mxu0 0.0
        %1998 = vmatprep.subr.mxu0 0.0
        %1999 = vmatpush1.xpose.msra.mxu0 0.0
        %2000 = vmatprep.subr.mxu0 0.0
        %2001 = vmatpush1.xpose.msra.mxu0 0.0
        %2002 = vmatprep.subr.mxu0 0.0
        %2003 = vmatpush1.xpose.msra.mxu0 0.0
        %2004 = vmatprep.subr.mxu0 0.0
        %2005 = vmatpush1.xpose.msra.mxu0 0.0
        %2006 = vmatprep.subr.mxu0 0.0
        %2007 = vmatpush1.xpose.msra.mxu0 0.0
        %2008 = vmatprep.subr.mxu0 0.0
        %2009 = vmatpush1.xpose.msra.mxu0 0.0
        %2010 = vmatprep.subr.mxu0 0.0
        %2011 = vmatpush1.xpose.msra.mxu0 0.0
        %2012 = vmatprep.subr.mxu0 0.0
        %2013 = vmatpush1.xpose.msra.mxu0 0.0
        %2014 = vmatprep.subr.mxu0 0.0
        %2015 = vmatpush1.xpose.msra.mxu0 0.0
        %2016 = vmatprep.subr.mxu0 0.0
        %2017 = vmatpush1.xpose.msra.mxu0 0.0
        %2018 = vmatprep.subr.mxu0 0.0
        %2019 = vmatpush1.xpose.msra.mxu0 0.0
        %2020 = vmatprep.subr.mxu0 0.0
        %2021 = vmatpush1.xpose.msra.mxu0 0.0
        %2022 = vmatprep.subr.mxu0 0.0
        %2023 = vmatpush1.xpose.msra.mxu0 0.0
        %2024 = vmatprep.subr.mxu0 0.0
        %2025 = vmatpush1.xpose.msra.mxu0 0.0
        %2026 = vmatprep.subr.mxu0 0.0
        %2027 = vmatpush1.xpose.msra.mxu0 0.0
        %2028 = vmatprep.subr.mxu0 0.0
        %2029 = vmatpush1.xpose.msra.mxu0 0.0
        %2030 = vmatprep.subr.mxu0 0.0
        %2031 = vmatpush1.xpose.msra.mxu0 0.0
        %2032 = vmatprep.subr.mxu0 0.0
        %2033 = vmatpush1.xpose.msra.mxu0 0.0
        %2034 = vmatprep.subr.mxu0 0.0
        %2035 = vmatpush1.xpose.msra.mxu0 0.0
        %2036 = vmatprep.subr.mxu0 0.0
        %2037 = vmatpush1.xpose.msra.mxu0 0.0
        %2038 = vmatprep.subr.mxu0 0.0
        %2039 = vmatpush1.xpose.msra.mxu0 0.0
        %2040 = vmatprep.subr.mxu0 0.0
        %2041 = vmatpush1.xpose.msra.mxu0 0.0
        %2042 = vmatprep.subr.mxu0 0.0
        %2043 = vmatpush1.xpose.msra.mxu0 0.0
        %2044 = vmatprep.subr.mxu0 0.0
        %2045 = vmatpush1.xpose.msra.mxu0 0.0
        %2046 = vmatprep.subr.mxu0 0.0
        %2047 = vmatpush1.xpose.msra.mxu0 0.0
        %2048 = vmatprep.subr.mxu0 0.0
        %2049 = vmatpush1.xpose.msra.mxu0 0.0
        %2050 = vmatprep.subr.mxu0 0.0
        %2051 = vmatpush1.xpose.msra.mxu0 0.0
        %2052 = vmatprep.mubr.f32.mxu0 0.0
        %2053 = vmatmul.mubr.f32.gmra.mrb[0].mxu0 %v1984
        %v2054 = vpop.f32.mrb[0].mxu0
        %v2055 = vadd.f32 0.0, %v2054
        %v2056 = vpop.f32.mrb[0].mxu0
        %2057 = vdwg.mxu0
        %2058 = vrot.lane.b32.xlu0 %v479, 112
        %v2059 = vpop.permute.xlu0 %2058
        %2060 = vrot.lane.b32.xlu0 %v479, 80
        %v2061 = vpop.permute.xlu0 %2060
        %v2062 = vsel %vm485, %v2059, 0
        %v2064 = vsel %vm485, %v2061, 0
        %2066 = vmatprep.subr.mxu0 0.0
        %2067 = vmatpush1.xpose.msra.mxu0 %v2064
        %2068 = vmatprep.subr.mxu0 0.0
        %2069 = vmatpush1.xpose.msra.mxu0 0.0
        %2070 = vmatprep.subr.mxu0 0.0
        %2071 = vmatpush1.xpose.msra.mxu0 0.0
        %2072 = vmatprep.subr.mxu0 0.0
        %2073 = vmatpush1.xpose.msra.mxu0 0.0
        %2074 = vmatprep.subr.mxu0 0.0
        %2075 = vmatpush1.xpose.msra.mxu0 0.0
        %2076 = vmatprep.subr.mxu0 0.0
        %2077 = vmatpush1.xpose.msra.mxu0 0.0
        %2078 = vmatprep.subr.mxu0 0.0
        %2079 = vmatpush1.xpose.msra.mxu0 0.0
        %2080 = vmatprep.subr.mxu0 0.0
        %2081 = vmatpush1.xpose.msra.mxu0 0.0
        %2082 = vmatprep.subr.mxu0 0.0
        %2083 = vmatpush1.xpose.msra.mxu0 0.0
        %2084 = vmatprep.subr.mxu0 0.0
        %2085 = vmatpush1.xpose.msra.mxu0 0.0
        %2086 = vmatprep.subr.mxu0 0.0
        %2087 = vmatpush1.xpose.msra.mxu0 0.0
        %2088 = vmatprep.subr.mxu0 0.0
        %2089 = vmatpush1.xpose.msra.mxu0 0.0
        %2090 = vmatprep.subr.mxu0 0.0
        %2091 = vmatpush1.xpose.msra.mxu0 0.0
        %2092 = vmatprep.subr.mxu0 0.0
        %2093 = vmatpush1.xpose.msra.mxu0 0.0
        %2094 = vmatprep.subr.mxu0 0.0
        %2095 = vmatpush1.xpose.msra.mxu0 0.0
        %2096 = vmatprep.subr.mxu0 0.0
        %2097 = vmatpush1.xpose.msra.mxu0 0.0
        %2098 = vmatprep.subr.mxu0 0.0
        %2099 = vmatpush1.xpose.msra.mxu0 0.0
        %2100 = vmatprep.subr.mxu0 0.0
        %2101 = vmatpush1.xpose.msra.mxu0 0.0
        %2102 = vmatprep.subr.mxu0 0.0
        %2103 = vmatpush1.xpose.msra.mxu0 0.0
        %2104 = vmatprep.subr.mxu0 0.0
        %2105 = vmatpush1.xpose.msra.mxu0 0.0
        %2106 = vmatprep.subr.mxu0 0.0
        %2107 = vmatpush1.xpose.msra.mxu0 0.0
        %2108 = vmatprep.subr.mxu0 0.0
        %2109 = vmatpush1.xpose.msra.mxu0 0.0
        %2110 = vmatprep.subr.mxu0 0.0
        %2111 = vmatpush1.xpose.msra.mxu0 0.0
        %2112 = vmatprep.subr.mxu0 0.0
        %2113 = vmatpush1.xpose.msra.mxu0 0.0
        %2114 = vmatprep.subr.mxu0 0.0
        %2115 = vmatpush1.xpose.msra.mxu0 0.0
        %2116 = vmatprep.subr.mxu0 0.0
        %2117 = vmatpush1.xpose.msra.mxu0 0.0
        %2118 = vmatprep.subr.mxu0 0.0
        %2119 = vmatpush1.xpose.msra.mxu0 0.0
        %2120 = vmatprep.subr.mxu0 0.0
        %2121 = vmatpush1.xpose.msra.mxu0 0.0
        %2122 = vmatprep.subr.mxu0 0.0
        %2123 = vmatpush1.xpose.msra.mxu0 0.0
        %2124 = vmatprep.subr.mxu0 0.0
        %2125 = vmatpush1.xpose.msra.mxu0 0.0
        %2126 = vmatprep.subr.mxu0 0.0
        %2127 = vmatpush1.xpose.msra.mxu0 0.0
        %2128 = vmatprep.subr.mxu0 0.0
        %2129 = vmatpush1.xpose.msra.mxu0 0.0
        %2130 = vmatprep.mubr.f32.mxu0 0.0
        %2131 = vmatmul.mubr.f32.gmra.mrb[0].mxu0 %v2062
        %v2132 = vpop.f32.mrb[0].mxu0
        %v2133 = vadd.f32 0.0, %v2132
        %v2134 = vpop.f32.mrb[0].mxu0
        %2135 = vdwg.mxu0
        %v2136 = vsel %vm485, %v1899, -inf
        %2137 = vmax.xlane.f32.xlu0 %v2136
        %v2138 = vpop.xlane.xlu0 %2137
        %v2139 = vsel %vm485, %v1977, -inf
        %2140 = vmax.xlane.f32.xlu0 %v2139
        %v2141 = vpop.xlane.xlu0 %2140
        %v2142 = vsel %vm485, %v2055, -inf
        %2143 = vmax.xlane.f32.xlu0 %v2142
        %v2144 = vpop.xlane.xlu0 %2143
        %v2145 = vsel %vm485, %v2133, -inf
        %2146 = vmax.xlane.f32.xlu0 %v2145
        %v2147 = vpop.xlane.xlu0 %2146
        %v2148 = vsub.f32 %v1899, %v2138
        %v2149 = vsub.f32 %v1977, %v2141
        %v2150 = vsub.f32 %v2055, %v2144
        %v2151 = vsub.f32 %v2133, %v2147
        %v2152 = vmul.f32 %v2148, 1.442695
        %v2153 = vpow.pop %v2152
        %v2154 = vmul.f32 %v2149, 1.442695
        %v2155 = vpow.pop %v2154
        %v2156 = vmul.f32 %v2150, 1.442695
        %v2157 = vpow.pop %v2156
        %v2158 = vmul.f32 %v2151, 1.442695
        %v2159 = vpow.pop %v2158
        %v2160 = vsel %vm485, %v2153, 0.0
        %2161 = vadd.xlane.f32.xlu0 %v2160
        %v2162 = vpop.xlane.xlu0 %2161
        %v2163 = vsel %vm485, %v2155, 0.0
        %2164 = vadd.xlane.f32.xlu0 %v2163
        %v2165 = vpop.xlane.xlu0 %2164
        %v2166 = vsel %vm485, %v2157, 0.0
        %2167 = vadd.xlane.f32.xlu0 %v2166
        %v2168 = vpop.xlane.xlu0 %2167
        %v2169 = vsel %vm485, %v2159, 0.0
        %2170 = vadd.xlane.f32.xlu0 %v2169
        %v2171 = vpop.xlane.xlu0 %2170
        %v2172 = vrcp.pop %v2162
        %v2173 = vrcp.pop %v2165
        %v2174 = vrcp.pop %v2168
        %v2175 = vrcp.pop %v2171
        %v2176 = vmul.f32 %v2153, %v2172
        %v2177 = vmul.f32 %v2155, %v2173
        %v2178 = vmul.f32 %v2157, %v2174
        %v2179 = vmul.f32 %v2159, %v2175
        %2180 = vrot.lane.b32.xlu0 %v464, 48
        %v2181 = vpop.permute.xlu0 %2180
        %v2184 = vsel %vm485, %v2176, 0
        %2186 = vmatprep.subr.mxu0 0.0
        %2187 = vmatpush1.msra.mxu0 %v2181
        %2188 = vmatprep.subr.mxu0 0.0
        %2189 = vmatpush1.msra.mxu0 0.0
        %2190 = vmatprep.subr.mxu0 0.0
        %2191 = vmatpush1.msra.mxu0 0.0
        %2192 = vmatprep.subr.mxu0 0.0
        %2193 = vmatpush1.msra.mxu0 0.0
        %2194 = vmatprep.subr.mxu0 0.0
        %2195 = vmatpush1.msra.mxu0 0.0
        %2196 = vmatprep.subr.mxu0 0.0
        %2197 = vmatpush1.msra.mxu0 0.0
        %2198 = vmatprep.subr.mxu0 0.0
        %2199 = vmatpush1.msra.mxu0 0.0
        %2200 = vmatprep.subr.mxu0 0.0
        %2201 = vmatpush1.msra.mxu0 0.0
        %2202 = vmatprep.subr.mxu0 0.0
        %2203 = vmatpush1.msra.mxu0 0.0
        %2204 = vmatprep.subr.mxu0 0.0
        %2205 = vmatpush1.msra.mxu0 0.0
        %2206 = vmatprep.subr.mxu0 0.0
        %2207 = vmatpush1.msra.mxu0 0.0
        %2208 = vmatprep.subr.mxu0 0.0
        %2209 = vmatpush1.msra.mxu0 0.0
        %2210 = vmatprep.subr.mxu0 0.0
        %2211 = vmatpush1.msra.mxu0 0.0
        %2212 = vmatprep.subr.mxu0 0.0
        %2213 = vmatpush1.msra.mxu0 0.0
        %2214 = vmatprep.subr.mxu0 0.0
        %2215 = vmatpush1.msra.mxu0 0.0
        %2216 = vmatprep.subr.mxu0 0.0
        %2217 = vmatpush1.msra.mxu0 0.0
        %2218 = vmatprep.subr.mxu0 0.0
        %2219 = vmatpush1.msra.mxu0 0.0
        %2220 = vmatprep.subr.mxu0 0.0
        %2221 = vmatpush1.msra.mxu0 0.0
        %2222 = vmatprep.subr.mxu0 0.0
        %2223 = vmatpush1.msra.mxu0 0.0
        %2224 = vmatprep.subr.mxu0 0.0
        %2225 = vmatpush1.msra.mxu0 0.0
        %2226 = vmatprep.subr.mxu0 0.0
        %2227 = vmatpush1.msra.mxu0 0.0
        %2228 = vmatprep.subr.mxu0 0.0
        %2229 = vmatpush1.msra.mxu0 0.0
        %2230 = vmatprep.subr.mxu0 0.0
        %2231 = vmatpush1.msra.mxu0 0.0
        %2232 = vmatprep.subr.mxu0 0.0
        %2233 = vmatpush1.msra.mxu0 0.0
        %2234 = vmatprep.subr.mxu0 0.0
        %2235 = vmatpush1.msra.mxu0 0.0
        %2236 = vmatprep.subr.mxu0 0.0
        %2237 = vmatpush1.msra.mxu0 0.0
        %2238 = vmatprep.subr.mxu0 0.0
        %2239 = vmatpush1.msra.mxu0 0.0
        %2240 = vmatprep.subr.mxu0 0.0
        %2241 = vmatpush1.msra.mxu0 0.0
        %2242 = vmatprep.subr.mxu0 0.0
        %2243 = vmatpush1.msra.mxu0 0.0
        %2244 = vmatprep.subr.mxu0 0.0
        %2245 = vmatpush1.msra.mxu0 0.0
        %2246 = vmatprep.subr.mxu0 0.0
        %2247 = vmatpush1.msra.mxu0 0.0
        %2248 = vmatprep.subr.mxu0 0.0
        %2249 = vmatpush1.msra.mxu0 0.0
        %2250 = vmatprep.mubr.f32.mxu0 0.0
        %2251 = vmatmul.mubr.f32.gmra.mrb[0].mxu0 %v2184
        %v2252 = vpop.f32.mrb[0].mxu0
        %v2253 = vadd.f32 0.0, %v2252
        %v2254 = vpop.f32.mrb[0].mxu0
        %2255 = vdwg.mxu0
        %2256 = vrot.lane.b32.xlu0 %v469, 48
        %v2257 = vpop.permute.xlu0 %2256
        %v2260 = vsel %vm485, %v2177, 0
        %2262 = vmatprep.subr.mxu0 0.0
        %2263 = vmatpush1.msra.mxu0 %v2257
        %2264 = vmatprep.subr.mxu0 0.0
        %2265 = vmatpush1.msra.mxu0 0.0
        %2266 = vmatprep.subr.mxu0 0.0
        %2267 = vmatpush1.msra.mxu0 0.0
        %2268 = vmatprep.subr.mxu0 0.0
        %2269 = vmatpush1.msra.mxu0 0.0
        %2270 = vmatprep.subr.mxu0 0.0
        %2271 = vmatpush1.msra.mxu0 0.0
        %2272 = vmatprep.subr.mxu0 0.0
        %2273 = vmatpush1.msra.mxu0 0.0
        %2274 = vmatprep.subr.mxu0 0.0
        %2275 = vmatpush1.msra.mxu0 0.0
        %2276 = vmatprep.subr.mxu0 0.0
        %2277 = vmatpush1.msra.mxu0 0.0
        %2278 = vmatprep.subr.mxu0 0.0
        %2279 = vmatpush1.msra.mxu0 0.0
        %2280 = vmatprep.subr.mxu0 0.0
        %2281 = vmatpush1.msra.mxu0 0.0
        %2282 = vmatprep.subr.mxu0 0.0
        %2283 = vmatpush1.msra.mxu0 0.0
        %2284 = vmatprep.subr.mxu0 0.0
        %2285 = vmatpush1.msra.mxu0 0.0
        %2286 = vmatprep.subr.mxu0 0.0
        %2287 = vmatpush1.msra.mxu0 0.0
        %2288 = vmatprep.subr.mxu0 0.0
        %2289 = vmatpush1.msra.mxu0 0.0
        %2290 = vmatprep.subr.mxu0 0.0
        %2291 = vmatpush1.msra.mxu0 0.0
        %2292 = vmatprep.subr.mxu0 0.0
        %2293 = vmatpush1.msra.mxu0 0.0
        %2294 = vmatprep.subr.mxu0 0.0
        %2295 = vmatpush1.msra.mxu0 0.0
        %2296 = vmatprep.subr.mxu0 0.0
        %2297 = vmatpush1.msra.mxu0 0.0
        %2298 = vmatprep.subr.mxu0 0.0
        %2299 = vmatpush1.msra.mxu0 0.0
        %2300 = vmatprep.subr.mxu0 0.0
        %2301 = vmatpush1.msra.mxu0 0.0
        %2302 = vmatprep.subr.mxu0 0.0
        %2303 = vmatpush1.msra.mxu0 0.0
        %2304 = vmatprep.subr.mxu0 0.0
        %2305 = vmatpush1.msra.mxu0 0.0
        %2306 = vmatprep.subr.mxu0 0.0
        %2307 = vmatpush1.msra.mxu0 0.0
        %2308 = vmatprep.subr.mxu0 0.0
        %2309 = vmatpush1.msra.mxu0 0.0
        %2310 = vmatprep.subr.mxu0 0.0
        %2311 = vmatpush1.msra.mxu0 0.0
        %2312 = vmatprep.subr.mxu0 0.0
        %2313 = vmatpush1.msra.mxu0 0.0
        %2314 = vmatprep.subr.mxu0 0.0
        %2315 = vmatpush1.msra.mxu0 0.0
        %2316 = vmatprep.subr.mxu0 0.0
        %2317 = vmatpush1.msra.mxu0 0.0
        %2318 = vmatprep.subr.mxu0 0.0
        %2319 = vmatpush1.msra.mxu0 0.0
        %2320 = vmatprep.subr.mxu0 0.0
        %2321 = vmatpush1.msra.mxu0 0.0
        %2322 = vmatprep.subr.mxu0 0.0
        %2323 = vmatpush1.msra.mxu0 0.0
        %2324 = vmatprep.subr.mxu0 0.0
        %2325 = vmatpush1.msra.mxu0 0.0
        %2326 = vmatprep.mubr.f32.mxu0 0.0
        %2327 = vmatmul.mubr.f32.gmra.mrb[0].mxu0 %v2260
        %v2328 = vpop.f32.mrb[0].mxu0
        %v2329 = vadd.f32 0.0, %v2328
        %v2330 = vpop.f32.mrb[0].mxu0
        %2331 = vdwg.mxu0
        %2332 = vrot.lane.b32.xlu0 %v474, 48
        %v2333 = vpop.permute.xlu0 %2332
        %v2336 = vsel %vm485, %v2178, 0
        %2338 = vmatprep.subr.mxu0 0.0
        %2339 = vmatpush1.msra.mxu0 %v2333
        %2340 = vmatprep.subr.mxu0 0.0
        %2341 = vmatpush1.msra.mxu0 0.0
        %2342 = vmatprep.subr.mxu0 0.0
        %2343 = vmatpush1.msra.mxu0 0.0
        %2344 = vmatprep.subr.mxu0 0.0
        %2345 = vmatpush1.msra.mxu0 0.0
        %2346 = vmatprep.subr.mxu0 0.0
        %2347 = vmatpush1.msra.mxu0 0.0
        %2348 = vmatprep.subr.mxu0 0.0
        %2349 = vmatpush1.msra.mxu0 0.0
        %2350 = vmatprep.subr.mxu0 0.0
        %2351 = vmatpush1.msra.mxu0 0.0
        %2352 = vmatprep.subr.mxu0 0.0
        %2353 = vmatpush1.msra.mxu0 0.0
        %2354 = vmatprep.subr.mxu0 0.0
        %2355 = vmatpush1.msra.mxu0 0.0
        %2356 = vmatprep.subr.mxu0 0.0
        %2357 = vmatpush1.msra.mxu0 0.0
        %2358 = vmatprep.subr.mxu0 0.0
        %2359 = vmatpush1.msra.mxu0 0.0
        %2360 = vmatprep.subr.mxu0 0.0
        %2361 = vmatpush1.msra.mxu0 0.0
        %2362 = vmatprep.subr.mxu0 0.0
        %2363 = vmatpush1.msra.mxu0 0.0
        %2364 = vmatprep.subr.mxu0 0.0
        %2365 = vmatpush1.msra.mxu0 0.0
        %2366 = vmatprep.subr.mxu0 0.0
        %2367 = vmatpush1.msra.mxu0 0.0
        %2368 = vmatprep.subr.mxu0 0.0
        %2369 = vmatpush1.msra.mxu0 0.0
        %2370 = vmatprep.subr.mxu0 0.0
        %2371 = vmatpush1.msra.mxu0 0.0
        %2372 = vmatprep.subr.mxu0 0.0
        %2373 = vmatpush1.msra.mxu0 0.0
        %2374 = vmatprep.subr.mxu0 0.0
        %2375 = vmatpush1.msra.mxu0 0.0
        %2376 = vmatprep.subr.mxu0 0.0
        %2377 = vmatpush1.msra.mxu0 0.0
        %2378 = vmatprep.subr.mxu0 0.0
        %2379 = vmatpush1.msra.mxu0 0.0
        %2380 = vmatprep.subr.mxu0 0.0
        %2381 = vmatpush1.msra.mxu0 0.0
        %2382 = vmatprep.subr.mxu0 0.0
        %2383 = vmatpush1.msra.mxu0 0.0
        %2384 = vmatprep.subr.mxu0 0.0
        %2385 = vmatpush1.msra.mxu0 0.0
        %2386 = vmatprep.subr.mxu0 0.0
        %2387 = vmatpush1.msra.mxu0 0.0
        %2388 = vmatprep.subr.mxu0 0.0
        %2389 = vmatpush1.msra.mxu0 0.0
        %2390 = vmatprep.subr.mxu0 0.0
        %2391 = vmatpush1.msra.mxu0 0.0
        %2392 = vmatprep.subr.mxu0 0.0
        %2393 = vmatpush1.msra.mxu0 0.0
        %2394 = vmatprep.subr.mxu0 0.0
        %2395 = vmatpush1.msra.mxu0 0.0
        %2396 = vmatprep.subr.mxu0 0.0
        %2397 = vmatpush1.msra.mxu0 0.0
        %2398 = vmatprep.subr.mxu0 0.0
        %2399 = vmatpush1.msra.mxu0 0.0
        %2400 = vmatprep.subr.mxu0 0.0
        %2401 = vmatpush1.msra.mxu0 0.0
        %2402 = vmatprep.mubr.f32.mxu0 0.0
        %2403 = vmatmul.mubr.f32.gmra.mrb[0].mxu0 %v2336
        %v2404 = vpop.f32.mrb[0].mxu0
        %v2405 = vadd.f32 0.0, %v2404
        %v2406 = vpop.f32.mrb[0].mxu0
        %2407 = vdwg.mxu0
        %2408 = vrot.lane.b32.xlu0 %v479, 48
        %v2409 = vpop.permute.xlu0 %2408
        %v2412 = vsel %vm485, %v2179, 0
        %2414 = vmatprep.subr.mxu0 0.0
        %2415 = vmatpush1.msra.mxu0 %v2409
        %2416 = vmatprep.subr.mxu0 0.0
        %2417 = vmatpush1.msra.mxu0 0.0
        %2418 = vmatprep.subr.mxu0 0.0
        %2419 = vmatpush1.msra.mxu0 0.0
        %2420 = vmatprep.subr.mxu0 0.0
        %2421 = vmatpush1.msra.mxu0 0.0
        %2422 = vmatprep.subr.mxu0 0.0
        %2423 = vmatpush1.msra.mxu0 0.0
        %2424 = vmatprep.subr.mxu0 0.0
        %2425 = vmatpush1.msra.mxu0 0.0
        %2426 = vmatprep.subr.mxu0 0.0
        %2427 = vmatpush1.msra.mxu0 0.0
        %2428 = vmatprep.subr.mxu0 0.0
        %2429 = vmatpush1.msra.mxu0 0.0
        %2430 = vmatprep.subr.mxu0 0.0
        %2431 = vmatpush1.msra.mxu0 0.0
        %2432 = vmatprep.subr.mxu0 0.0
        %2433 = vmatpush1.msra.mxu0 0.0
        %2434 = vmatprep.subr.mxu0 0.0
        %2435 = vmatpush1.msra.mxu0 0.0
        %2436 = vmatprep.subr.mxu0 0.0
        %2437 = vmatpush1.msra.mxu0 0.0
        %2438 = vmatprep.subr.mxu0 0.0
        %2439 = vmatpush1.msra.mxu0 0.0
        %2440 = vmatprep.subr.mxu0 0.0
        %2441 = vmatpush1.msra.mxu0 0.0
        %2442 = vmatprep.subr.mxu0 0.0
        %2443 = vmatpush1.msra.mxu0 0.0
        %2444 = vmatprep.subr.mxu0 0.0
        %2445 = vmatpush1.msra.mxu0 0.0
        %2446 = vmatprep.subr.mxu0 0.0
        %2447 = vmatpush1.msra.mxu0 0.0
        %2448 = vmatprep.subr.mxu0 0.0
        %2449 = vmatpush1.msra.mxu0 0.0
        %2450 = vmatprep.subr.mxu0 0.0
        %2451 = vmatpush1.msra.mxu0 0.0
        %2452 = vmatprep.subr.mxu0 0.0
        %2453 = vmatpush1.msra.mxu0 0.0
        %2454 = vmatprep.subr.mxu0 0.0
        %2455 = vmatpush1.msra.mxu0 0.0
        %2456 = vmatprep.subr.mxu0 0.0
        %2457 = vmatpush1.msra.mxu0 0.0
        %2458 = vmatprep.subr.mxu0 0.0
        %2459 = vmatpush1.msra.mxu0 0.0
        %2460 = vmatprep.subr.mxu0 0.0
        %2461 = vmatpush1.msra.mxu0 0.0
        %2462 = vmatprep.subr.mxu0 0.0
        %2463 = vmatpush1.msra.mxu0 0.0
        %2464 = vmatprep.subr.mxu0 0.0
        %2465 = vmatpush1.msra.mxu0 0.0
        %2466 = vmatprep.subr.mxu0 0.0
        %2467 = vmatpush1.msra.mxu0 0.0
        %2468 = vmatprep.subr.mxu0 0.0
        %2469 = vmatpush1.msra.mxu0 0.0
        %2470 = vmatprep.subr.mxu0 0.0
        %2471 = vmatpush1.msra.mxu0 0.0
        %2472 = vmatprep.subr.mxu0 0.0
        %2473 = vmatpush1.msra.mxu0 0.0
        %2474 = vmatprep.subr.mxu0 0.0
        %2475 = vmatpush1.msra.mxu0 0.0
        %2476 = vmatprep.subr.mxu0 0.0
        %2477 = vmatpush1.msra.mxu0 0.0
        %2478 = vmatprep.mubr.f32.mxu0 0.0
        %2479 = vmatmul.mubr.f32.gmra.mrb[0].mxu0 %v2412
        %v2480 = vpop.f32.mrb[0].mxu0
        %v2481 = vadd.f32 0.0, %v2480
        %v2482 = vpop.f32.mrb[0].mxu0
        %2483 = vdwg.mxu0
        %2488 = vrot.lane.b32.xlu0 %v2253, 16
        %v2489 = vpop.permute.xlu0 %2488
        %2490 = vrot.lane.b32.xlu0 %v2329, 16
        %v2491 = vpop.permute.xlu0 %2490
        %2492 = vrot.lane.b32.xlu0 %v2405, 16
        %v2493 = vpop.permute.xlu0 %2492
        %2494 = vrot.lane.b32.xlu0 %v2481, 16
        %v2495 = vpop.permute.xlu0 %2494
        %vm2500 = vcmask 195712
        %2501 = vst.msk [vmem:[#allocation2] sm:$0xff] %vm2500, %v2489
        %2502 = vst.msk [vmem:[#allocation2 + $0x8] sm:$0xff] %vm2500, %v2491
        %2503 = vst.msk [vmem:[#allocation2 + $0x10] sm:$0xff] %vm2500, %v2493
        %2504 = vst.msk [vmem:[#allocation2 + $0x18] sm:$0xff] %vm2500, %v2495
        %2505 = vrot.lane.b32.xlu0 %v464, 104
        %v2506 = vpop.permute.xlu0 %2505
        %2507 = vrot.lane.b32.xlu0 %v464, 72
        %v2508 = vpop.permute.xlu0 %2507
        %v2509 = vsel %vm485, %v2506, 0
        %v2511 = vsel %vm485, %v2508, 0
        %2513 = vmatprep.subr.mxu0 0.0
        %2514 = vmatpush1.xpose.msra.mxu0 %v2511
        %2515 = vmatprep.subr.mxu0 0.0
        %2516 = vmatpush1.xpose.msra.mxu0 0.0
        %2517 = vmatprep.subr.mxu0 0.0
        %2518 = vmatpush1.xpose.msra.mxu0 0.0
        %2519 = vmatprep.subr.mxu0 0.0
        %2520 = vmatpush1.xpose.msra.mxu0 0.0
        %2521 = vmatprep.subr.mxu0 0.0
        %2522 = vmatpush1.xpose.msra.mxu0 0.0
        %2523 = vmatprep.subr.mxu0 0.0
        %2524 = vmatpush1.xpose.msra.mxu0 0.0
        %2525 = vmatprep.subr.mxu0 0.0
        %2526 = vmatpush1.xpose.msra.mxu0 0.0
        %2527 = vmatprep.subr.mxu0 0.0
        %2528 = vmatpush1.xpose.msra.mxu0 0.0
        %2529 = vmatprep.subr.mxu0 0.0
        %2530 = vmatpush1.xpose.msra.mxu0 0.0
        %2531 = vmatprep.subr.mxu0 0.0
        %2532 = vmatpush1.xpose.msra.mxu0 0.0
        %2533 = vmatprep.subr.mxu0 0.0
        %2534 = vmatpush1.xpose.msra.mxu0 0.0
        %2535 = vmatprep.subr.mxu0 0.0
        %2536 = vmatpush1.xpose.msra.mxu0 0.0
        %2537 = vmatprep.subr.mxu0 0.0
        %2538 = vmatpush1.xpose.msra.mxu0 0.0
        %2539 = vmatprep.subr.mxu0 0.0
        %2540 = vmatpush1.xpose.msra.mxu0 0.0
        %2541 = vmatprep.subr.mxu0 0.0
        %2542 = vmatpush1.xpose.msra.mxu0 0.0
        %2543 = vmatprep.subr.mxu0 0.0
        %2544 = vmatpush1.xpose.msra.mxu0 0.0
        %2545 = vmatprep.subr.mxu0 0.0
        %2546 = vmatpush1.xpose.msra.mxu0 0.0
        %2547 = vmatprep.subr.mxu0 0.0
        %2548 = vmatpush1.xpose.msra.mxu0 0.0
        %2549 = vmatprep.subr.mxu0 0.0
        %2550 = vmatpush1.xpose.msra.mxu0 0.0
        %2551 = vmatprep.subr.mxu0 0.0
        %2552 = vmatpush1.xpose.msra.mxu0 0.0
        %2553 = vmatprep.subr.mxu0 0.0
        %2554 = vmatpush1.xpose.msra.mxu0 0.0
        %2555 = vmatprep.subr.mxu0 0.0
        %2556 = vmatpush1.xpose.msra.mxu0 0.0
        %2557 = vmatprep.subr.mxu0 0.0
        %2558 = vmatpush1.xpose.msra.mxu0 0.0
        %2559 = vmatprep.subr.mxu0 0.0
        %2560 = vmatpush1.xpose.msra.mxu0 0.0
        %2561 = vmatprep.subr.mxu0 0.0
        %2562 = vmatpush1.xpose.msra.mxu0 0.0
        %2563 = vmatprep.subr.mxu0 0.0
        %2564 = vmatpush1.xpose.msra.mxu0 0.0
        %2565 = vmatprep.subr.mxu0 0.0
        %2566 = vmatpush1.xpose.msra.mxu0 0.0
        %2567 = vmatprep.subr.mxu0 0.0
        %2568 = vmatpush1.xpose.msra.mxu0 0.0
        %2569 = vmatprep.subr.mxu0 0.0
        %2570 = vmatpush1.xpose.msra.mxu0 0.0
        %2571 = vmatprep.subr.mxu0 0.0
        %2572 = vmatpush1.xpose.msra.mxu0 0.0
        %2573 = vmatprep.subr.mxu0 0.0
        %2574 = vmatpush1.xpose.msra.mxu0 0.0
        %2575 = vmatprep.subr.mxu0 0.0
        %2576 = vmatpush1.xpose.msra.mxu0 0.0
        %2577 = vmatprep.mubr.f32.mxu0 0.0
        %2578 = vmatmul.mubr.f32.gmra.mrb[0].mxu0 %v2509
        %v2579 = vpop.f32.mrb[0].mxu0
        %v2580 = vadd.f32 0.0, %v2579
        %v2581 = vpop.f32.mrb[0].mxu0
        %2582 = vdwg.mxu0
        %2583 = vrot.lane.b32.xlu0 %v469, 104
        %v2584 = vpop.permute.xlu0 %2583
        %2585 = vrot.lane.b32.xlu0 %v469, 72
        %v2586 = vpop.permute.xlu0 %2585
        %v2587 = vsel %vm485, %v2584, 0
        %v2589 = vsel %vm485, %v2586, 0
        %2591 = vmatprep.subr.mxu0 0.0
        %2592 = vmatpush1.xpose.msra.mxu0 %v2589
        %2593 = vmatprep.subr.mxu0 0.0
        %2594 = vmatpush1.xpose.msra.mxu0 0.0
        %2595 = vmatprep.subr.mxu0 0.0
        %2596 = vmatpush1.xpose.msra.mxu0 0.0
        %2597 = vmatprep.subr.mxu0 0.0
        %2598 = vmatpush1.xpose.msra.mxu0 0.0
        %2599 = vmatprep.subr.mxu0 0.0
        %2600 = vmatpush1.xpose.msra.mxu0 0.0
        %2601 = vmatprep.subr.mxu0 0.0
        %2602 = vmatpush1.xpose.msra.mxu0 0.0
        %2603 = vmatprep.subr.mxu0 0.0
        %2604 = vmatpush1.xpose.msra.mxu0 0.0
        %2605 = vmatprep.subr.mxu0 0.0
        %2606 = vmatpush1.xpose.msra.mxu0 0.0
        %2607 = vmatprep.subr.mxu0 0.0
        %2608 = vmatpush1.xpose.msra.mxu0 0.0
        %2609 = vmatprep.subr.mxu0 0.0
        %2610 = vmatpush1.xpose.msra.mxu0 0.0
        %2611 = vmatprep.subr.mxu0 0.0
        %2612 = vmatpush1.xpose.msra.mxu0 0.0
        %2613 = vmatprep.subr.mxu0 0.0
        %2614 = vmatpush1.xpose.msra.mxu0 0.0
        %2615 = vmatprep.subr.mxu0 0.0
        %2616 = vmatpush1.xpose.msra.mxu0 0.0
        %2617 = vmatprep.subr.mxu0 0.0
        %2618 = vmatpush1.xpose.msra.mxu0 0.0
        %2619 = vmatprep.subr.mxu0 0.0
        %2620 = vmatpush1.xpose.msra.mxu0 0.0
        %2621 = vmatprep.subr.mxu0 0.0
        %2622 = vmatpush1.xpose.msra.mxu0 0.0
        %2623 = vmatprep.subr.mxu0 0.0
        %2624 = vmatpush1.xpose.msra.mxu0 0.0
        %2625 = vmatprep.subr.mxu0 0.0
        %2626 = vmatpush1.xpose.msra.mxu0 0.0
        %2627 = vmatprep.subr.mxu0 0.0
        %2628 = vmatpush1.xpose.msra.mxu0 0.0
        %2629 = vmatprep.subr.mxu0 0.0
        %2630 = vmatpush1.xpose.msra.mxu0 0.0
        %2631 = vmatprep.subr.mxu0 0.0
        %2632 = vmatpush1.xpose.msra.mxu0 0.0
        %2633 = vmatprep.subr.mxu0 0.0
        %2634 = vmatpush1.xpose.msra.mxu0 0.0
        %2635 = vmatprep.subr.mxu0 0.0
        %2636 = vmatpush1.xpose.msra.mxu0 0.0
        %2637 = vmatprep.subr.mxu0 0.0
        %2638 = vmatpush1.xpose.msra.mxu0 0.0
        %2639 = vmatprep.subr.mxu0 0.0
        %2640 = vmatpush1.xpose.msra.mxu0 0.0
        %2641 = vmatprep.subr.mxu0 0.0
        %2642 = vmatpush1.xpose.msra.mxu0 0.0
        %2643 = vmatprep.subr.mxu0 0.0
        %2644 = vmatpush1.xpose.msra.mxu0 0.0
        %2645 = vmatprep.subr.mxu0 0.0
        %2646 = vmatpush1.xpose.msra.mxu0 0.0
        %2647 = vmatprep.subr.mxu0 0.0
        %2648 = vmatpush1.xpose.msra.mxu0 0.0
        %2649 = vmatprep.subr.mxu0 0.0
        %2650 = vmatpush1.xpose.msra.mxu0 0.0
        %2651 = vmatprep.subr.mxu0 0.0
        %2652 = vmatpush1.xpose.msra.mxu0 0.0
        %2653 = vmatprep.subr.mxu0 0.0
        %2654 = vmatpush1.xpose.msra.mxu0 0.0
        %2655 = vmatprep.mubr.f32.mxu0 0.0
        %2656 = vmatmul.mubr.f32.gmra.mrb[0].mxu0 %v2587
        %v2657 = vpop.f32.mrb[0].mxu0
        %v2658 = vadd.f32 0.0, %v2657
        %v2659 = vpop.f32.mrb[0].mxu0
        %2660 = vdwg.mxu0
        %2661 = vrot.lane.b32.xlu0 %v474, 104
        %v2662 = vpop.permute.xlu0 %2661
        %2663 = vrot.lane.b32.xlu0 %v474, 72
        %v2664 = vpop.permute.xlu0 %2663
        %v2665 = vsel %vm485, %v2662, 0
        %v2667 = vsel %vm485, %v2664, 0
        %2669 = vmatprep.subr.mxu0 0.0
        %2670 = vmatpush1.xpose.msra.mxu0 %v2667
        %2671 = vmatprep.subr.mxu0 0.0
        %2672 = vmatpush1.xpose.msra.mxu0 0.0
        %2673 = vmatprep.subr.mxu0 0.0
        %2674 = vmatpush1.xpose.msra.mxu0 0.0
        %2675 = vmatprep.subr.mxu0 0.0
        %2676 = vmatpush1.xpose.msra.mxu0 0.0
        %2677 = vmatprep.subr.mxu0 0.0
        %2678 = vmatpush1.xpose.msra.mxu0 0.0
        %2679 = vmatprep.subr.mxu0 0.0
        %2680 = vmatpush1.xpose.msra.mxu0 0.0
        %2681 = vmatprep.subr.mxu0 0.0
        %2682 = vmatpush1.xpose.msra.mxu0 0.0
        %2683 = vmatprep.subr.mxu0 0.0
        %2684 = vmatpush1.xpose.msra.mxu0 0.0
        %2685 = vmatprep.subr.mxu0 0.0
        %2686 = vmatpush1.xpose.msra.mxu0 0.0
        %2687 = vmatprep.subr.mxu0 0.0
        %2688 = vmatpush1.xpose.msra.mxu0 0.0
        %2689 = vmatprep.subr.mxu0 0.0
        %2690 = vmatpush1.xpose.msra.mxu0 0.0
        %2691 = vmatprep.subr.mxu0 0.0
        %2692 = vmatpush1.xpose.msra.mxu0 0.0
        %2693 = vmatprep.subr.mxu0 0.0
        %2694 = vmatpush1.xpose.msra.mxu0 0.0
        %2695 = vmatprep.subr.mxu0 0.0
        %2696 = vmatpush1.xpose.msra.mxu0 0.0
        %2697 = vmatprep.subr.mxu0 0.0
        %2698 = vmatpush1.xpose.msra.mxu0 0.0
        %2699 = vmatprep.subr.mxu0 0.0
        %2700 = vmatpush1.xpose.msra.mxu0 0.0
        %2701 = vmatprep.subr.mxu0 0.0
        %2702 = vmatpush1.xpose.msra.mxu0 0.0
        %2703 = vmatprep.subr.mxu0 0.0
        %2704 = vmatpush1.xpose.msra.mxu0 0.0
        %2705 = vmatprep.subr.mxu0 0.0
        %2706 = vmatpush1.xpose.msra.mxu0 0.0
        %2707 = vmatprep.subr.mxu0 0.0
        %2708 = vmatpush1.xpose.msra.mxu0 0.0
        %2709 = vmatprep.subr.mxu0 0.0
        %2710 = vmatpush1.xpose.msra.mxu0 0.0
        %2711 = vmatprep.subr.mxu0 0.0
        %2712 = vmatpush1.xpose.msra.mxu0 0.0
        %2713 = vmatprep.subr.mxu0 0.0
        %2714 = vmatpush1.xpose.msra.mxu0 0.0
        %2715 = vmatprep.subr.mxu0 0.0
        %2716 = vmatpush1.xpose.msra.mxu0 0.0
        %2717 = vmatprep.subr.mxu0 0.0
        %2718 = vmatpush1.xpose.msra.mxu0 0.0
        %2719 = vmatprep.subr.mxu0 0.0
        %2720 = vmatpush1.xpose.msra.mxu0 0.0
        %2721 = vmatprep.subr.mxu0 0.0
        %2722 = vmatpush1.xpose.msra.mxu0 0.0
        %2723 = vmatprep.subr.mxu0 0.0
        %2724 = vmatpush1.xpose.msra.mxu0 0.0
        %2725 = vmatprep.subr.mxu0 0.0
        %2726 = vmatpush1.xpose.msra.mxu0 0.0
        %2727 = vmatprep.subr.mxu0 0.0
        %2728 = vmatpush1.xpose.msra.mxu0 0.0
        %2729 = vmatprep.subr.mxu0 0.0
        %2730 = vmatpush1.xpose.msra.mxu0 0.0
        %2731 = vmatprep.subr.mxu0 0.0
        %2732 = vmatpush1.xpose.msra.mxu0 0.0
        %2733 = vmatprep.mubr.f32.mxu0 0.0
        %2734 = vmatmul.mubr.f32.gmra.mrb[0].mxu0 %v2665
        %v2735 = vpop.f32.mrb[0].mxu0
        %v2736 = vadd.f32 0.0, %v2735
        %v2737 = vpop.f32.mrb[0].mxu0
        %2738 = vdwg.mxu0
        %2739 = vrot.lane.b32.xlu0 %v479, 104
        %v2740 = vpop.permute.xlu0 %2739
        %2741 = vrot.lane.b32.xlu0 %v479, 72
        %v2742 = vpop.permute.xlu0 %2741
        %v2743 = vsel %vm485, %v2740, 0
        %v2745 = vsel %vm485, %v2742, 0
        %2747 = vmatprep.subr.mxu0 0.0
        %2748 = vmatpush1.xpose.msra.mxu0 %v2745
        %2749 = vmatprep.subr.mxu0 0.0
        %2750 = vmatpush1.xpose.msra.mxu0 0.0
        %2751 = vmatprep.subr.mxu0 0.0
        %2752 = vmatpush1.xpose.msra.mxu0 0.0
        %2753 = vmatprep.subr.mxu0 0.0
        %2754 = vmatpush1.xpose.msra.mxu0 0.0
        %2755 = vmatprep.subr.mxu0 0.0
        %2756 = vmatpush1.xpose.msra.mxu0 0.0
        %2757 = vmatprep.subr.mxu0 0.0
        %2758 = vmatpush1.xpose.msra.mxu0 0.0
        %2759 = vmatprep.subr.mxu0 0.0
        %2760 = vmatpush1.xpose.msra.mxu0 0.0
        %2761 = vmatprep.subr.mxu0 0.0
        %2762 = vmatpush1.xpose.msra.mxu0 0.0
        %2763 = vmatprep.subr.mxu0 0.0
        %2764 = vmatpush1.xpose.msra.mxu0 0.0
        %2765 = vmatprep.subr.mxu0 0.0
        %2766 = vmatpush1.xpose.msra.mxu0 0.0
        %2767 = vmatprep.subr.mxu0 0.0
        %2768 = vmatpush1.xpose.msra.mxu0 0.0
        %2769 = vmatprep.subr.mxu0 0.0
        %2770 = vmatpush1.xpose.msra.mxu0 0.0
        %2771 = vmatprep.subr.mxu0 0.0
        %2772 = vmatpush1.xpose.msra.mxu0 0.0
        %2773 = vmatprep.subr.mxu0 0.0
        %2774 = vmatpush1.xpose.msra.mxu0 0.0
        %2775 = vmatprep.subr.mxu0 0.0
        %2776 = vmatpush1.xpose.msra.mxu0 0.0
        %2777 = vmatprep.subr.mxu0 0.0
        %2778 = vmatpush1.xpose.msra.mxu0 0.0
        %2779 = vmatprep.subr.mxu0 0.0
        %2780 = vmatpush1.xpose.msra.mxu0 0.0
        %2781 = vmatprep.subr.mxu0 0.0
        %2782 = vmatpush1.xpose.msra.mxu0 0.0
        %2783 = vmatprep.subr.mxu0 0.0
        %2784 = vmatpush1.xpose.msra.mxu0 0.0
        %2785 = vmatprep.subr.mxu0 0.0
        %2786 = vmatpush1.xpose.msra.mxu0 0.0
        %2787 = vmatprep.subr.mxu0 0.0
        %2788 = vmatpush1.xpose.msra.mxu0 0.0
        %2789 = vmatprep.subr.mxu0 0.0
        %2790 = vmatpush1.xpose.msra.mxu0 0.0
        %2791 = vmatprep.subr.mxu0 0.0
        %2792 = vmatpush1.xpose.msra.mxu0 0.0
        %2793 = vmatprep.subr.mxu0 0.0
        %2794 = vmatpush1.xpose.msra.mxu0 0.0
        %2795 = vmatprep.subr.mxu0 0.0
        %2796 = vmatpush1.xpose.msra.mxu0 0.0
        %2797 = vmatprep.subr.mxu0 0.0
        %2798 = vmatpush1.xpose.msra.mxu0 0.0
        %2799 = vmatprep.subr.mxu0 0.0
        %2800 = vmatpush1.xpose.msra.mxu0 0.0
        %2801 = vmatprep.subr.mxu0 0.0
        %2802 = vmatpush1.xpose.msra.mxu0 0.0
        %2803 = vmatprep.subr.mxu0 0.0
        %2804 = vmatpush1.xpose.msra.mxu0 0.0
        %2805 = vmatprep.subr.mxu0 0.0
        %2806 = vmatpush1.xpose.msra.mxu0 0.0
        %2807 = vmatprep.subr.mxu0 0.0
        %2808 = vmatpush1.xpose.msra.mxu0 0.0
        %2809 = vmatprep.subr.mxu0 0.0
        %2810 = vmatpush1.xpose.msra.mxu0 0.0
        %2811 = vmatprep.mubr.f32.mxu0 0.0
        %2812 = vmatmul.mubr.f32.gmra.mrb[0].mxu0 %v2743
        %v2813 = vpop.f32.mrb[0].mxu0
        %v2814 = vadd.f32 0.0, %v2813
        %v2815 = vpop.f32.mrb[0].mxu0
        %2816 = vdwg.mxu0
        %v2817 = vsel %vm485, %v2580, -inf
        %2818 = vmax.xlane.f32.xlu0 %v2817
        %v2819 = vpop.xlane.xlu0 %2818
        %v2820 = vsel %vm485, %v2658, -inf
        %2821 = vmax.xlane.f32.xlu0 %v2820
        %v2822 = vpop.xlane.xlu0 %2821
        %v2823 = vsel %vm485, %v2736, -inf
        %2824 = vmax.xlane.f32.xlu0 %v2823
        %v2825 = vpop.xlane.xlu0 %2824
        %v2826 = vsel %vm485, %v2814, -inf
        %2827 = vmax.xlane.f32.xlu0 %v2826
        %v2828 = vpop.xlane.xlu0 %2827
        %v2829 = vsub.f32 %v2580, %v2819
        %v2830 = vsub.f32 %v2658, %v2822
        %v2831 = vsub.f32 %v2736, %v2825
        %v2832 = vsub.f32 %v2814, %v2828
        %v2833 = vmul.f32 %v2829, 1.442695
        %v2834 = vpow.pop %v2833
        %v2835 = vmul.f32 %v2830, 1.442695
        %v2836 = vpow.pop %v2835
        %v2837 = vmul.f32 %v2831, 1.442695
        %v2838 = vpow.pop %v2837
        %v2839 = vmul.f32 %v2832, 1.442695
        %v2840 = vpow.pop %v2839
        %v2841 = vsel %vm485, %v2834, 0.0
        %2842 = vadd.xlane.f32.xlu0 %v2841
        %v2843 = vpop.xlane.xlu0 %2842
        %v2844 = vsel %vm485, %v2836, 0.0
        %2845 = vadd.xlane.f32.xlu0 %v2844
        %v2846 = vpop.xlane.xlu0 %2845
        %v2847 = vsel %vm485, %v2838, 0.0
        %2848 = vadd.xlane.f32.xlu0 %v2847
        %v2849 = vpop.xlane.xlu0 %2848
        %v2850 = vsel %vm485, %v2840, 0.0
        %2851 = vadd.xlane.f32.xlu0 %v2850
        %v2852 = vpop.xlane.xlu0 %2851
        %v2853 = vrcp.pop %v2843
        %v2854 = vrcp.pop %v2846
        %v2855 = vrcp.pop %v2849
        %v2856 = vrcp.pop %v2852
        %v2857 = vmul.f32 %v2834, %v2853
        %v2858 = vmul.f32 %v2836, %v2854
        %v2859 = vmul.f32 %v2838, %v2855
        %v2860 = vmul.f32 %v2840, %v2856
        %2861 = vrot.lane.b32.xlu0 %v464, 40
        %v2862 = vpop.permute.xlu0 %2861
        %v2865 = vsel %vm485, %v2857, 0
        %2867 = vmatprep.subr.mxu0 0.0
        %2868 = vmatpush1.msra.mxu0 %v2862
        %2869 = vmatprep.subr.mxu0 0.0
        %2870 = vmatpush1.msra.mxu0 0.0
        %2871 = vmatprep.subr.mxu0 0.0
        %2872 = vmatpush1.msra.mxu0 0.0
        %2873 = vmatprep.subr.mxu0 0.0
        %2874 = vmatpush1.msra.mxu0 0.0
        %2875 = vmatprep.subr.mxu0 0.0
        %2876 = vmatpush1.msra.mxu0 0.0
        %2877 = vmatprep.subr.mxu0 0.0
        %2878 = vmatpush1.msra.mxu0 0.0
        %2879 = vmatprep.subr.mxu0 0.0
        %2880 = vmatpush1.msra.mxu0 0.0
        %2881 = vmatprep.subr.mxu0 0.0
        %2882 = vmatpush1.msra.mxu0 0.0
        %2883 = vmatprep.subr.mxu0 0.0
        %2884 = vmatpush1.msra.mxu0 0.0
        %2885 = vmatprep.subr.mxu0 0.0
        %2886 = vmatpush1.msra.mxu0 0.0
        %2887 = vmatprep.subr.mxu0 0.0
        %2888 = vmatpush1.msra.mxu0 0.0
        %2889 = vmatprep.subr.mxu0 0.0
        %2890 = vmatpush1.msra.mxu0 0.0
        %2891 = vmatprep.subr.mxu0 0.0
        %2892 = vmatpush1.msra.mxu0 0.0
        %2893 = vmatprep.subr.mxu0 0.0
        %2894 = vmatpush1.msra.mxu0 0.0
        %2895 = vmatprep.subr.mxu0 0.0
        %2896 = vmatpush1.msra.mxu0 0.0
        %2897 = vmatprep.subr.mxu0 0.0
        %2898 = vmatpush1.msra.mxu0 0.0
        %2899 = vmatprep.subr.mxu0 0.0
        %2900 = vmatpush1.msra.mxu0 0.0
        %2901 = vmatprep.subr.mxu0 0.0
        %2902 = vmatpush1.msra.mxu0 0.0
        %2903 = vmatprep.subr.mxu0 0.0
        %2904 = vmatpush1.msra.mxu0 0.0
        %2905 = vmatprep.subr.mxu0 0.0
        %2906 = vmatpush1.msra.mxu0 0.0
        %2907 = vmatprep.subr.mxu0 0.0
        %2908 = vmatpush1.msra.mxu0 0.0
        %2909 = vmatprep.subr.mxu0 0.0
        %2910 = vmatpush1.msra.mxu0 0.0
        %2911 = vmatprep.subr.mxu0 0.0
        %2912 = vmatpush1.msra.mxu0 0.0
        %2913 = vmatprep.subr.mxu0 0.0
        %2914 = vmatpush1.msra.mxu0 0.0
        %2915 = vmatprep.subr.mxu0 0.0
        %2916 = vmatpush1.msra.mxu0 0.0
        %2917 = vmatprep.subr.mxu0 0.0
        %2918 = vmatpush1.msra.mxu0 0.0
        %2919 = vmatprep.subr.mxu0 0.0
        %2920 = vmatpush1.msra.mxu0 0.0
        %2921 = vmatprep.subr.mxu0 0.0
        %2922 = vmatpush1.msra.mxu0 0.0
        %2923 = vmatprep.subr.mxu0 0.0
        %2924 = vmatpush1.msra.mxu0 0.0
        %2925 = vmatprep.subr.mxu0 0.0
        %2926 = vmatpush1.msra.mxu0 0.0
        %2927 = vmatprep.subr.mxu0 0.0
        %2928 = vmatpush1.msra.mxu0 0.0
        %2929 = vmatprep.subr.mxu0 0.0
        %2930 = vmatpush1.msra.mxu0 0.0
        %2931 = vmatprep.mubr.f32.mxu0 0.0
        %2932 = vmatmul.mubr.f32.gmra.mrb[0].mxu0 %v2865
        %v2933 = vpop.f32.mrb[0].mxu0
        %v2934 = vadd.f32 0.0, %v2933
        %v2935 = vpop.f32.mrb[0].mxu0
        %2936 = vdwg.mxu0
        %2937 = vrot.lane.b32.xlu0 %v469, 40
        %v2938 = vpop.permute.xlu0 %2937
        %v2941 = vsel %vm485, %v2858, 0
        %2943 = vmatprep.subr.mxu0 0.0
        %2944 = vmatpush1.msra.mxu0 %v2938
        %2945 = vmatprep.subr.mxu0 0.0
        %2946 = vmatpush1.msra.mxu0 0.0
        %2947 = vmatprep.subr.mxu0 0.0
        %2948 = vmatpush1.msra.mxu0 0.0
        %2949 = vmatprep.subr.mxu0 0.0
        %2950 = vmatpush1.msra.mxu0 0.0
        %2951 = vmatprep.subr.mxu0 0.0
        %2952 = vmatpush1.msra.mxu0 0.0
        %2953 = vmatprep.subr.mxu0 0.0
        %2954 = vmatpush1.msra.mxu0 0.0
        %2955 = vmatprep.subr.mxu0 0.0
        %2956 = vmatpush1.msra.mxu0 0.0
        %2957 = vmatprep.subr.mxu0 0.0
        %2958 = vmatpush1.msra.mxu0 0.0
        %2959 = vmatprep.subr.mxu0 0.0
        %2960 = vmatpush1.msra.mxu0 0.0
        %2961 = vmatprep.subr.mxu0 0.0
        %2962 = vmatpush1.msra.mxu0 0.0
        %2963 = vmatprep.subr.mxu0 0.0
        %2964 = vmatpush1.msra.mxu0 0.0
        %2965 = vmatprep.subr.mxu0 0.0
        %2966 = vmatpush1.msra.mxu0 0.0
        %2967 = vmatprep.subr.mxu0 0.0
        %2968 = vmatpush1.msra.mxu0 0.0
        %2969 = vmatprep.subr.mxu0 0.0
        %2970 = vmatpush1.msra.mxu0 0.0
        %2971 = vmatprep.subr.mxu0 0.0
        %2972 = vmatpush1.msra.mxu0 0.0
        %2973 = vmatprep.subr.mxu0 0.0
        %2974 = vmatpush1.msra.mxu0 0.0
        %2975 = vmatprep.subr.mxu0 0.0
        %2976 = vmatpush1.msra.mxu0 0.0
        %2977 = vmatprep.subr.mxu0 0.0
        %2978 = vmatpush1.msra.mxu0 0.0
        %2979 = vmatprep.subr.mxu0 0.0
        %2980 = vmatpush1.msra.mxu0 0.0
        %2981 = vmatprep.subr.mxu0 0.0
        %2982 = vmatpush1.msra.mxu0 0.0
        %2983 = vmatprep.subr.mxu0 0.0
        %2984 = vmatpush1.msra.mxu0 0.0
        %2985 = vmatprep.subr.mxu0 0.0
        %2986 = vmatpush1.msra.mxu0 0.0
        %2987 = vmatprep.subr.mxu0 0.0
        %2988 = vmatpush1.msra.mxu0 0.0
        %2989 = vmatprep.subr.mxu0 0.0
        %2990 = vmatpush1.msra.mxu0 0.0
        %2991 = vmatprep.subr.mxu0 0.0
        %2992 = vmatpush1.msra.mxu0 0.0
        %2993 = vmatprep.subr.mxu0 0.0
        %2994 = vmatpush1.msra.mxu0 0.0
        %2995 = vmatprep.subr.mxu0 0.0
        %2996 = vmatpush1.msra.mxu0 0.0
        %2997 = vmatprep.subr.mxu0 0.0
        %2998 = vmatpush1.msra.mxu0 0.0
        %2999 = vmatprep.subr.mxu0 0.0
        %3000 = vmatpush1.msra.mxu0 0.0
        %3001 = vmatprep.subr.mxu0 0.0
        %3002 = vmatpush1.msra.mxu0 0.0
        %3003 = vmatprep.subr.mxu0 0.0
        %3004 = vmatpush1.msra.mxu0 0.0
        %3005 = vmatprep.subr.mxu0 0.0
        %3006 = vmatpush1.msra.mxu0 0.0
        %3007 = vmatprep.mubr.f32.mxu0 0.0
        %3008 = vmatmul.mubr.f32.gmra.mrb[0].mxu0 %v2941
        %v3009 = vpop.f32.mrb[0].mxu0
        %v3010 = vadd.f32 0.0, %v3009
        %v3011 = vpop.f32.mrb[0].mxu0
        %3012 = vdwg.mxu0
        %3013 = vrot.lane.b32.xlu0 %v474, 40
        %v3014 = vpop.permute.xlu0 %3013
        %v3017 = vsel %vm485, %v2859, 0
        %3019 = vmatprep.subr.mxu0 0.0
        %3020 = vmatpush1.msra.mxu0 %v3014
        %3021 = vmatprep.subr.mxu0 0.0
        %3022 = vmatpush1.msra.mxu0 0.0
        %3023 = vmatprep.subr.mxu0 0.0
        %3024 = vmatpush1.msra.mxu0 0.0
        %3025 = vmatprep.subr.mxu0 0.0
        %3026 = vmatpush1.msra.mxu0 0.0
        %3027 = vmatprep.subr.mxu0 0.0
        %3028 = vmatpush1.msra.mxu0 0.0
        %3029 = vmatprep.subr.mxu0 0.0
        %3030 = vmatpush1.msra.mxu0 0.0
        %3031 = vmatprep.subr.mxu0 0.0
        %3032 = vmatpush1.msra.mxu0 0.0
        %3033 = vmatprep.subr.mxu0 0.0
        %3034 = vmatpush1.msra.mxu0 0.0
        %3035 = vmatprep.subr.mxu0 0.0
        %3036 = vmatpush1.msra.mxu0 0.0
        %3037 = vmatprep.subr.mxu0 0.0
        %3038 = vmatpush1.msra.mxu0 0.0
        %3039 = vmatprep.subr.mxu0 0.0
        %3040 = vmatpush1.msra.mxu0 0.0
        %3041 = vmatprep.subr.mxu0 0.0
        %3042 = vmatpush1.msra.mxu0 0.0
        %3043 = vmatprep.subr.mxu0 0.0
        %3044 = vmatpush1.msra.mxu0 0.0
        %3045 = vmatprep.subr.mxu0 0.0
        %3046 = vmatpush1.msra.mxu0 0.0
        %3047 = vmatprep.subr.mxu0 0.0
        %3048 = vmatpush1.msra.mxu0 0.0
        %3049 = vmatprep.subr.mxu0 0.0
        %3050 = vmatpush1.msra.mxu0 0.0
        %3051 = vmatprep.subr.mxu0 0.0
        %3052 = vmatpush1.msra.mxu0 0.0
        %3053 = vmatprep.subr.mxu0 0.0
        %3054 = vmatpush1.msra.mxu0 0.0
        %3055 = vmatprep.subr.mxu0 0.0
        %3056 = vmatpush1.msra.mxu0 0.0
        %3057 = vmatprep.subr.mxu0 0.0
        %3058 = vmatpush1.msra.mxu0 0.0
        %3059 = vmatprep.subr.mxu0 0.0
        %3060 = vmatpush1.msra.mxu0 0.0
        %3061 = vmatprep.subr.mxu0 0.0
        %3062 = vmatpush1.msra.mxu0 0.0
        %3063 = vmatprep.subr.mxu0 0.0
        %3064 = vmatpush1.msra.mxu0 0.0
        %3065 = vmatprep.subr.mxu0 0.0
        %3066 = vmatpush1.msra.mxu0 0.0
        %3067 = vmatprep.subr.mxu0 0.0
        %3068 = vmatpush1.msra.mxu0 0.0
        %3069 = vmatprep.subr.mxu0 0.0
        %3070 = vmatpush1.msra.mxu0 0.0
        %3071 = vmatprep.subr.mxu0 0.0
        %3072 = vmatpush1.msra.mxu0 0.0
        %3073 = vmatprep.subr.mxu0 0.0
        %3074 = vmatpush1.msra.mxu0 0.0
        %3075 = vmatprep.subr.mxu0 0.0
        %3076 = vmatpush1.msra.mxu0 0.0
        %3077 = vmatprep.subr.mxu0 0.0
        %3078 = vmatpush1.msra.mxu0 0.0
        %3079 = vmatprep.subr.mxu0 0.0
        %3080 = vmatpush1.msra.mxu0 0.0
        %3081 = vmatprep.subr.mxu0 0.0
        %3082 = vmatpush1.msra.mxu0 0.0
        %3083 = vmatprep.mubr.f32.mxu0 0.0
        %3084 = vmatmul.mubr.f32.gmra.mrb[0].mxu0 %v3017
        %v3085 = vpop.f32.mrb[0].mxu0
        %v3086 = vadd.f32 0.0, %v3085
        %v3087 = vpop.f32.mrb[0].mxu0
        %3088 = vdwg.mxu0
        %3089 = vrot.lane.b32.xlu0 %v479, 40
        %v3090 = vpop.permute.xlu0 %3089
        %v3093 = vsel %vm485, %v2860, 0
        %3095 = vmatprep.subr.mxu0 0.0
        %3096 = vmatpush1.msra.mxu0 %v3090
        %3097 = vmatprep.subr.mxu0 0.0
        %3098 = vmatpush1.msra.mxu0 0.0
        %3099 = vmatprep.subr.mxu0 0.0
        %3100 = vmatpush1.msra.mxu0 0.0
        %3101 = vmatprep.subr.mxu0 0.0
        %3102 = vmatpush1.msra.mxu0 0.0
        %3103 = vmatprep.subr.mxu0 0.0
        %3104 = vmatpush1.msra.mxu0 0.0
        %3105 = vmatprep.subr.mxu0 0.0
        %3106 = vmatpush1.msra.mxu0 0.0
        %3107 = vmatprep.subr.mxu0 0.0
        %3108 = vmatpush1.msra.mxu0 0.0
        %3109 = vmatprep.subr.mxu0 0.0
        %3110 = vmatpush1.msra.mxu0 0.0
        %3111 = vmatprep.subr.mxu0 0.0
        %3112 = vmatpush1.msra.mxu0 0.0
        %3113 = vmatprep.subr.mxu0 0.0
        %3114 = vmatpush1.msra.mxu0 0.0
        %3115 = vmatprep.subr.mxu0 0.0
        %3116 = vmatpush1.msra.mxu0 0.0
        %3117 = vmatprep.subr.mxu0 0.0
        %3118 = vmatpush1.msra.mxu0 0.0
        %3119 = vmatprep.subr.mxu0 0.0
        %3120 = vmatpush1.msra.mxu0 0.0
        %3121 = vmatprep.subr.mxu0 0.0
        %3122 = vmatpush1.msra.mxu0 0.0
        %3123 = vmatprep.subr.mxu0 0.0
        %3124 = vmatpush1.msra.mxu0 0.0
        %3125 = vmatprep.subr.mxu0 0.0
        %3126 = vmatpush1.msra.mxu0 0.0
        %3127 = vmatprep.subr.mxu0 0.0
        %3128 = vmatpush1.msra.mxu0 0.0
        %3129 = vmatprep.subr.mxu0 0.0
        %3130 = vmatpush1.msra.mxu0 0.0
        %3131 = vmatprep.subr.mxu0 0.0
        %3132 = vmatpush1.msra.mxu0 0.0
        %3133 = vmatprep.subr.mxu0 0.0
        %3134 = vmatpush1.msra.mxu0 0.0
        %3135 = vmatprep.subr.mxu0 0.0
        %3136 = vmatpush1.msra.mxu0 0.0
        %3137 = vmatprep.subr.mxu0 0.0
        %3138 = vmatpush1.msra.mxu0 0.0
        %3139 = vmatprep.subr.mxu0 0.0
        %3140 = vmatpush1.msra.mxu0 0.0
        %3141 = vmatprep.subr.mxu0 0.0
        %3142 = vmatpush1.msra.mxu0 0.0
        %3143 = vmatprep.subr.mxu0 0.0
        %3144 = vmatpush1.msra.mxu0 0.0
        %3145 = vmatprep.subr.mxu0 0.0
        %3146 = vmatpush1.msra.mxu0 0.0
        %3147 = vmatprep.subr.mxu0 0.0
        %3148 = vmatpush1.msra.mxu0 0.0
        %3149 = vmatprep.subr.mxu0 0.0
        %3150 = vmatpush1.msra.mxu0 0.0
        %3151 = vmatprep.subr.mxu0 0.0
        %3152 = vmatpush1.msra.mxu0 0.0
        %3153 = vmatprep.subr.mxu0 0.0
        %3154 = vmatpush1.msra.mxu0 0.0
        %3155 = vmatprep.subr.mxu0 0.0
        %3156 = vmatpush1.msra.mxu0 0.0
        %3157 = vmatprep.subr.mxu0 0.0
        %3158 = vmatpush1.msra.mxu0 0.0
        %3159 = vmatprep.mubr.f32.mxu0 0.0
        %3160 = vmatmul.mubr.f32.gmra.mrb[0].mxu0 %v3093
        %v3161 = vpop.f32.mrb[0].mxu0
        %v3162 = vadd.f32 0.0, %v3161
        %v3163 = vpop.f32.mrb[0].mxu0
        %3164 = vdwg.mxu0
        %3169 = vrot.lane.b32.xlu0 %v2934, 24
        %v3170 = vpop.permute.xlu0 %3169
        %3171 = vrot.lane.b32.xlu0 %v3010, 24
        %v3172 = vpop.permute.xlu0 %3171
        %3173 = vrot.lane.b32.xlu0 %v3086, 24
        %v3174 = vpop.permute.xlu0 %3173
        %3175 = vrot.lane.b32.xlu0 %v3162, 24
        %v3176 = vpop.permute.xlu0 %3175
        %vm3181 = vcmask 261312
        %3182 = vst.msk [vmem:[#allocation2] sm:$0xff] %vm3181, %v3170
        %3183 = vst.msk [vmem:[#allocation2 + $0x8] sm:$0xff] %vm3181, %v3172
        %3184 = vst.msk [vmem:[#allocation2 + $0x10] sm:$0xff] %vm3181, %v3174
        %3185 = vst.msk [vmem:[#allocation2 + $0x18] sm:$0xff] %vm3181, %v3176
        %v3186 = vld [vmem:[#allocation2] sm:$0xff]
        %v3187 = vld [vmem:[#allocation2 + $0x8] sm:$0xff]
        %v3188 = vld [vmem:[#allocation2 + $0x10] sm:$0xff]
        %v3189 = vld [vmem:[#allocation2 + $0x18] sm:$0xff]
        %v3190 = vadd.f32 %v3186, %v370
        %v3191 = vadd.f32 %v3187, %v371
        %v3192 = vadd.f32 %v3188, %v372
        %v3193 = vadd.f32 %v3189, %v373
        %v3194 = vsel %vm304, %v3190, 0.0
        %3195 = vadd.xlane.f32.xlu0 %v3194
        %v3196 = vpop.xlane.xlu0 %3195
        %v3197 = vsel %vm304, %v3191, 0.0
        %3198 = vadd.xlane.f32.xlu0 %v3197
        %v3199 = vpop.xlane.xlu0 %3198
        %v3200 = vsel %vm304, %v3192, 0.0
        %3201 = vadd.xlane.f32.xlu0 %v3200
        %v3202 = vpop.xlane.xlu0 %3201
        %v3203 = vsel %vm304, %v3193, 0.0
        %3204 = vadd.xlane.f32.xlu0 %v3203
        %v3205 = vpop.xlane.xlu0 %3204
        %v3206 = vmul.f32 %v3196, %v317
        %v3207 = vmul.f32 %v3199, %v317
        %v3208 = vmul.f32 %v3202, %v317
        %v3209 = vmul.f32 %v3205, %v317
        %v3210 = vsub.f32 %v3190, %v3206
        %v3211 = vsub.f32 %v3191, %v3207
        %v3212 = vsub.f32 %v3192, %v3208
        %v3213 = vsub.f32 %v3193, %v3209
        %v3214 = vmul.f32 %v3210, %v3210
        %v3215 = vmul.f32 %v3211, %v3211
        %v3216 = vmul.f32 %v3212, %v3212
        %v3217 = vmul.f32 %v3213, %v3213
        %v3218 = vsel %vm304, %v3214, 0.0
        %3219 = vadd.xlane.f32.xlu0 %v3218
        %v3220 = vpop.xlane.xlu0 %3219
        %v3221 = vsel %vm304, %v3215, 0.0
        %3222 = vadd.xlane.f32.xlu0 %v3221
        %v3223 = vpop.xlane.xlu0 %3222
        %v3224 = vsel %vm304, %v3216, 0.0
        %3225 = vadd.xlane.f32.xlu0 %v3224
        %v3226 = vpop.xlane.xlu0 %3225
        %v3227 = vsel %vm304, %v3217, 0.0
        %3228 = vadd.xlane.f32.xlu0 %v3227
        %v3229 = vpop.xlane.xlu0 %3228
        %v3230 = vmul.f32 %v3220, %v317
        %v3231 = vmul.f32 %v3223, %v317
        %v3232 = vmul.f32 %v3226, %v317
        %v3233 = vmul.f32 %v3229, %v317
        %v3234 = vadd.f32 %v3230, 1e-06
        %v3235 = vadd.f32 %v3231, 1e-06
        %v3236 = vadd.f32 %v3232, 1e-06
        %v3237 = vadd.f32 %v3233, 1e-06
        %v3238 = vrsqrt.pop %v3234
        %v3239 = vrsqrt.pop %v3235
        %v3240 = vrsqrt.pop %v3236
        %v3241 = vrsqrt.pop %v3237
        %v3242 = vmul.f32 %v3210, %v3238
        %v3243 = vmul.f32 %v3211, %v3239
        %v3244 = vmul.f32 %v3212, %v3240
        %v3245 = vmul.f32 %v3213, %v3241
        %v3246 = vlaneseq
        %v3247 = vshrl.u32 %v3246, 7
        %v3248 = vsub.s32 0, %v3247
        %v3249 = vrot.slane %v297, %v3248
        %v3250 = vmul.f32 %v3242, %v3249
        %v3251 = vmul.f32 %v3243, %v3249
        %v3252 = vmul.f32 %v3244, %v3249
        %v3253 = vmul.f32 %v3245, %v3249
        %v3254 = vlaneseq
        %v3255 = vshrl.u32 %v3254, 7
        %v3256 = vsub.s32 0, %v3255
        %v3257 = vrot.slane %v298, %v3256
        %v3258 = vadd.f32 %v3250, %v3257
        %v3259 = vadd.f32 %v3251, %v3257
        %v3260 = vadd.f32 %v3252, %v3257
        %v3261 = vadd.f32 %v3253, %v3257
        %v3262 = vld [vmem:[#allocation3] sm:$0xff]
        %v3263 = vld [vmem:[#allocation3 + $0x8] sm:$0xff]
        %v3264 = vld [vmem:[#allocation3 + $0x10] sm:$0xff]
        %v3265 = vld [vmem:[#allocation3 + $0x18] sm:$0xff]
        %v3266 = vld [vmem:[%s5] sm:$0x1]
        %v3268 = vlaneseq
        %v3269 = vshrl.u32 %v3268, 7
        %v3270 = vsub.s32 0, %v3269
        %v3271 = vrot.slane %v3266, %v3270
        %v3274 = vsel %vm304, %v3258, 0
        %v3277 = vsel %vm304, %v3259, 0
        %v3280 = vsel %vm304, %v3260, 0
        %v3283 = vsel %vm304, %v3261, 0
        %3285 = vmatprep.subr.mxu0 0.0
        %3286 = vmatpush1.msra.mxu0 %v3262
        %3287 = vmatprep.subr.mxu0 0.0
        %3288 = vmatpush1.msra.mxu0 %v3263
        %3289 = vmatprep.subr.mxu0 0.0
        %3290 = vmatpush1.msra.mxu0 %v3264
        %3291 = vmatprep.subr.mxu0 0.0
        %3292 = vmatpush1.msra.mxu0 %v3265
        %3293 = vmatprep.subr.mxu0 0.0
        %3294 = vmatpush1.msra.mxu0 0.0
        %3295 = vmatprep.subr.mxu0 0.0
        %3296 = vmatpush1.msra.mxu0 0.0
        %3297 = vmatprep.subr.mxu0 0.0
        %3298 = vmatpush1.msra.mxu0 0.0
        %3299 = vmatprep.subr.mxu0 0.0
        %3300 = vmatpush1.msra.mxu0 0.0
        %3301 = vmatprep.subr.mxu0 0.0
        %3302 = vmatpush1.msra.mxu0 0.0
        %3303 = vmatprep.subr.mxu0 0.0
        %3304 = vmatpush1.msra.mxu0 0.0
        %3305 = vmatprep.subr.mxu0 0.0
        %3306 = vmatpush1.msra.mxu0 0.0
        %3307 = vmatprep.subr.mxu0 0.0
        %3308 = vmatpush1.msra.mxu0 0.0
        %3309 = vmatprep.subr.mxu0 0.0
        %3310 = vmatpush1.msra.mxu0 0.0
        %3311 = vmatprep.subr.mxu0 0.0
        %3312 = vmatpush1.msra.mxu0 0.0
        %3313 = vmatprep.subr.mxu0 0.0
        %3314 = vmatpush1.msra.mxu0 0.0
        %3315 = vmatprep.subr.mxu0 0.0
        %3316 = vmatpush1.msra.mxu0 0.0
        %3317 = vmatprep.subr.mxu0 0.0
        %3318 = vmatpush1.msra.mxu0 0.0
        %3319 = vmatprep.subr.mxu0 0.0
        %3320 = vmatpush1.msra.mxu0 0.0
        %3321 = vmatprep.subr.mxu0 0.0
        %3322 = vmatpush1.msra.mxu0 0.0
        %3323 = vmatprep.subr.mxu0 0.0
        %3324 = vmatpush1.msra.mxu0 0.0
        %3325 = vmatprep.subr.mxu0 0.0
        %3326 = vmatpush1.msra.mxu0 0.0
        %3327 = vmatprep.subr.mxu0 0.0
        %3328 = vmatpush1.msra.mxu0 0.0
        %3329 = vmatprep.subr.mxu0 0.0
        %3330 = vmatpush1.msra.mxu0 0.0
        %3331 = vmatprep.subr.mxu0 0.0
        %3332 = vmatpush1.msra.mxu0 0.0
        %3333 = vmatprep.subr.mxu0 0.0
        %3334 = vmatpush1.msra.mxu0 0.0
        %3335 = vmatprep.subr.mxu0 0.0
        %3336 = vmatpush1.msra.mxu0 0.0
        %3337 = vmatprep.subr.mxu0 0.0
        %3338 = vmatpush1.msra.mxu0 0.0
        %3339 = vmatprep.subr.mxu0 0.0
        %3340 = vmatpush1.msra.mxu0 0.0
        %3341 = vmatprep.subr.mxu0 0.0
        %3342 = vmatpush1.msra.mxu0 0.0
        %3343 = vmatprep.subr.mxu0 0.0
        %3344 = vmatpush1.msra.mxu0 0.0
        %3345 = vmatprep.subr.mxu0 0.0
        %3346 = vmatpush1.msra.mxu0 0.0
        %3347 = vmatprep.subr.mxu0 0.0
        %3348 = vmatpush1.msra.mxu0 0.0
        %3349 = vmatprep.mubr.f32.mxu0 0.0
        %3350 = vmatmul.mubr.f32.gmra.mrb[0].mxu0 %v3274
        %v3351 = vpop.f32.mrb[0].mxu0
        %v3352 = vadd.f32 %v3271, %v3351
        %v3353 = vpop.f32.mrb[0].mxu0
        %3354 = vmatprep.mubr.f32.mxu0 0.0
        %3355 = vmatmul.mubr.f32.gmra.mrb[0].mxu0 %v3277
        %v3356 = vpop.f32.mrb[0].mxu0
        %v3357 = vadd.f32 %v3271, %v3356
        %v3358 = vpop.f32.mrb[0].mxu0
        %3359 = vmatprep.mubr.f32.mxu0 0.0
        %3360 = vmatmul.mubr.f32.gmra.mrb[0].mxu0 %v3280
        %v3361 = vpop.f32.mrb[0].mxu0
        %v3362 = vadd.f32 %v3271, %v3361
        %v3363 = vpop.f32.mrb[0].mxu0
        %3364 = vmatprep.mubr.f32.mxu0 0.0
        %3365 = vmatmul.mubr.f32.gmra.mrb[0].mxu0 %v3283
        %v3366 = vpop.f32.mrb[0].mxu0
        %v3367 = vadd.f32 %v3271, %v3366
        %v3368 = vpop.f32.mrb[0].mxu0
        %3369 = vdwg.mxu0
        %v3370 = vmax.f32 %v3352, 0.0
        %v3371 = vmax.f32 %v3357, 0.0
        %v3372 = vmax.f32 %v3362, 0.0
        %v3373 = vmax.f32 %v3367, 0.0
        %v3374 = vld [vmem:[%s6] sm:$0xff]
        %v3375 = vld [vmem:[%s6 + $0x8] sm:$0xff]
        %v3376 = vld [vmem:[%s6 + $0x10] sm:$0xff]
        %v3377 = vld [vmem:[%s6 + $0x18] sm:$0xff]
        %v3378 = vld [vmem:[%s6 + $0x20] sm:$0xff]
        %v3379 = vld [vmem:[%s6 + $0x28] sm:$0xff]
        %v3380 = vld [vmem:[%s6 + $0x30] sm:$0xff]
        %v3381 = vld [vmem:[%s6 + $0x38] sm:$0xff]
        %v3382 = vlaneseq
        %v3383 = vshrl.u32 %v3382, 7
        %v3384 = vsub.s32 0, %v3383
        %v3385 = vrot.slane %v299, %v3384
        %vm3386 = vcmask 523264
        %v3388 = vsel %vm3386, %v3370, 0
        %v3391 = vsel %vm3386, %v3371, 0
        %v3394 = vsel %vm3386, %v3372, 0
        %v3397 = vsel %vm3386, %v3373, 0
        %3399 = vmatprep.subr.mxu0 0.0
        %3400 = vmatpush1.msra.mxu0 %v3374
        %3401 = vmatprep.subr.mxu0 0.0
        %3402 = vmatpush1.msra.mxu0 %v3375
        %3403 = vmatprep.subr.mxu0 0.0
        %3404 = vmatpush1.msra.mxu0 %v3376
        %3405 = vmatprep.subr.mxu0 0.0
        %3406 = vmatpush1.msra.mxu0 %v3377
        %3407 = vmatprep.subr.mxu0 0.0
        %3408 = vmatpush1.msra.mxu0 %v3378
        %3409 = vmatprep.subr.mxu0 0.0
        %3410 = vmatpush1.msra.mxu0 %v3379
        %3411 = vmatprep.subr.mxu0 0.0
        %3412 = vmatpush1.msra.mxu0 %v3380
        %3413 = vmatprep.subr.mxu0 0.0
        %3414 = vmatpush1.msra.mxu0 %v3381
        %3415 = vmatprep.subr.mxu0 0.0
        %3416 = vmatpush1.msra.mxu0 0.0
        %3417 = vmatprep.subr.mxu0 0.0
        %3418 = vmatpush1.msra.mxu0 0.0
        %3419 = vmatprep.subr.mxu0 0.0
        %3420 = vmatpush1.msra.mxu0 0.0
        %3421 = vmatprep.subr.mxu0 0.0
        %3422 = vmatpush1.msra.mxu0 0.0
        %3423 = vmatprep.subr.mxu0 0.0
        %3424 = vmatpush1.msra.mxu0 0.0
        %3425 = vmatprep.subr.mxu0 0.0
        %3426 = vmatpush1.msra.mxu0 0.0
        %3427 = vmatprep.subr.mxu0 0.0
        %3428 = vmatpush1.msra.mxu0 0.0
        %3429 = vmatprep.subr.mxu0 0.0
        %3430 = vmatpush1.msra.mxu0 0.0
        %3431 = vmatprep.subr.mxu0 0.0
        %3432 = vmatpush1.msra.mxu0 0.0
        %3433 = vmatprep.subr.mxu0 0.0
        %3434 = vmatpush1.msra.mxu0 0.0
        %3435 = vmatprep.subr.mxu0 0.0
        %3436 = vmatpush1.msra.mxu0 0.0
        %3437 = vmatprep.subr.mxu0 0.0
        %3438 = vmatpush1.msra.mxu0 0.0
        %3439 = vmatprep.subr.mxu0 0.0
        %3440 = vmatpush1.msra.mxu0 0.0
        %3441 = vmatprep.subr.mxu0 0.0
        %3442 = vmatpush1.msra.mxu0 0.0
        %3443 = vmatprep.subr.mxu0 0.0
        %3444 = vmatpush1.msra.mxu0 0.0
        %3445 = vmatprep.subr.mxu0 0.0
        %3446 = vmatpush1.msra.mxu0 0.0
        %3447 = vmatprep.subr.mxu0 0.0
        %3448 = vmatpush1.msra.mxu0 0.0
        %3449 = vmatprep.subr.mxu0 0.0
        %3450 = vmatpush1.msra.mxu0 0.0
        %3451 = vmatprep.subr.mxu0 0.0
        %3452 = vmatpush1.msra.mxu0 0.0
        %3453 = vmatprep.subr.mxu0 0.0
        %3454 = vmatpush1.msra.mxu0 0.0
        %3455 = vmatprep.subr.mxu0 0.0
        %3456 = vmatpush1.msra.mxu0 0.0
        %3457 = vmatprep.subr.mxu0 0.0
        %3458 = vmatpush1.msra.mxu0 0.0
        %3459 = vmatprep.subr.mxu0 0.0
        %3460 = vmatpush1.msra.mxu0 0.0
        %3461 = vmatprep.subr.mxu0 0.0
        %3462 = vmatpush1.msra.mxu0 0.0
        %3463 = vmatprep.mubr.f32.mxu0 0.0
        %3464 = vmatmul.mubr.f32.gmra.mrb[0].mxu0 %v3388
        %v3465 = vpop.f32.mrb[0].mxu0
        %v3466 = vadd.f32 %v3385, %v3465
        %v3467 = vpop.f32.mrb[0].mxu0
        %3468 = vmatprep.mubr.f32.mxu0 0.0
        %3469 = vmatmul.mubr.f32.gmra.mrb[0].mxu0 %v3391
        %v3470 = vpop.f32.mrb[0].mxu0
        %v3471 = vadd.f32 %v3385, %v3470
        %v3472 = vpop.f32.mrb[0].mxu0
        %3473 = vmatprep.mubr.f32.mxu0 0.0
        %3474 = vmatmul.mubr.f32.gmra.mrb[0].mxu0 %v3394
        %v3475 = vpop.f32.mrb[0].mxu0
        %v3476 = vadd.f32 %v3385, %v3475
        %v3477 = vpop.f32.mrb[0].mxu0
        %3478 = vmatprep.mubr.f32.mxu0 0.0
        %3479 = vmatmul.mubr.f32.gmra.mrb[0].mxu0 %v3397
        %v3480 = vpop.f32.mrb[0].mxu0
        %v3481 = vadd.f32 %v3385, %v3480
        %v3482 = vpop.f32.mrb[0].mxu0
        %3483 = vdwg.mxu0
        %v3484 = vadd.f32 %v3466, %v3258
        %v3485 = vadd.f32 %v3471, %v3259
        %v3486 = vadd.f32 %v3476, %v3260
        %v3487 = vadd.f32 %v3481, %v3261
        %3488 = vst.msk [vmem:[%s287] sm:$0xff] %vm304, %v3484
        %3489 = vst.msk [vmem:[%s287 + $0x8] sm:$0xff] %vm304, %v3485
        %3490 = vst.msk [vmem:[%s287 + $0x10] sm:$0xff] %vm304, %v3486
        %3491 = vst.msk [vmem:[%s287 + $0x18] sm:$0xff] %vm304, %v3487
        %s3492 = sand.u32 %s182, 1
        %s3493 = scalar_lea.sflag [#allocation5], %s3492
        %s3494 = sand.u32 %s182, 1
        %s3495 = smul.addr %s3494, 32
        %s3496 = scalar_lea.vmem [#allocation6], %s3495
        // Predicated region
        $region53: #{tpu_custom_call.1} parent=47 // pred_check
          %p3497 = pneg %p192
        $region54: #{tpu_custom_call.1} parent=47 // pred_check_branch
          %3499 = sbr.rel (%p3497) target = $region56
        $region55: #{tpu_custom_call.1} parent=47 // pred_region
          %s3500 = smul.u32 4, %s22
          %s3502 = ssub.s32 512, 512
          %3503 = vsyncadd %s3493, %s3502
          %s3504 = smul.addr %s3500, 128
          %s3505 = scalar_lea.hbm %s7, %s3504
          %s3506 = sshll.u32 %s3496, 4
          %s3507 = int_to_ptr.vmem [resolvable:$true] %s3506
          %3512 = dma.vmem_to_hbm [thread:$0]  %s3507, 512, %s3505, %s3493, 128, 128, 8
        $region56: #{tpu_custom_call.1} parent=47 // pred_fallthru
          _
      $region48: #{tpu_custom_call.1} parent=5 // pred_fallthru
        _
      %p3513 = scmp.le.s32.totalorder 2, %s17
      // Predicated region
      $region57: #{tpu_custom_call.1} parent=5 // pred_check
        %p3514 = pneg %p3513
      $region58: #{tpu_custom_call.1} parent=5 // pred_check_branch
        %3516 = sbr.rel (%p3514) target = $region60
      $region59: #{tpu_custom_call.1} parent=5 // pred_region
        %s3517 = ssub.s32 %s17, 2
        // Predicated region
        $region61: #{tpu_custom_call.1} parent=59 // pred_check
          %p3518 = pneg %p198
        $region62: #{tpu_custom_call.1} parent=59 // pred_check_branch
          %3520 = sbr.rel (%p3518) target = $region64
        $region63: #{tpu_custom_call.1} parent=59 // pred_region
          %s3521 = sand.u32 %s183, 1
          %s3522 = scalar_lea.sflag [#allocation5], %s3521
          %s3523 = sand.u32 %s183, 1
          %s3524 = smul.addr %s3523, 32
          %s3525 = scalar_lea.vmem [#allocation6], %s3524
          %3526 = dma.done %s3522, 512
        $region64: #{tpu_custom_call.1} parent=59 // pred_fallthru
          _
      $region60: #{tpu_custom_call.1} parent=5 // pred_fallthru
        _
    $region6: #{tpu_custom_call.1} parent=1 // loop_footer
      %s21 = sadd.s32 1, %s17
    $region7: #{tpu_custom_call.1} parent=1 // loop_footer_branch
      %16 = sbr.rel target = $region3
    $region8: #{tpu_custom_call.1} parent=1 // loop_exit
      _
    %3527 = vsyncpa [#allocation4], 1
    %s3528 = scalar_lea.sflag [#allocation4], 1
    %3529 = vsyncpa %s3528, 1
    %3530 = vsyncpa [#allocation5], 1
    %s3531 = scalar_lea.sflag [#allocation5], 1
    %3532 = vsyncpa %s3531, 1

</llo_original>
